<compile_context>
chip_gen: v7x
topology: tpu7x:2x2x1
jax: 0.10.0
libtpu: 0.0.40
codegen_flags: <defaults>
</compile_context>

<pallas_src>
import math
import functools

import jax
import jax.numpy as jnp
from jax.experimental import pallas as pl
from jax.experimental.pallas import tpu as pltpu

_C0 = math.sqrt(2.0 / math.pi)
_C1 = 0.044715 * _C0


def _round_up(x, m):
    return ((x + m - 1) // m) * m


def _gelu_new(x):
    # NewGELUActivation: 0.5*x*(1 + tanh(sqrt(2/pi)*(x + 0.044715*x^3)))
    # rewritten so x*x is computed once and the constant is folded in
    # (fewer VALU ops; tanh goes to the EUP).
    x2 = x * x
    return 0.5 * x * (1.0 + jnp.tanh(x * (_C0 + _C1 * x2)))


# ---------------------------------------------------------------------------
# FeedForward kernel: matmul -> gelu_new -> matmul, I-chunked with f32 accum.
# ---------------------------------------------------------------------------
def _ffn_kernel(x_ref, w1_ref, b1_ref, w2_ref, b2_ref, o_ref, acc_ref):
    k = pl.program_id(1)

    @pl.when(k == 0)
    def _init():
        acc_ref[...] = jnp.zeros_like(acc_ref)

    # intermediate_dense: native-dtype operands straight to the MXU, f32 accum.
    h = jnp.dot(x_ref[...], w1_ref[...], preferred_element_type=jnp.float32)
    h = h + b1_ref[...].astype(jnp.float32)
    h = _gelu_new(h)                                  # f32 activation math
    # output_dense partial product for this I-chunk, accumulated in f32.
    acc_ref[...] += jnp.dot(h.astype(w2_ref.dtype), w2_ref[...],
                            preferred_element_type=jnp.float32)

    @pl.when(k == pl.num_programs(1) - 1)
    def _epilogue():
        o_ref[...] = (acc_ref[...]
                      + b2_ref[...].astype(jnp.float32)).astype(o_ref.dtype)


def feed_forward_2d(x2d, w1, b1, w2, b2, *, tm=256, ti=512):
    """x2d: [rows, H]; w1: [H, I]; b1: [I]; w2: [I, H]; b2: [H]."""
    rows, H = x2d.shape
    I = w1.shape[1]

    # Row tile: multiple of 8 sublanes, 256 preferred for the mem-bound regime.
    tm = min(tm, _round_up(rows, 8))
    rows_p = _round_up(rows, tm)
    # Intermediate chunk: full I if small, otherwise a 128-aligned chunk.
    if I <= ti:
        ti = I
        I_p = I
    else:
        ti = _round_up(ti, 128)
        I_p = _round_up(I, ti)

    if rows_p != rows:
        x2d = jnp.pad(x2d, ((0, rows_p - rows), (0, 0)))
    if I_p != I:
        w1 = jnp.pad(w1, ((0, 0), (0, I_p - I)))
        b1 = jnp.pad(b1, ((0, I_p - I),))
        w2 = jnp.pad(w2, ((0, I_p - I), (0, 0)))

    b1_2d = b1.reshape(1, I_p)
    b2_2d = b2.reshape(1, H)

    grid = (rows_p // tm, I_p // ti)
    itemsize = x2d.dtype.itemsize
    cost = pl.CostEstimate(
        flops=4 * rows_p * H * I_p,
        transcendentals=rows_p * I_p,
        bytes_accessed=(rows_p * H + H * I_p + I_p + I_p * H + H + rows_p * H)
        * itemsize,
    )
    # Double-buffered tiles + f32 accumulator, clamped under a v7x-safe budget.
    vmem_est = 2 * itemsize * (2 * tm * H + H * ti + ti + ti * H + H) \
        + 4 * tm * H
    vmem_limit = int(min(48 * 1024 * 1024, max(2 * vmem_est, 4 * 1024 * 1024)))

    out = pl.pallas_call(
        _ffn_kernel,
        out_shape=jax.ShapeDtypeStruct((rows_p, H), x2d.dtype),
        grid=grid,
        in_specs=[
            pl.BlockSpec((tm, H), lambda i, k: (i, 0)),   # x: resident over k
            pl.BlockSpec((H, ti), lambda i, k: (0, k)),   # w1 chunk
            pl.BlockSpec((1, ti), lambda i, k: (0, k)),   # b1 chunk
            pl.BlockSpec((ti, H), lambda i, k: (k, 0)),   # w2 chunk
            pl.BlockSpec((1, H), lambda i, k: (0, 0)),    # b2 (epilogue only)
        ],
        out_specs=pl.BlockSpec((tm, H), lambda i, k: (i, 0)),
        scratch_shapes=[pltpu.VMEM((tm, H), jnp.float32)],
        compiler_params=pltpu.CompilerParams(
            dimension_semantics=("parallel", "arbitrary"),
            vmem_limit_bytes=vmem_limit,
        ),
        cost_estimate=cost,
    )(x2d, w1, b1_2d, w2, b2_2d)

    return out[:rows]


# ---------------------------------------------------------------------------
# Multi-head attention kernel: one batch element per grid step.
# ---------------------------------------------------------------------------
def _mha_kernel(x_ref, wq_ref, bq_ref, wk_ref, bk_ref, wv_ref, bv_ref,
                wo_ref, bo_ref, o_ref, *, num_heads, scaling):
    x = x_ref[0]                                  # [S, H]
    S = x.shape[0]
    H_out = wo_ref.shape[-1]
    y = jnp.zeros((S, H_out), jnp.float32)
    for h in range(num_heads):                    # static unroll over heads
        q = jnp.dot(x, wq_ref[h], preferred_element_type=jnp.float32) + bq_ref[h]
        q = q * scaling
        k = jnp.dot(x, wk_ref[h], preferred_element_type=jnp.float32) + bk_ref[h]
        v = jnp.dot(x, wv_ref[h], preferred_element_type=jnp.float32) + bv_ref[h]
        s = jnp.einsum("qd,kd->qk", q, k, preferred_element_type=jnp.float32)
        s = s - jnp.max(s, axis=-1, keepdims=True)
        p = jnp.exp(s)
        p = p / jnp.sum(p, axis=-1, keepdims=True)
        o = jnp.dot(p, v, preferred_element_type=jnp.float32)       # [S, hd]
        y = y + jnp.dot(o.astype(wo_ref.dtype), wo_ref[h],
                        preferred_element_type=jnp.float32)
    y = y + bo_ref[...].astype(jnp.float32)
    o_ref[0] = y.astype(o_ref.dtype)


def multi_head_attention(x, wq, bq, wk, bk, wv, bv, wo, bo, *, num_heads):
    B, S, H = x.shape
    hd = H // num_heads
    scaling = float(hd) ** -0.5

    def split_w(w):      # [H, H] -> [nh, H, hd]  (per-head output columns)
        return w.reshape(H, num_heads, hd).transpose(1, 0, 2)

    def split_b(b):      # [H] -> [nh, 1, hd]
        return b.reshape(num_heads, 1, hd)

    wq3, wk3, wv3 = split_w(wq), split_w(wk), split_w(wv)
    bq3, bk3, bv3 = split_b(bq), split_b(bk), split_b(bv)
    wo3 = wo.reshape(num_heads, hd, H)            # rows of head h
    bo2 = bo.reshape(1, H)

    kernel = functools.partial(_mha_kernel, num_heads=num_heads, scaling=scaling)
    w_spec = pl.BlockSpec((num_heads, H, hd), lambda b: (0, 0, 0))
    b_spec = pl.BlockSpec((num_heads, 1, hd), lambda b: (0, 0, 0))

    return pl.pallas_call(
        kernel,
        out_shape=jax.ShapeDtypeStruct((B, S, H), x.dtype),
        grid=(B,),
        in_specs=[pl.BlockSpec((1, S, H), lambda b: (b, 0, 0)),
                  w_spec, b_spec, w_spec, b_spec, w_spec, b_spec,
                  pl.BlockSpec((num_heads, hd, H), lambda b: (0, 0, 0)),
                  pl.BlockSpec((1, H), lambda b: (0, 0))],
        out_specs=pl.BlockSpec((1, S, H), lambda b: (b, 0, 0)),
        compiler_params=pltpu.CompilerParams(
            dimension_semantics=("parallel",)),
    )(x, wq3, bq3, wk3, bk3, wv3, bv3, wo3, bo2)


# ---------------------------------------------------------------------------
# Fused residual-add + LayerNorm kernel, row tiled.
# ---------------------------------------------------------------------------
def _add_ln_kernel(x_ref, r_ref, g_ref, b_ref, o_ref, *, eps):
    x = x_ref[...].astype(jnp.float32) + r_ref[...].astype(jnp.float32)
    mean = jnp.mean(x, axis=-1, keepdims=True)
    xc = x - mean
    var = jnp.mean(xc * xc, axis=-1, keepdims=True)
    y = xc * jax.lax.rsqrt(var + eps)
    y = y * g_ref[...].astype(jnp.float32) + b_ref[...].astype(jnp.float32)
    o_ref[...] = y.astype(o_ref.dtype)


def add_layer_norm(x, residual, gamma, beta, *, eps, tm=256):
    B, S, H = x.shape
    rows = B * S
    tm = min(tm, _round_up(rows, 8))
    rows_p = _round_up(rows, tm)
    x2d = x.reshape(rows, H)
    r2d = residual.reshape(rows, H)
    if rows_p != rows:
        x2d = jnp.pad(x2d, ((0, rows_p - rows), (0, 0)))
        r2d = jnp.pad(r2d, ((0, rows_p - rows), (0, 0)))

    out = pl.pallas_call(
        functools.partial(_add_ln_kernel, eps=eps),
        out_shape=jax.ShapeDtypeStruct((rows_p, H), x.dtype),
        grid=(rows_p // tm,),
        in_specs=[pl.BlockSpec((tm, H), lambda i: (i, 0)),
                  pl.BlockSpec((tm, H), lambda i: (i, 0)),
                  pl.BlockSpec((1, H), lambda i: (0, 0)),
                  pl.BlockSpec((1, H), lambda i: (0, 0))],
        out_specs=pl.BlockSpec((tm, H), lambda i: (i, 0)),
        compiler_params=pltpu.CompilerParams(
            dimension_semantics=("parallel",)),
    )(x2d, r2d, gamma.reshape(1, H), beta.reshape(1, H))
    return out[:rows].reshape(B, S, H)


# ---------------------------------------------------------------------------
# Full TransformerEncoderLayer forward.
# ---------------------------------------------------------------------------
@functools.partial(jax.jit,
                   static_argnames=("num_heads", "channel_last", "ln_eps",
                                    "row_tile"))
def transformer_encoder_layer(x, params, *, num_heads, channel_last=False,
                              ln_eps=1e-6, row_tile=256):
    if not channel_last:
        x = jnp.transpose(x, (0, 2, 1))           # [B, C, T] -> [B, T, C]
    B, S, H = x.shape

    attn = multi_head_attention(
        x, params["wq"], params["bq"], params["wk"], params["bk"],
        params["wv"], params["bv"], params["wo"], params["bo"],
        num_heads=num_heads)
    h = add_layer_norm(attn, x, params["ln1_g"], params["ln1_b"],
                       eps=ln_eps, tm=row_tile)

    ffn = feed_forward_2d(h.reshape(B * S, H),
                          params["w1"], params["b1"],
                          params["w2"], params["b2"],
                          tm=row_tile).reshape(B, S, H)
    out = add_layer_norm(ffn, h, params["ln2_g"], params["ln2_b"],
                         eps=ln_eps, tm=row_tile)

    if not channel_last:
        out = jnp.transpose(out, (0, 2, 1))       # back to [B, C, T]
    return out


# ---------------------------------------------------------------------------
# Pure-JAX reference for validation.
# ---------------------------------------------------------------------------
def _reference(x, params, *, num_heads, channel_last=False, ln_eps=1e-6):
    if not channel_last:
        x = jnp.transpose(x, (0, 2, 1))
    B, S, H = x.shape
    hd = H // num_heads
    scaling = hd ** -0.5
    hp = jax.lax.Precision.HIGHEST

    def linear(t, w, b):
        return jnp.einsum("...i,io->...o", t, w, precision=hp) + b

    q = linear(x, params["wq"], params["bq"]) * scaling
    k = linear(x, params["wk"], params["bk"])
    v = linear(x, params["wv"], params["bv"])

    def split(t):
        return t.reshape(B, S, num_heads, hd).transpose(0, 2, 1, 3)

    qh, kh, vh = split(q), split(k), split(v)
    s = jnp.einsum("bhqd,bhkd->bhqk", qh, kh, precision=hp)
    p = jax.nn.softmax(s, axis=-1)
    o = jnp.einsum("bhqk,bhkd->bhqd", p, vh, precision=hp)
    o = o.transpose(0, 2, 1, 3).reshape(B, S, H)
    attn = linear(o, params["wo"], params["bo"])

    def layer_norm(t, g, b):
        mean = jnp.mean(t, axis=-1, keepdims=True)
        var = jnp.mean((t - mean) ** 2, axis=-1, keepdims=True)
        return (t - mean) * jax.lax.rsqrt(var + ln_eps) * g + b

    def gelu_new(t):
        return 0.5 * t * (1.0 + jnp.tanh(math.sqrt(2.0 / math.pi)
                                         * (t + 0.044715 * t ** 3)))

    h = layer_norm(x + attn, params["ln1_g"], params["ln1_b"])
    ffn = linear(gelu_new(linear(h, params["w1"], params["b1"])),
                 params["w2"], params["b2"])
    out = layer_norm(h + ffn, params["ln2_g"], params["ln2_b"])
    if not channel_last:
        out = jnp.transpose(out, (0, 2, 1))
    return out


if __name__ == "__main__":
    # TransformerEncoderLayer(n_state=32, n_mlp=64, n_head=4, channel_last=False)
    B, S, H, I, NH = 2, 8, 32, 64, 4

    key = jax.random.PRNGKey(0)
    keys = jax.random.split(key, 17)

    def uniform(k, shape, fan_in):
        lim = 1.0 / math.sqrt(fan_in)
        return jax.random.uniform(k, shape, minval=-lim, maxval=lim,
                                  dtype=jnp.float32)

    params = {
        "wq": uniform(keys[0], (H, H), H), "bq": uniform(keys[1], (H,), H),
        "wk": uniform(keys[2], (H, H), H), "bk": uniform(keys[3], (H,), H),
        "wv": uniform(keys[4], (H, H), H), "bv": uniform(keys[5], (H,), H),
        "wo": uniform(keys[6], (H, H), H), "bo": uniform(keys[7], (H,), H),
        "ln1_g": 1.0 + 0.1 * jax.random.normal(keys[8], (H,), jnp.float32),
        "ln1_b": 0.1 * jax.random.normal(keys[9], (H,), jnp.float32),
        "w1": uniform(keys[10], (H, I), H), "b1": uniform(keys[11], (I,), H),
        "w2": uniform(keys[12], (I, H), I), "b2": uniform(keys[13], (H,), I),
        "ln2_g": 1.0 + 0.1 * jax.random.normal(keys[14], (H,), jnp.float32),
        "ln2_b": 0.1 * jax.random.normal(keys[15], (H,), jnp.float32),
    }
    # channel-first input [B, n_state, T] (module default channel_last=False)
    x = jax.random.normal(keys[16], (B, H, S), dtype=jnp.float32)

    # row_tile=8 at this toy size so the row-tiled grids are actually exercised.
    out = transformer_encoder_layer(x, params, num_heads=NH,
                                    channel_last=False, ln_eps=1e-6, row_tile=8)
    jax.block_until_ready(out)

    ref = _reference(x, params, num_heads=NH, channel_last=False, ln_eps=1e-6)
    assert out.shape == x.shape
    err = float(jnp.max(jnp.abs(out - ref)))
    assert jnp.allclose(out, ref, atol=2e-4, rtol=2e-3), err

    print("KERNEL_OK")
</pallas_src>

<mosaic_0001>
module attributes {stable_mosaic.version = 11 : i64} {
  func.func @_mha_kernel(%arg0: i32, %arg1: memref<1x8x32xf32, #tpu.memory_space<vmem>>, %arg2: memref<4x32x8xf32, #tpu.memory_space<vmem>>, %arg3: memref<4x1x8xf32, #tpu.memory_space<vmem>>, %arg4: memref<4x32x8xf32, #tpu.memory_space<vmem>>, %arg5: memref<4x1x8xf32, #tpu.memory_space<vmem>>, %arg6: memref<4x32x8xf32, #tpu.memory_space<vmem>>, %arg7: memref<4x1x8xf32, #tpu.memory_space<vmem>>, %arg8: memref<4x8x32xf32, #tpu.memory_space<vmem>>, %arg9: memref<1x32xf32, #tpu.memory_space<vmem>>, %arg10: memref<1x8x32xf32, #tpu.memory_space<vmem>>) attributes {dimension_semantics = [#tpu.dimension_semantics<parallel>], iteration_bounds = array<i64: 2>, scalar_prefetch = 0 : i64, scratch_operands = 0 : i64, tpu.core_type = #tpu.core_type<tc>, window_params = [{transform_indices = @transform_0, window_bounds = array<i64: 1, 8, 32>}, {pipeline_mode = #tpu.pipeline_mode<synchronous>, transform_indices = @transform_1, window_bounds = array<i64: 4, 32, 8>}, {pipeline_mode = #tpu.pipeline_mode<synchronous>, transform_indices = @transform_2, window_bounds = array<i64: 4, 1, 8>}, {pipeline_mode = #tpu.pipeline_mode<synchronous>, transform_indices = @transform_3, window_bounds = array<i64: 4, 32, 8>}, {pipeline_mode = #tpu.pipeline_mode<synchronous>, transform_indices = @transform_4, window_bounds = array<i64: 4, 1, 8>}, {pipeline_mode = #tpu.pipeline_mode<synchronous>, transform_indices = @transform_5, window_bounds = array<i64: 4, 32, 8>}, {pipeline_mode = #tpu.pipeline_mode<synchronous>, transform_indices = @transform_6, window_bounds = array<i64: 4, 1, 8>}, {pipeline_mode = #tpu.pipeline_mode<synchronous>, transform_indices = @transform_7, window_bounds = array<i64: 4, 8, 32>}, {pipeline_mode = #tpu.pipeline_mode<synchronous>, transform_indices = @transform_8, window_bounds = array<i64: 1, 32>}, {transform_indices = @transform_9, window_bounds = array<i64: 1, 8, 32>}]} {
    %c0 = arith.constant 0 : index
    %c0_0 = arith.constant 0 : index
    %c0_1 = arith.constant 0 : index
    %0 = vector.load %arg1[%c0, %c0_0, %c0_1] : memref<1x8x32xf32, #tpu.memory_space<vmem>>, vector<1x8x32xf32>
    %1 = vector.shape_cast %0 : vector<1x8x32xf32> to vector<8x32xf32>
    %cst = arith.constant 0.000000e+00 : f32
    %2 = vector.broadcast %cst : f32 to vector<8x32xf32>
    %c0_2 = arith.constant 0 : index
    %c0_3 = arith.constant 0 : index
    %c0_4 = arith.constant 0 : index
    %3 = vector.load %arg2[%c0_2, %c0_3, %c0_4] : memref<4x32x8xf32, #tpu.memory_space<vmem>>, vector<1x32x8xf32>
    %4 = vector.shape_cast %3 : vector<1x32x8xf32> to vector<32x8xf32>
    %cst_5 = arith.constant dense<0.000000e+00> : vector<8x8xf32>
    %5 = tpu.matmul %1, %4, %cst_5 {dimension_numbers = #tpu.dot_dimension_numbers<[1], [0], [0], [1], [0, 0, 1, 1], [], []>} : vector<8x32xf32>, vector<32x8xf32>, vector<8x8xf32> -> vector<8x8xf32>
    %c0_6 = arith.constant 0 : index
    %c0_7 = arith.constant 0 : index
    %c0_8 = arith.constant 0 : index
    %6 = vector.load %arg3[%c0_6, %c0_7, %c0_8] : memref<4x1x8xf32, #tpu.memory_space<vmem>>, vector<1x1x8xf32>
    %7 = vector.shape_cast %6 : vector<1x1x8xf32> to vector<1x8xf32>
    %8 = vector.broadcast %7 : vector<1x8xf32> to vector<8x8xf32>
    %9 = arith.addf %5, %8 : vector<8x8xf32>
    %cst_9 = arith.constant 0.353553385 : f32
    %10 = vector.broadcast %cst_9 : f32 to vector<8x8xf32>
    %11 = arith.mulf %9, %10 : vector<8x8xf32>
    %c0_10 = arith.constant 0 : index
    %c0_11 = arith.constant 0 : index
    %c0_12 = arith.constant 0 : index
    %12 = vector.load %arg4[%c0_10, %c0_11, %c0_12] : memref<4x32x8xf32, #tpu.memory_space<vmem>>, vector<1x32x8xf32>
    %13 = vector.shape_cast %12 : vector<1x32x8xf32> to vector<32x8xf32>
    %cst_13 = arith.constant dense<0.000000e+00> : vector<8x8xf32>
    %14 = tpu.matmul %1, %13, %cst_13 {dimension_numbers = #tpu.dot_dimension_numbers<[1], [0], [0], [1], [0, 0, 1, 1], [], []>} : vector<8x32xf32>, vector<32x8xf32>, vector<8x8xf32> -> vector<8x8xf32>
    %c0_14 = arith.constant 0 : index
    %c0_15 = arith.constant 0 : index
    %c0_16 = arith.constant 0 : index
    %15 = vector.load %arg5[%c0_14, %c0_15, %c0_16] : memref<4x1x8xf32, #tpu.memory_space<vmem>>, vector<1x1x8xf32>
    %16 = vector.shape_cast %15 : vector<1x1x8xf32> to vector<1x8xf32>
    %17 = vector.broadcast %16 : vector<1x8xf32> to vector<8x8xf32>
    %18 = arith.addf %14, %17 : vector<8x8xf32>
    %c0_17 = arith.constant 0 : index
    %c0_18 = arith.constant 0 : index
    %c0_19 = arith.constant 0 : index
    %19 = vector.load %arg6[%c0_17, %c0_18, %c0_19] : memref<4x32x8xf32, #tpu.memory_space<vmem>>, vector<1x32x8xf32>
    %20 = vector.shape_cast %19 : vector<1x32x8xf32> to vector<32x8xf32>
    %cst_20 = arith.constant dense<0.000000e+00> : vector<8x8xf32>
    %21 = tpu.matmul %1, %20, %cst_20 {dimension_numbers = #tpu.dot_dimension_numbers<[1], [0], [0], [1], [0, 0, 1, 1], [], []>} : vector<8x32xf32>, vector<32x8xf32>, vector<8x8xf32> -> vector<8x8xf32>
    %c0_21 = arith.constant 0 : index
    %c0_22 = arith.constant 0 : index
    %c0_23 = arith.constant 0 : index
    %22 = vector.load %arg7[%c0_21, %c0_22, %c0_23] : memref<4x1x8xf32, #tpu.memory_space<vmem>>, vector<1x1x8xf32>
    %23 = vector.shape_cast %22 : vector<1x1x8xf32> to vector<1x8xf32>
    %24 = vector.broadcast %23 : vector<1x8xf32> to vector<8x8xf32>
    %25 = arith.addf %21, %24 : vector<8x8xf32>
    "tpu.trace_start"() <{level = 10 : i32, message = "qd,kd->qk"}> : () -> ()
    %cst_24 = arith.constant dense<0.000000e+00> : vector<8x8xf32>
    %26 = tpu.matmul %11, %18, %cst_24 {dimension_numbers = #tpu.dot_dimension_numbers<[1], [1], [0], [0], [0, 0, 1, 0], [], []>} : vector<8x8xf32>, vector<8x8xf32>, vector<8x8xf32> -> vector<8x8xf32>
    "tpu.trace_stop"() : () -> ()
    %cst_25 = arith.constant dense<0xFF800000> : vector<8xf32>
    %27 = vector.multi_reduction <maximumf>, %26, %cst_25 [1] : vector<8x8xf32> to vector<8xf32>
    %28 = vector.shape_cast %27 : vector<8xf32> to vector<8x1xf32>
    %29 = vector.broadcast %28 : vector<8x1xf32> to vector<8x8xf32>
    %30 = arith.subf %26, %29 : vector<8x8xf32>
    %31 = math.exp %30 : vector<8x8xf32>
    %cst_26 = arith.constant dense<0.000000e+00> : vector<8xf32>
    %32 = vector.multi_reduction <add>, %31, %cst_26 [1] : vector<8x8xf32> to vector<8xf32>
    %33 = vector.shape_cast %32 : vector<8xf32> to vector<8x1xf32>
    %34 = vector.broadcast %33 : vector<8x1xf32> to vector<8x8xf32>
    %35 = arith.divf %31, %34 : vector<8x8xf32>
    %cst_27 = arith.constant dense<0.000000e+00> : vector<8x8xf32>
    %36 = tpu.matmul %35, %25, %cst_27 {dimension_numbers = #tpu.dot_dimension_numbers<[1], [0], [0], [1], [0, 0, 1, 1], [], []>} : vector<8x8xf32>, vector<8x8xf32>, vector<8x8xf32> -> vector<8x8xf32>
    %c0_28 = arith.constant 0 : index
    %c0_29 = arith.constant 0 : index
    %c0_30 = arith.constant 0 : index
    %37 = vector.load %arg8[%c0_28, %c0_29, %c0_30] : memref<4x8x32xf32, #tpu.memory_space<vmem>>, vector<1x8x32xf32>
    %38 = vector.shape_cast %37 : vector<1x8x32xf32> to vector<8x32xf32>
    %cst_31 = arith.constant dense<0.000000e+00> : vector<8x32xf32>
    %39 = tpu.matmul %36, %38, %cst_31 {dimension_numbers = #tpu.dot_dimension_numbers<[1], [0], [0], [1], [0, 0, 1, 1], [], []>} : vector<8x8xf32>, vector<8x32xf32>, vector<8x32xf32> -> vector<8x32xf32>
    %40 = arith.addf %2, %39 : vector<8x32xf32>
    %c1 = arith.constant 1 : index
    %c0_32 = arith.constant 0 : index
    %c0_33 = arith.constant 0 : index
    %41 = vector.load %arg2[%c1, %c0_32, %c0_33] : memref<4x32x8xf32, #tpu.memory_space<vmem>>, vector<1x32x8xf32>
    %42 = vector.shape_cast %41 : vector<1x32x8xf32> to vector<32x8xf32>
    %cst_34 = arith.constant dense<0.000000e+00> : vector<8x8xf32>
    %43 = tpu.matmul %1, %42, %cst_34 {dimension_numbers = #tpu.dot_dimension_numbers<[1], [0], [0], [1], [0, 0, 1, 1], [], []>} : vector<8x32xf32>, vector<32x8xf32>, vector<8x8xf32> -> vector<8x8xf32>
    %c1_35 = arith.constant 1 : index
    %c0_36 = arith.constant 0 : index
    %c0_37 = arith.constant 0 : index
    %44 = vector.load %arg3[%c1_35, %c0_36, %c0_37] : memref<4x1x8xf32, #tpu.memory_space<vmem>>, vector<1x1x8xf32>
    %45 = vector.shape_cast %44 : vector<1x1x8xf32> to vector<1x8xf32>
    %46 = vector.broadcast %45 : vector<1x8xf32> to vector<8x8xf32>
    %47 = arith.addf %43, %46 : vector<8x8xf32>
    %cst_38 = arith.constant 0.353553385 : f32
    %48 = vector.broadcast %cst_38 : f32 to vector<8x8xf32>
    %49 = arith.mulf %47, %48 : vector<8x8xf32>
    %c1_39 = arith.constant 1 : index
    %c0_40 = arith.constant 0 : index
    %c0_41 = arith.constant 0 : index
    %50 = vector.load %arg4[%c1_39, %c0_40, %c0_41] : memref<4x32x8xf32, #tpu.memory_space<vmem>>, vector<1x32x8xf32>
    %51 = vector.shape_cast %50 : vector<1x32x8xf32> to vector<32x8xf32>
    %cst_42 = arith.constant dense<0.000000e+00> : vector<8x8xf32>
    %52 = tpu.matmul %1, %51, %cst_42 {dimension_numbers = #tpu.dot_dimension_numbers<[1], [0], [0], [1], [0, 0, 1, 1], [], []>} : vector<8x32xf32>, vector<32x8xf32>, vector<8x8xf32> -> vector<8x8xf32>
    %c1_43 = arith.constant 1 : index
    %c0_44 = arith.constant 0 : index
    %c0_45 = arith.constant 0 : index
    %53 = vector.load %arg5[%c1_43, %c0_44, %c0_45] : memref<4x1x8xf32, #tpu.memory_space<vmem>>, vector<1x1x8xf32>
    %54 = vector.shape_cast %53 : vector<1x1x8xf32> to vector<1x8xf32>
    %55 = vector.broadcast %54 : vector<1x8xf32> to vector<8x8xf32>
    %56 = arith.addf %52, %55 : vector<8x8xf32>
    %c1_46 = arith.constant 1 : index
    %c0_47 = arith.constant 0 : index
    %c0_48 = arith.constant 0 : index
    %57 = vector.load %arg6[%c1_46, %c0_47, %c0_48] : memref<4x32x8xf32, #tpu.memory_space<vmem>>, vector<1x32x8xf32>
    %58 = vector.shape_cast %57 : vector<1x32x8xf32> to vector<32x8xf32>
    %cst_49 = arith.constant dense<0.000000e+00> : vector<8x8xf32>
    %59 = tpu.matmul %1, %58, %cst_49 {dimension_numbers = #tpu.dot_dimension_numbers<[1], [0], [0], [1], [0, 0, 1, 1], [], []>} : vector<8x32xf32>, vector<32x8xf32>, vector<8x8xf32> -> vector<8x8xf32>
    %c1_50 = arith.constant 1 : index
    %c0_51 = arith.constant 0 : index
    %c0_52 = arith.constant 0 : index
    %60 = vector.load %arg7[%c1_50, %c0_51, %c0_52] : memref<4x1x8xf32, #tpu.memory_space<vmem>>, vector<1x1x8xf32>
    %61 = vector.shape_cast %60 : vector<1x1x8xf32> to vector<1x8xf32>
    %62 = vector.broadcast %61 : vector<1x8xf32> to vector<8x8xf32>
    %63 = arith.addf %59, %62 : vector<8x8xf32>
    "tpu.trace_start"() <{level = 10 : i32, message = "qd,kd->qk"}> : () -> ()
    %cst_53 = arith.constant dense<0.000000e+00> : vector<8x8xf32>
    %64 = tpu.matmul %49, %56, %cst_53 {dimension_numbers = #tpu.dot_dimension_numbers<[1], [1], [0], [0], [0, 0, 1, 0], [], []>} : vector<8x8xf32>, vector<8x8xf32>, vector<8x8xf32> -> vector<8x8xf32>
    "tpu.trace_stop"() : () -> ()
    %cst_54 = arith.constant dense<0xFF800000> : vector<8xf32>
    %65 = vector.multi_reduction <maximumf>, %64, %cst_54 [1] : vector<8x8xf32> to vector<8xf32>
    %66 = vector.shape_cast %65 : vector<8xf32> to vector<8x1xf32>
    %67 = vector.broadcast %66 : vector<8x1xf32> to vector<8x8xf32>
    %68 = arith.subf %64, %67 : vector<8x8xf32>
    %69 = math.exp %68 : vector<8x8xf32>
    %cst_55 = arith.constant dense<0.000000e+00> : vector<8xf32>
    %70 = vector.multi_reduction <add>, %69, %cst_55 [1] : vector<8x8xf32> to vector<8xf32>
    %71 = vector.shape_cast %70 : vector<8xf32> to vector<8x1xf32>
    %72 = vector.broadcast %71 : vector<8x1xf32> to vector<8x8xf32>
    %73 = arith.divf %69, %72 : vector<8x8xf32>
    %cst_56 = arith.constant dense<0.000000e+00> : vector<8x8xf32>
    %74 = tpu.matmul %73, %63, %cst_56 {dimension_numbers = #tpu.dot_dimension_numbers<[1], [0], [0], [1], [0, 0, 1, 1], [], []>} : vector<8x8xf32>, vector<8x8xf32>, vector<8x8xf32> -> vector<8x8xf32>
    %c1_57 = arith.constant 1 : index
    %c0_58 = arith.constant 0 : index
    %c0_59 = arith.constant 0 : index
    %75 = vector.load %arg8[%c1_57, %c0_58, %c0_59] : memref<4x8x32xf32, #tpu.memory_space<vmem>>, vector<1x8x32xf32>
    %76 = vector.shape_cast %75 : vector<1x8x32xf32> to vector<8x32xf32>
    %cst_60 = arith.constant dense<0.000000e+00> : vector<8x32xf32>
    %77 = tpu.matmul %74, %76, %cst_60 {dimension_numbers = #tpu.dot_dimension_numbers<[1], [0], [0], [1], [0, 0, 1, 1], [], []>} : vector<8x8xf32>, vector<8x32xf32>, vector<8x32xf32> -> vector<8x32xf32>
    %78 = arith.addf %40, %77 : vector<8x32xf32>
    %c2 = arith.constant 2 : index
    %c0_61 = arith.constant 0 : index
    %c0_62 = arith.constant 0 : index
    %79 = vector.load %arg2[%c2, %c0_61, %c0_62] : memref<4x32x8xf32, #tpu.memory_space<vmem>>, vector<1x32x8xf32>
    %80 = vector.shape_cast %79 : vector<1x32x8xf32> to vector<32x8xf32>
    %cst_63 = arith.constant dense<0.000000e+00> : vector<8x8xf32>
    %81 = tpu.matmul %1, %80, %cst_63 {dimension_numbers = #tpu.dot_dimension_numbers<[1], [0], [0], [1], [0, 0, 1, 1], [], []>} : vector<8x32xf32>, vector<32x8xf32>, vector<8x8xf32> -> vector<8x8xf32>
    %c2_64 = arith.constant 2 : index
    %c0_65 = arith.constant 0 : index
    %c0_66 = arith.constant 0 : index
    %82 = vector.load %arg3[%c2_64, %c0_65, %c0_66] : memref<4x1x8xf32, #tpu.memory_space<vmem>>, vector<1x1x8xf32>
    %83 = vector.shape_cast %82 : vector<1x1x8xf32> to vector<1x8xf32>
    %84 = vector.broadcast %83 : vector<1x8xf32> to vector<8x8xf32>
    %85 = arith.addf %81, %84 : vector<8x8xf32>
    %cst_67 = arith.constant 0.353553385 : f32
    %86 = vector.broadcast %cst_67 : f32 to vector<8x8xf32>
    %87 = arith.mulf %85, %86 : vector<8x8xf32>
    %c2_68 = arith.constant 2 : index
    %c0_69 = arith.constant 0 : index
    %c0_70 = arith.constant 0 : index
    %88 = vector.load %arg4[%c2_68, %c0_69, %c0_70] : memref<4x32x8xf32, #tpu.memory_space<vmem>>, vector<1x32x8xf32>
    %89 = vector.shape_cast %88 : vector<1x32x8xf32> to vector<32x8xf32>
    %cst_71 = arith.constant dense<0.000000e+00> : vector<8x8xf32>
    %90 = tpu.matmul %1, %89, %cst_71 {dimension_numbers = #tpu.dot_dimension_numbers<[1], [0], [0], [1], [0, 0, 1, 1], [], []>} : vector<8x32xf32>, vector<32x8xf32>, vector<8x8xf32> -> vector<8x8xf32>
    %c2_72 = arith.constant 2 : index
    %c0_73 = arith.constant 0 : index
    %c0_74 = arith.constant 0 : index
    %91 = vector.load %arg5[%c2_72, %c0_73, %c0_74] : memref<4x1x8xf32, #tpu.memory_space<vmem>>, vector<1x1x8xf32>
    %92 = vector.shape_cast %91 : vector<1x1x8xf32> to vector<1x8xf32>
    %93 = vector.broadcast %92 : vector<1x8xf32> to vector<8x8xf32>
    %94 = arith.addf %90, %93 : vector<8x8xf32>
    %c2_75 = arith.constant 2 : index
    %c0_76 = arith.constant 0 : index
    %c0_77 = arith.constant 0 : index
    %95 = vector.load %arg6[%c2_75, %c0_76, %c0_77] : memref<4x32x8xf32, #tpu.memory_space<vmem>>, vector<1x32x8xf32>
    %96 = vector.shape_cast %95 : vector<1x32x8xf32> to vector<32x8xf32>
    %cst_78 = arith.constant dense<0.000000e+00> : vector<8x8xf32>
    %97 = tpu.matmul %1, %96, %cst_78 {dimension_numbers = #tpu.dot_dimension_numbers<[1], [0], [0], [1], [0, 0, 1, 1], [], []>} : vector<8x32xf32>, vector<32x8xf32>, vector<8x8xf32> -> vector<8x8xf32>
    %c2_79 = arith.constant 2 : index
    %c0_80 = arith.constant 0 : index
    %c0_81 = arith.constant 0 : index
    %98 = vector.load %arg7[%c2_79, %c0_80, %c0_81] : memref<4x1x8xf32, #tpu.memory_space<vmem>>, vector<1x1x8xf32>
    %99 = vector.shape_cast %98 : vector<1x1x8xf32> to vector<1x8xf32>
    %100 = vector.broadcast %99 : vector<1x8xf32> to vector<8x8xf32>
    %101 = arith.addf %97, %100 : vector<8x8xf32>
    "tpu.trace_start"() <{level = 10 : i32, message = "qd,kd->qk"}> : () -> ()
    %cst_82 = arith.constant dense<0.000000e+00> : vector<8x8xf32>
    %102 = tpu.matmul %87, %94, %cst_82 {dimension_numbers = #tpu.dot_dimension_numbers<[1], [1], [0], [0], [0, 0, 1, 0], [], []>} : vector<8x8xf32>, vector<8x8xf32>, vector<8x8xf32> -> vector<8x8xf32>
    "tpu.trace_stop"() : () -> ()
    %cst_83 = arith.constant dense<0xFF800000> : vector<8xf32>
    %103 = vector.multi_reduction <maximumf>, %102, %cst_83 [1] : vector<8x8xf32> to vector<8xf32>
    %104 = vector.shape_cast %103 : vector<8xf32> to vector<8x1xf32>
    %105 = vector.broadcast %104 : vector<8x1xf32> to vector<8x8xf32>
    %106 = arith.subf %102, %105 : vector<8x8xf32>
    %107 = math.exp %106 : vector<8x8xf32>
    %cst_84 = arith.constant dense<0.000000e+00> : vector<8xf32>
    %108 = vector.multi_reduction <add>, %107, %cst_84 [1] : vector<8x8xf32> to vector<8xf32>
    %109 = vector.shape_cast %108 : vector<8xf32> to vector<8x1xf32>
    %110 = vector.broadcast %109 : vector<8x1xf32> to vector<8x8xf32>
    %111 = arith.divf %107, %110 : vector<8x8xf32>
    %cst_85 = arith.constant dense<0.000000e+00> : vector<8x8xf32>
    %112 = tpu.matmul %111, %101, %cst_85 {dimension_numbers = #tpu.dot_dimension_numbers<[1], [0], [0], [1], [0, 0, 1, 1], [], []>} : vector<8x8xf32>, vector<8x8xf32>, vector<8x8xf32> -> vector<8x8xf32>
    %c2_86 = arith.constant 2 : index
    %c0_87 = arith.constant 0 : index
    %c0_88 = arith.constant 0 : index
    %113 = vector.load %arg8[%c2_86, %c0_87, %c0_88] : memref<4x8x32xf32, #tpu.memory_space<vmem>>, vector<1x8x32xf32>
    %114 = vector.shape_cast %113 : vector<1x8x32xf32> to vector<8x32xf32>
    %cst_89 = arith.constant dense<0.000000e+00> : vector<8x32xf32>
    %115 = tpu.matmul %112, %114, %cst_89 {dimension_numbers = #tpu.dot_dimension_numbers<[1], [0], [0], [1], [0, 0, 1, 1], [], []>} : vector<8x8xf32>, vector<8x32xf32>, vector<8x32xf32> -> vector<8x32xf32>
    %116 = arith.addf %78, %115 : vector<8x32xf32>
    %c3 = arith.constant 3 : index
    %c0_90 = arith.constant 0 : index
    %c0_91 = arith.constant 0 : index
    %117 = vector.load %arg2[%c3, %c0_90, %c0_91] : memref<4x32x8xf32, #tpu.memory_space<vmem>>, vector<1x32x8xf32>
    %118 = vector.shape_cast %117 : vector<1x32x8xf32> to vector<32x8xf32>
    %cst_92 = arith.constant dense<0.000000e+00> : vector<8x8xf32>
    %119 = tpu.matmul %1, %118, %cst_92 {dimension_numbers = #tpu.dot_dimension_numbers<[1], [0], [0], [1], [0, 0, 1, 1], [], []>} : vector<8x32xf32>, vector<32x8xf32>, vector<8x8xf32> -> vector<8x8xf32>
    %c3_93 = arith.constant 3 : index
    %c0_94 = arith.constant 0 : index
    %c0_95 = arith.constant 0 : index
    %120 = vector.load %arg3[%c3_93, %c0_94, %c0_95] : memref<4x1x8xf32, #tpu.memory_space<vmem>>, vector<1x1x8xf32>
    %121 = vector.shape_cast %120 : vector<1x1x8xf32> to vector<1x8xf32>
    %122 = vector.broadcast %121 : vector<1x8xf32> to vector<8x8xf32>
    %123 = arith.addf %119, %122 : vector<8x8xf32>
    %cst_96 = arith.constant 0.353553385 : f32
    %124 = vector.broadcast %cst_96 : f32 to vector<8x8xf32>
    %125 = arith.mulf %123, %124 : vector<8x8xf32>
    %c3_97 = arith.constant 3 : index
    %c0_98 = arith.constant 0 : index
    %c0_99 = arith.constant 0 : index
    %126 = vector.load %arg4[%c3_97, %c0_98, %c0_99] : memref<4x32x8xf32, #tpu.memory_space<vmem>>, vector<1x32x8xf32>
    %127 = vector.shape_cast %126 : vector<1x32x8xf32> to vector<32x8xf32>
    %cst_100 = arith.constant dense<0.000000e+00> : vector<8x8xf32>
    %128 = tpu.matmul %1, %127, %cst_100 {dimension_numbers = #tpu.dot_dimension_numbers<[1], [0], [0], [1], [0, 0, 1, 1], [], []>} : vector<8x32xf32>, vector<32x8xf32>, vector<8x8xf32> -> vector<8x8xf32>
    %c3_101 = arith.constant 3 : index
    %c0_102 = arith.constant 0 : index
    %c0_103 = arith.constant 0 : index
    %129 = vector.load %arg5[%c3_101, %c0_102, %c0_103] : memref<4x1x8xf32, #tpu.memory_space<vmem>>, vector<1x1x8xf32>
    %130 = vector.shape_cast %129 : vector<1x1x8xf32> to vector<1x8xf32>
    %131 = vector.broadcast %130 : vector<1x8xf32> to vector<8x8xf32>
    %132 = arith.addf %128, %131 : vector<8x8xf32>
    %c3_104 = arith.constant 3 : index
    %c0_105 = arith.constant 0 : index
    %c0_106 = arith.constant 0 : index
    %133 = vector.load %arg6[%c3_104, %c0_105, %c0_106] : memref<4x32x8xf32, #tpu.memory_space<vmem>>, vector<1x32x8xf32>
    %134 = vector.shape_cast %133 : vector<1x32x8xf32> to vector<32x8xf32>
    %cst_107 = arith.constant dense<0.000000e+00> : vector<8x8xf32>
    %135 = tpu.matmul %1, %134, %cst_107 {dimension_numbers = #tpu.dot_dimension_numbers<[1], [0], [0], [1], [0, 0, 1, 1], [], []>} : vector<8x32xf32>, vector<32x8xf32>, vector<8x8xf32> -> vector<8x8xf32>
    %c3_108 = arith.constant 3 : index
    %c0_109 = arith.constant 0 : index
    %c0_110 = arith.constant 0 : index
    %136 = vector.load %arg7[%c3_108, %c0_109, %c0_110] : memref<4x1x8xf32, #tpu.memory_space<vmem>>, vector<1x1x8xf32>
    %137 = vector.shape_cast %136 : vector<1x1x8xf32> to vector<1x8xf32>
    %138 = vector.broadcast %137 : vector<1x8xf32> to vector<8x8xf32>
    %139 = arith.addf %135, %138 : vector<8x8xf32>
    "tpu.trace_start"() <{level = 10 : i32, message = "qd,kd->qk"}> : () -> ()
    %cst_111 = arith.constant dense<0.000000e+00> : vector<8x8xf32>
    %140 = tpu.matmul %125, %132, %cst_111 {dimension_numbers = #tpu.dot_dimension_numbers<[1], [1], [0], [0], [0, 0, 1, 0], [], []>} : vector<8x8xf32>, vector<8x8xf32>, vector<8x8xf32> -> vector<8x8xf32>
    "tpu.trace_stop"() : () -> ()
    %cst_112 = arith.constant dense<0xFF800000> : vector<8xf32>
    %141 = vector.multi_reduction <maximumf>, %140, %cst_112 [1] : vector<8x8xf32> to vector<8xf32>
    %142 = vector.shape_cast %141 : vector<8xf32> to vector<8x1xf32>
    %143 = vector.broadcast %142 : vector<8x1xf32> to vector<8x8xf32>
    %144 = arith.subf %140, %143 : vector<8x8xf32>
    %145 = math.exp %144 : vector<8x8xf32>
    %cst_113 = arith.constant dense<0.000000e+00> : vector<8xf32>
    %146 = vector.multi_reduction <add>, %145, %cst_113 [1] : vector<8x8xf32> to vector<8xf32>
    %147 = vector.shape_cast %146 : vector<8xf32> to vector<8x1xf32>
    %148 = vector.broadcast %147 : vector<8x1xf32> to vector<8x8xf32>
    %149 = arith.divf %145, %148 : vector<8x8xf32>
    %cst_114 = arith.constant dense<0.000000e+00> : vector<8x8xf32>
    %150 = tpu.matmul %149, %139, %cst_114 {dimension_numbers = #tpu.dot_dimension_numbers<[1], [0], [0], [1], [0, 0, 1, 1], [], []>} : vector<8x8xf32>, vector<8x8xf32>, vector<8x8xf32> -> vector<8x8xf32>
    %c3_115 = arith.constant 3 : index
    %c0_116 = arith.constant 0 : index
    %c0_117 = arith.constant 0 : index
    %151 = vector.load %arg8[%c3_115, %c0_116, %c0_117] : memref<4x8x32xf32, #tpu.memory_space<vmem>>, vector<1x8x32xf32>
    %152 = vector.shape_cast %151 : vector<1x8x32xf32> to vector<8x32xf32>
    %cst_118 = arith.constant dense<0.000000e+00> : vector<8x32xf32>
    %153 = tpu.matmul %150, %152, %cst_118 {dimension_numbers = #tpu.dot_dimension_numbers<[1], [0], [0], [1], [0, 0, 1, 1], [], []>} : vector<8x8xf32>, vector<8x32xf32>, vector<8x32xf32> -> vector<8x32xf32>
    %154 = arith.addf %116, %153 : vector<8x32xf32>
    %c0_119 = arith.constant 0 : index
    %c0_120 = arith.constant 0 : index
    %155 = vector.load %arg9[%c0_119, %c0_120] : memref<1x32xf32, #tpu.memory_space<vmem>>, vector<1x32xf32>
    %156 = vector.broadcast %155 : vector<1x32xf32> to vector<8x32xf32>
    %157 = arith.addf %154, %156 : vector<8x32xf32>
    %c0_121 = arith.constant 0 : index
    %c0_122 = arith.constant 0 : index
    %c0_123 = arith.constant 0 : index
    %158 = vector.load %arg10[%c0_121, %c0_122, %c0_123] : memref<1x8x32xf32, #tpu.memory_space<vmem>>, vector<1x8x32xf32>
    %159 = vector.shape_cast %158 : vector<1x8x32xf32> to vector<8x32xf32>
    %160 = vector.shape_cast %157 : vector<8x32xf32> to vector<1x8x32xf32>
    tpu.vector_store %arg10[%c0_121, %c0_122, %c0_123], %160 {strides = array<i32>} : memref<1x8x32xf32, #tpu.memory_space<vmem>>, vector<1x8x32xf32>,
    return
  }
  func.func @transform_0(%arg0: i32) -> (i32, i32, i32) {
    %c0_i32 = arith.constant 0 : i32
    %c0_i32_0 = arith.constant 0 : i32
    %c0_i32_1 = arith.constant 0 : i32
    return %arg0, %c0_i32, %c0_i32_0 : i32, i32, i32
  }
  func.func @transform_1(%arg0: i32) -> (i32, i32, i32) {
    %c0_i32 = arith.constant 0 : i32
    %c0_i32_0 = arith.constant 0 : i32
    %c0_i32_1 = arith.constant 0 : i32
    %c0_i32_2 = arith.constant 0 : i32
    return %c0_i32, %c0_i32_0, %c0_i32_1 : i32, i32, i32
  }
  func.func @transform_2(%arg0: i32) -> (i32, i32, i32) {
    %c0_i32 = arith.constant 0 : i32
    %c0_i32_0 = arith.constant 0 : i32
    %c0_i32_1 = arith.constant 0 : i32
    %c0_i32_2 = arith.constant 0 : i32
    return %c0_i32, %c0_i32_0, %c0_i32_1 : i32, i32, i32
  }
  func.func @transform_3(%arg0: i32) -> (i32, i32, i32) {
    %c0_i32 = arith.constant 0 : i32
    %c0_i32_0 = arith.constant 0 : i32
    %c0_i32_1 = arith.constant 0 : i32
    %c0_i32_2 = arith.constant 0 : i32
    return %c0_i32, %c0_i32_0, %c0_i32_1 : i32, i32, i32
  }
  func.func @transform_4(%arg0: i32) -> (i32, i32, i32) {
    %c0_i32 = arith.constant 0 : i32
    %c0_i32_0 = arith.constant 0 : i32
    %c0_i32_1 = arith.constant 0 : i32
    %c0_i32_2 = arith.constant 0 : i32
    return %c0_i32, %c0_i32_0, %c0_i32_1 : i32, i32, i32
  }
  func.func @transform_5(%arg0: i32) -> (i32, i32, i32) {
    %c0_i32 = arith.constant 0 : i32
    %c0_i32_0 = arith.constant 0 : i32
    %c0_i32_1 = arith.constant 0 : i32
    %c0_i32_2 = arith.constant 0 : i32
    return %c0_i32, %c0_i32_0, %c0_i32_1 : i32, i32, i32
  }
  func.func @transform_6(%arg0: i32) -> (i32, i32, i32) {
    %c0_i32 = arith.constant 0 : i32
    %c0_i32_0 = arith.constant 0 : i32
    %c0_i32_1 = arith.constant 0 : i32
    %c0_i32_2 = arith.constant 0 : i32
    return %c0_i32, %c0_i32_0, %c0_i32_1 : i32, i32, i32
  }
  func.func @transform_7(%arg0: i32) -> (i32, i32, i32) {
    %c0_i32 = arith.constant 0 : i32
    %c0_i32_0 = arith.constant 0 : i32
    %c0_i32_1 = arith.constant 0 : i32
    %c0_i32_2 = arith.constant 0 : i32
    return %c0_i32, %c0_i32_0, %c0_i32_1 : i32, i32, i32
  }
  func.func @transform_8(%arg0: i32) -> (i32, i32) {
    %c0_i32 = arith.constant 0 : i32
    %c0_i32_0 = arith.constant 0 : i32
    %c0_i32_1 = arith.constant 0 : i32
    return %c0_i32, %c0_i32_0 : i32, i32
  }
  func.func @transform_9(%arg0: i32) -> (i32, i32, i32) {
    %c0_i32 = arith.constant 0 : i32
    %c0_i32_0 = arith.constant 0 : i32
    %c0_i32_1 = arith.constant 0 : i32
    return %arg0, %c0_i32, %c0_i32_0 : i32, i32, i32
  }
}

module attributes {stable_mosaic.version = 11 : i64} {
  func.func @_add_ln_kernel(%arg0: i32, %arg1: memref<8x32xf32, #tpu.memory_space<vmem>>, %arg2: memref<8x32xf32, #tpu.memory_space<vmem>>, %arg3: memref<1x32xf32, #tpu.memory_space<vmem>>, %arg4: memref<1x32xf32, #tpu.memory_space<vmem>>, %arg5: memref<8x32xf32, #tpu.memory_space<vmem>>) attributes {dimension_semantics = [#tpu.dimension_semantics<parallel>], iteration_bounds = array<i64: 2>, scalar_prefetch = 0 : i64, scratch_operands = 0 : i64, tpu.core_type = #tpu.core_type<tc>, window_params = [{transform_indices = @transform_0, window_bounds = array<i64: 8, 32>}, {transform_indices = @transform_1, window_bounds = array<i64: 8, 32>}, {pipeline_mode = #tpu.pipeline_mode<synchronous>, transform_indices = @transform_2, window_bounds = array<i64: 1, 32>}, {pipeline_mode = #tpu.pipeline_mode<synchronous>, transform_indices = @transform_3, window_bounds = array<i64: 1, 32>}, {transform_indices = @transform_4, window_bounds = array<i64: 8, 32>}]} {
    %c0 = arith.constant 0 : index
    %c0_0 = arith.constant 0 : index
    %0 = vector.load %arg1[%c0, %c0_0] : memref<8x32xf32, #tpu.memory_space<vmem>>, vector<8x32xf32>
    %c0_1 = arith.constant 0 : index
    %c0_2 = arith.constant 0 : index
    %1 = vector.load %arg2[%c0_1, %c0_2] : memref<8x32xf32, #tpu.memory_space<vmem>>, vector<8x32xf32>
    %2 = arith.addf %0, %1 : vector<8x32xf32>
    %cst = arith.constant dense<0.000000e+00> : vector<8xf32>
    %3 = vector.multi_reduction <add>, %2, %cst [1] : vector<8x32xf32> to vector<8xf32>
    %4 = vector.shape_cast %3 : vector<8xf32> to vector<8x1xf32>
    %cst_3 = arith.constant 3.200000e+01 : f32
    %5 = vector.broadcast %cst_3 : f32 to vector<8x1xf32>
    %6 = arith.divf %4, %5 : vector<8x1xf32>
    %7 = vector.broadcast %6 : vector<8x1xf32> to vector<8x32xf32>
    %8 = arith.subf %2, %7 : vector<8x32xf32>
    %9 = arith.mulf %8, %8 : vector<8x32xf32>
    %cst_4 = arith.constant dense<0.000000e+00> : vector<8xf32>
    %10 = vector.multi_reduction <add>, %9, %cst_4 [1] : vector<8x32xf32> to vector<8xf32>
    %11 = vector.shape_cast %10 : vector<8xf32> to vector<8x1xf32>
    %cst_5 = arith.constant 3.200000e+01 : f32
    %12 = vector.broadcast %cst_5 : f32 to vector<8x1xf32>
    %13 = arith.divf %11, %12 : vector<8x1xf32>
    %cst_6 = arith.constant 9.99999997E-7 : f32
    %14 = vector.broadcast %cst_6 : f32 to vector<8x1xf32>
    %15 = arith.addf %13, %14 : vector<8x1xf32>
    %16 = math.rsqrt %15 : vector<8x1xf32>
    %17 = vector.broadcast %16 : vector<8x1xf32> to vector<8x32xf32>
    %18 = arith.mulf %8, %17 : vector<8x32xf32>
    %c0_7 = arith.constant 0 : index
    %c0_8 = arith.constant 0 : index
    %19 = vector.load %arg3[%c0_7, %c0_8] : memref<1x32xf32, #tpu.memory_space<vmem>>, vector<1x32xf32>
    %20 = vector.broadcast %19 : vector<1x32xf32> to vector<8x32xf32>
    %21 = arith.mulf %18, %20 : vector<8x32xf32>
    %c0_9 = arith.constant 0 : index
    %c0_10 = arith.constant 0 : index
    %22 = vector.load %arg4[%c0_9, %c0_10] : memref<1x32xf32, #tpu.memory_space<vmem>>, vector<1x32xf32>
    %23 = vector.broadcast %22 : vector<1x32xf32> to vector<8x32xf32>
    %24 = arith.addf %21, %23 : vector<8x32xf32>
    %c0_11 = arith.constant 0 : index
    %c0_12 = arith.constant 0 : index
    %25 = vector.load %arg5[%c0_11, %c0_12] : memref<8x32xf32, #tpu.memory_space<vmem>>, vector<8x32xf32>
    tpu.vector_store %arg5[%c0_11, %c0_12], %24 {strides = array<i32>} : memref<8x32xf32, #tpu.memory_space<vmem>>, vector<8x32xf32>,
    return
  }
  func.func @transform_0(%arg0: i32) -> (i32, i32) {
    %c0_i32 = arith.constant 0 : i32
    %c0_i32_0 = arith.constant 0 : i32
    return %arg0, %c0_i32 : i32, i32
  }
  func.func @transform_1(%arg0: i32) -> (i32, i32) {
    %c0_i32 = arith.constant 0 : i32
    %c0_i32_0 = arith.constant 0 : i32
    return %arg0, %c0_i32 : i32, i32
  }
  func.func @transform_2(%arg0: i32) -> (i32, i32) {
    %c0_i32 = arith.constant 0 : i32
    %c0_i32_0 = arith.constant 0 : i32
    %c0_i32_1 = arith.constant 0 : i32
    return %c0_i32, %c0_i32_0 : i32, i32
  }
  func.func @transform_3(%arg0: i32) -> (i32, i32) {
    %c0_i32 = arith.constant 0 : i32
    %c0_i32_0 = arith.constant 0 : i32
    %c0_i32_1 = arith.constant 0 : i32
    return %c0_i32, %c0_i32_0 : i32, i32
  }
  func.func @transform_4(%arg0: i32) -> (i32, i32) {
    %c0_i32 = arith.constant 0 : i32
    %c0_i32_0 = arith.constant 0 : i32
    return %arg0, %c0_i32 : i32, i32
  }
}

module attributes {stable_mosaic.version = 11 : i64} {
  func.func @_ffn_kernel(%arg0: i32, %arg1: i32, %arg2: memref<8x32xf32, #tpu.memory_space<vmem>>, %arg3: memref<32x64xf32, #tpu.memory_space<vmem>>, %arg4: memref<1x64xf32, #tpu.memory_space<vmem>>, %arg5: memref<64x32xf32, #tpu.memory_space<vmem>>, %arg6: memref<1x32xf32, #tpu.memory_space<vmem>>, %arg7: memref<8x32xf32, #tpu.memory_space<vmem>>, %arg8: memref<8x32xf32, #tpu.memory_space<vmem>>) attributes {dimension_semantics = [#tpu.dimension_semantics<parallel>, #tpu.dimension_semantics<arbitrary>], iteration_bounds = array<i64: 2, 1>, scalar_prefetch = 0 : i64, scratch_operands = 1 : i64, tpu.core_type = #tpu.core_type<tc>, window_params = [{transform_indices = @transform_0, window_bounds = array<i64: 8, 32>}, {transform_indices = @transform_1, window_bounds = array<i64: 32, 64>}, {transform_indices = @transform_2, window_bounds = array<i64: 1, 64>}, {transform_indices = @transform_3, window_bounds = array<i64: 64, 32>}, {pipeline_mode = #tpu.pipeline_mode<synchronous>, transform_indices = @transform_4, window_bounds = array<i64: 1, 32>}, {transform_indices = @transform_5, window_bounds = array<i64: 8, 32>}]} {
    %c0_i32 = arith.constant 0 : i32
    %0 = arith.cmpi eq, %arg1, %c0_i32 : i32
    %1 = arith.extui %0 : i1 to i32
    %c0_i32_0 = arith.constant 0 : i32
    %2 = arith.cmpi ne, %1, %c0_i32_0 : i32
    scf.if %2 {
      %cst_19 = arith.constant 0.000000e+00 : f32
      %29 = vector.broadcast %cst_19 : f32 to vector<8x32xf32>
      %c0_20 = arith.constant 0 : index
      %c0_21 = arith.constant 0 : index
      %30 = vector.load %arg8[%c0_20, %c0_21] : memref<8x32xf32, #tpu.memory_space<vmem>>, vector<8x32xf32>
      tpu.vector_store %arg8[%c0_20, %c0_21], %29 {strides = array<i32>} : memref<8x32xf32, #tpu.memory_space<vmem>>, vector<8x32xf32>,
    } else {
    }
    %c0 = arith.constant 0 : index
    %c0_1 = arith.constant 0 : index
    %3 = vector.load %arg2[%c0, %c0_1] : memref<8x32xf32, #tpu.memory_space<vmem>>, vector<8x32xf32>
    %c0_2 = arith.constant 0 : index
    %c0_3 = arith.constant 0 : index
    %4 = vector.load %arg3[%c0_2, %c0_3] : memref<32x64xf32, #tpu.memory_space<vmem>>, vector<32x64xf32>
    %cst = arith.constant dense<0.000000e+00> : vector<8x64xf32>
    %5 = tpu.matmul %3, %4, %cst {dimension_numbers = #tpu.dot_dimension_numbers<[1], [0], [0], [1], [0, 0, 1, 1], [], []>} : vector<8x32xf32>, vector<32x64xf32>, vector<8x64xf32> -> vector<8x64xf32>
    %c0_4 = arith.constant 0 : index
    %c0_5 = arith.constant 0 : index
    %6 = vector.load %arg4[%c0_4, %c0_5] : memref<1x64xf32, #tpu.memory_space<vmem>>, vector<1x64xf32>
    %7 = vector.broadcast %6 : vector<1x64xf32> to vector<8x64xf32>
    %8 = arith.addf %5, %7 : vector<8x64xf32>
    %9 = arith.mulf %8, %8 : vector<8x64xf32>
    %cst_6 = arith.constant 5.000000e-01 : f32
    %10 = vector.broadcast %cst_6 : f32 to vector<8x64xf32>
    %11 = arith.mulf %10, %8 : vector<8x64xf32>
    %cst_7 = arith.constant 0.0356774069 : f32
    %12 = vector.broadcast %cst_7 : f32 to vector<8x64xf32>
    %13 = arith.mulf %12, %9 : vector<8x64xf32>
    %cst_8 = arith.constant 0.797884583 : f32
    %14 = vector.broadcast %cst_8 : f32 to vector<8x64xf32>
    %15 = arith.addf %14, %13 : vector<8x64xf32>
    %16 = arith.mulf %8, %15 : vector<8x64xf32>
    %17 = math.tanh %16 : vector<8x64xf32>
    %cst_9 = arith.constant 1.000000e+00 : f32
    %18 = vector.broadcast %cst_9 : f32 to vector<8x64xf32>
    %19 = arith.addf %18, %17 : vector<8x64xf32>
    %20 = arith.mulf %11, %19 : vector<8x64xf32>
    %c0_10 = arith.constant 0 : index
    %c0_11 = arith.constant 0 : index
    %21 = vector.load %arg8[%c0_10, %c0_11] : memref<8x32xf32, #tpu.memory_space<vmem>>, vector<8x32xf32>
    %c0_12 = arith.constant 0 : index
    %c0_13 = arith.constant 0 : index
    %22 = vector.load %arg5[%c0_12, %c0_13] : memref<64x32xf32, #tpu.memory_space<vmem>>, vector<64x32xf32>
    %cst_14 = arith.constant dense<0.000000e+00> : vector<8x32xf32>
    %23 = tpu.matmul %20, %22, %cst_14 {dimension_numbers = #tpu.dot_dimension_numbers<[1], [0], [0], [1], [0, 0, 1, 1], [], []>} : vector<8x64xf32>, vector<64x32xf32>, vector<8x32xf32> -> vector<8x32xf32>
    %24 = arith.addf %21, %23 : vector<8x32xf32>
    %c0_15 = arith.constant 0 : index
    %c0_16 = arith.constant 0 : index
    %25 = vector.load %arg8[%c0_15, %c0_16] : memref<8x32xf32, #tpu.memory_space<vmem>>, vector<8x32xf32>
    tpu.vector_store %arg8[%c0_15, %c0_16], %24 {strides = array<i32>} : memref<8x32xf32, #tpu.memory_space<vmem>>, vector<8x32xf32>,
    %c0_i32_17 = arith.constant 0 : i32
    %26 = arith.cmpi eq, %arg1, %c0_i32_17 : i32
    %27 = arith.extui %26 : i1 to i32
    %c0_i32_18 = arith.constant 0 : i32
    %28 = arith.cmpi ne, %27, %c0_i32_18 : i32
    scf.if %28 {
      %c0_19 = arith.constant 0 : index
      %c0_20 = arith.constant 0 : index
      %29 = vector.load %arg8[%c0_19, %c0_20] : memref<8x32xf32, #tpu.memory_space<vmem>>, vector<8x32xf32>
      %c0_21 = arith.constant 0 : index
      %c0_22 = arith.constant 0 : index
      %30 = vector.load %arg6[%c0_21, %c0_22] : memref<1x32xf32, #tpu.memory_space<vmem>>, vector<1x32xf32>
      %31 = vector.broadcast %30 : vector<1x32xf32> to vector<8x32xf32>
      %32 = arith.addf %29, %31 : vector<8x32xf32>
      %c0_23 = arith.constant 0 : index
      %c0_24 = arith.constant 0 : index
      %33 = vector.load %arg7[%c0_23, %c0_24] : memref<8x32xf32, #tpu.memory_space<vmem>>, vector<8x32xf32>
      tpu.vector_store %arg7[%c0_23, %c0_24], %32 {strides = array<i32>} : memref<8x32xf32, #tpu.memory_space<vmem>>, vector<8x32xf32>,
    } else {
    }
    return
  }
  func.func @transform_0(%arg0: i32, %arg1: i32) -> (i32, i32) {
    %c0_i32 = arith.constant 0 : i32
    %c0_i32_0 = arith.constant 0 : i32
    return %arg0, %c0_i32 : i32, i32
  }
  func.func @transform_1(%arg0: i32, %arg1: i32) -> (i32, i32) {
    %c0_i32 = arith.constant 0 : i32
    %c0_i32_0 = arith.constant 0 : i32
    return %c0_i32, %arg1 : i32, i32
  }
  func.func @transform_2(%arg0: i32, %arg1: i32) -> (i32, i32) {
    %c0_i32 = arith.constant 0 : i32
    %c0_i32_0 = arith.constant 0 : i32
    return %c0_i32, %arg1 : i32, i32
  }
  func.func @transform_3(%arg0: i32, %arg1: i32) -> (i32, i32) {
    %c0_i32 = arith.constant 0 : i32
    %c0_i32_0 = arith.constant 0 : i32
    return %arg1, %c0_i32 : i32, i32
  }
  func.func @transform_4(%arg0: i32, %arg1: i32) -> (i32, i32) {
    %c0_i32 = arith.constant 0 : i32
    %c0_i32_0 = arith.constant 0 : i32
    %c0_i32_1 = arith.constant 0 : i32
    return %c0_i32, %c0_i32_0 : i32, i32
  }
  func.func @transform_5(%arg0: i32, %arg1: i32) -> (i32, i32) {
    %c0_i32 = arith.constant 0 : i32
    %c0_i32_0 = arith.constant 0 : i32
    return %arg0, %c0_i32 : i32, i32
  }
}

module attributes {stable_mosaic.version = 11 : i64} {
  func.func @_add_ln_kernel(%arg0: i32, %arg1: memref<8x32xf32, #tpu.memory_space<vmem>>, %arg2: memref<8x32xf32, #tpu.memory_space<vmem>>, %arg3: memref<1x32xf32, #tpu.memory_space<vmem>>, %arg4: memref<1x32xf32, #tpu.memory_space<vmem>>, %arg5: memref<8x32xf32, #tpu.memory_space<vmem>>) attributes {dimension_semantics = [#tpu.dimension_semantics<parallel>], iteration_bounds = array<i64: 2>, scalar_prefetch = 0 : i64, scratch_operands = 0 : i64, tpu.core_type = #tpu.core_type<tc>, window_params = [{transform_indices = @transform_0, window_bounds = array<i64: 8, 32>}, {transform_indices = @transform_1, window_bounds = array<i64: 8, 32>}, {pipeline_mode = #tpu.pipeline_mode<synchronous>, transform_indices = @transform_2, window_bounds = array<i64: 1, 32>}, {pipeline_mode = #tpu.pipeline_mode<synchronous>, transform_indices = @transform_3, window_bounds = array<i64: 1, 32>}, {transform_indices = @transform_4, window_bounds = array<i64: 8, 32>}]} {
    %c0 = arith.constant 0 : index
    %c0_0 = arith.constant 0 : index
    %0 = vector.load %arg1[%c0, %c0_0] : memref<8x32xf32, #tpu.memory_space<vmem>>, vector<8x32xf32>
    %c0_1 = arith.constant 0 : index
    %c0_2 = arith.constant 0 : index
    %1 = vector.load %arg2[%c0_1, %c0_2] : memref<8x32xf32, #tpu.memory_space<vmem>>, vector<8x32xf32>
    %2 = arith.addf %0, %1 : vector<8x32xf32>
    %cst = arith.constant dense<0.000000e+00> : vector<8xf32>
    %3 = vector.multi_reduction <add>, %2, %cst [1] : vector<8x32xf32> to vector<8xf32>
    %4 = vector.shape_cast %3 : vector<8xf32> to vector<8x1xf32>
    %cst_3 = arith.constant 3.200000e+01 : f32
    %5 = vector.broadcast %cst_3 : f32 to vector<8x1xf32>
    %6 = arith.divf %4, %5 : vector<8x1xf32>
    %7 = vector.broadcast %6 : vector<8x1xf32> to vector<8x32xf32>
    %8 = arith.subf %2, %7 : vector<8x32xf32>
    %9 = arith.mulf %8, %8 : vector<8x32xf32>
    %cst_4 = arith.constant dense<0.000000e+00> : vector<8xf32>
    %10 = vector.multi_reduction <add>, %9, %cst_4 [1] : vector<8x32xf32> to vector<8xf32>
    %11 = vector.shape_cast %10 : vector<8xf32> to vector<8x1xf32>
    %cst_5 = arith.constant 3.200000e+01 : f32
    %12 = vector.broadcast %cst_5 : f32 to vector<8x1xf32>
    %13 = arith.divf %11, %12 : vector<8x1xf32>
    %cst_6 = arith.constant 9.99999997E-7 : f32
    %14 = vector.broadcast %cst_6 : f32 to vector<8x1xf32>
    %15 = arith.addf %13, %14 : vector<8x1xf32>
    %16 = math.rsqrt %15 : vector<8x1xf32>
    %17 = vector.broadcast %16 : vector<8x1xf32> to vector<8x32xf32>
    %18 = arith.mulf %8, %17 : vector<8x32xf32>
    %c0_7 = arith.constant 0 : index
    %c0_8 = arith.constant 0 : index
    %19 = vector.load %arg3[%c0_7, %c0_8] : memref<1x32xf32, #tpu.memory_space<vmem>>, vector<1x32xf32>
    %20 = vector.broadcast %19 : vector<1x32xf32> to vector<8x32xf32>
    %21 = arith.mulf %18, %20 : vector<8x32xf32>
    %c0_9 = arith.constant 0 : index
    %c0_10 = arith.constant 0 : index
    %22 = vector.load %arg4[%c0_9, %c0_10] : memref<1x32xf32, #tpu.memory_space<vmem>>, vector<1x32xf32>
    %23 = vector.broadcast %22 : vector<1x32xf32> to vector<8x32xf32>
    %24 = arith.addf %21, %23 : vector<8x32xf32>
    %c0_11 = arith.constant 0 : index
    %c0_12 = arith.constant 0 : index
    %25 = vector.load %arg5[%c0_11, %c0_12] : memref<8x32xf32, #tpu.memory_space<vmem>>, vector<8x32xf32>
    tpu.vector_store %arg5[%c0_11, %c0_12], %24 {strides = array<i32>} : memref<8x32xf32, #tpu.memory_space<vmem>>, vector<8x32xf32>,
    return
  }
  func.func @transform_0(%arg0: i32) -> (i32, i32) {
    %c0_i32 = arith.constant 0 : i32
    %c0_i32_0 = arith.constant 0 : i32
    return %arg0, %c0_i32 : i32, i32
  }
  func.func @transform_1(%arg0: i32) -> (i32, i32) {
    %c0_i32 = arith.constant 0 : i32
    %c0_i32_0 = arith.constant 0 : i32
    return %arg0, %c0_i32 : i32, i32
  }
  func.func @transform_2(%arg0: i32) -> (i32, i32) {
    %c0_i32 = arith.constant 0 : i32
    %c0_i32_0 = arith.constant 0 : i32
    %c0_i32_1 = arith.constant 0 : i32
    return %c0_i32, %c0_i32_0 : i32, i32
  }
  func.func @transform_3(%arg0: i32) -> (i32, i32) {
    %c0_i32 = arith.constant 0 : i32
    %c0_i32_0 = arith.constant 0 : i32
    %c0_i32_1 = arith.constant 0 : i32
    return %c0_i32, %c0_i32_0 : i32, i32
  }
  func.func @transform_4(%arg0: i32) -> (i32, i32) {
    %c0_i32 = arith.constant 0 : i32
    %c0_i32_0 = arith.constant 0 : i32
    return %arg0, %c0_i32 : i32, i32
  }
}

</mosaic_0001>

<llo_original>
// kernel: transformer_encoder_layer.5
$region0: #{transformer_encoder_layer.5}
  #allocation0 [shape = 'u32[]', space=smem, size = 0x4, offset = 0x4, fixed_abs, tag = 'smem constant byte address 0x4 - core index']
  #allocation1 [shape = 'u32[144,128]{1,0:T(1,128)}', space=vmem, size = 0x12000, scoped, tag = 'internal scratch']
  %s0 = inlined_call_operand.vmem [shape: f32[16,32], index: 0, kind: input, shape index: {}]
  %s1 = inlined_call_operand.vmem [shape: f32[16,32], index: 1, kind: input, shape index: {}]
  %s2 = inlined_call_operand.vmem [shape: f32[1,32], index: 2, kind: input, shape index: {}]
  %s3 = inlined_call_operand.vmem [shape: f32[1,32], index: 3, kind: input, shape index: {}]
  %s4 = inlined_call_operand.vmem [shape: f32[16,32], index: 4, kind: output, shape index: {}]
  %s5 = sld [smem:[#allocation0]]
  $region49: #{transformer_encoder_layer.5} parent=0
    _
  %s7 = ssub.s32 1, %s5
  %s8 = scalar_select 0, %s7, %s5
  loop: start=0, step=1, limit=4
  $region2: #{transformer_encoder_layer.5} parent=0 // loop_pre_header
    _
  $region3: #{transformer_encoder_layer.5} parent=0 // loop_header
    %s10 = sphi 0, %s14
    %p11 = scmp.ge.s32.totalorder %s10, 4
    %s20 = sphi 0, %s22
    %s23 = sphi 0, %s20
    %s24 = sphi 0, %s23
    %s40 = sphi 0, %s24
    %s46 = sphi 0, %s48
    %s49 = sphi 0, %s46
    %s50 = sphi 0, %s49
    %s66 = sphi 0, %s50
    %s70 = sphi 0, %s70
    %s72 = sphi 0, %s70
    %s73 = sphi 0, %s72
    %s87 = sphi 0, %s73
    %s91 = sphi 0, %s91
    %s93 = sphi 0, %s91
    %s94 = sphi 0, %s93
    %s108 = sphi 0, %s94
    %s114 = sphi 0, %s116
    %s117 = sphi 0, %s114
    %s118 = sphi 0, %s117
    %s134 = sphi 0, %s118
  $region4: #{transformer_encoder_layer.5} parent=0 // loop_header_branch
    %13 = sbr.rel (%p11) target = $region8
  $region5: #{transformer_encoder_layer.5} parent=0 // loop_body
    %s15 = ssub.s32 %s10, 1
    %s16 = ssub.s32 %s10, 2
    %s17 = sadd.s32 %s10, 1
    %s18 = ssub.s32 %s10, %s17
    %p19 = scmp.eq.s32.totalorder %s18, 0
    %s21 = sadd.s32 %s20, 1
    %s22 = scalar_select %p19, %s20, %s21
    %p25 = pneg %p19
    %p26 = scmp.eq.s32.totalorder %s10, 1
    %p27 = por %p25, %p26
    %p28 = scmp.ne.s32.totalorder %s20, %s23
    %p29 = scmp.eq.s32.totalorder %s10, 0
    %p30 = por %p28, %p29
    %p31 = scmp.ne.s32.totalorder %s20, %s23
    %p32 = scmp.eq.s32.totalorder %s15, 1
    %p33 = por %p31, %p32
    %p34 = scmp.ne.s32.totalorder %s23, %s24
    %p35 = scmp.eq.s32.totalorder %s15, 0
    %p36 = por %p34, %p35
    %p37 = scmp.ne.s32.totalorder %s23, %s24
    %p38 = scmp.eq.s32.totalorder %s16, 1
    %p39 = por %p37, %p38
    %p41 = scmp.ne.s32.totalorder %s24, %s40
    %p42 = scmp.eq.s32.totalorder %s16, 0
    %p43 = por %p41, %p42
    %s44 = ssub.s32 %s10, %s17
    %p45 = scmp.eq.s32.totalorder %s44, 0
    %s47 = sadd.s32 %s46, 1
    %s48 = scalar_select %p45, %s46, %s47
    %p51 = pneg %p45
    %p52 = scmp.eq.s32.totalorder %s10, 1
    %p53 = por %p51, %p52
    %p54 = scmp.ne.s32.totalorder %s46, %s49
    %p55 = scmp.eq.s32.totalorder %s10, 0
    %p56 = por %p54, %p55
    %p57 = scmp.ne.s32.totalorder %s46, %s49
    %p58 = scmp.eq.s32.totalorder %s15, 1
    %p59 = por %p57, %p58
    %p60 = scmp.ne.s32.totalorder %s49, %s50
    %p61 = scmp.eq.s32.totalorder %s15, 0
    %p62 = por %p60, %p61
    %p63 = scmp.ne.s32.totalorder %s49, %s50
    %p64 = scmp.eq.s32.totalorder %s16, 1
    %p65 = por %p63, %p64
    %p67 = scmp.ne.s32.totalorder %s50, %s66
    %p68 = scmp.eq.s32.totalorder %s16, 0
    %p69 = por %p67, %p68
    %s71 = sadd.s32 %s70, 1
    %p74 = scmp.eq.s32.totalorder %s10, 1
    %p75 = scmp.ne.s32.totalorder %s70, %s72
    %p76 = scmp.eq.s32.totalorder %s10, 0
    %p77 = por %p75, %p76
    %p78 = scmp.ne.s32.totalorder %s70, %s72
    %p79 = scmp.eq.s32.totalorder %s15, 1
    %p80 = por %p78, %p79
    %p81 = scmp.ne.s32.totalorder %s72, %s73
    %p82 = scmp.eq.s32.totalorder %s15, 0
    %p83 = por %p81, %p82
    %p84 = scmp.ne.s32.totalorder %s72, %s73
    %p85 = scmp.eq.s32.totalorder %s16, 1
    %p86 = por %p84, %p85
    %p88 = scmp.ne.s32.totalorder %s73, %s87
    %p89 = scmp.eq.s32.totalorder %s16, 0
    %p90 = por %p88, %p89
    %s92 = sadd.s32 %s91, 1
    %p95 = scmp.eq.s32.totalorder %s10, 1
    %p96 = scmp.ne.s32.totalorder %s91, %s93
    %p97 = scmp.eq.s32.totalorder %s10, 0
    %p98 = por %p96, %p97
    %p99 = scmp.ne.s32.totalorder %s91, %s93
    %p100 = scmp.eq.s32.totalorder %s15, 1
    %p101 = por %p99, %p100
    %p102 = scmp.ne.s32.totalorder %s93, %s94
    %p103 = scmp.eq.s32.totalorder %s15, 0
    %p104 = por %p102, %p103
    %p105 = scmp.ne.s32.totalorder %s93, %s94
    %p106 = scmp.eq.s32.totalorder %s16, 1
    %p107 = por %p105, %p106
    %p109 = scmp.ne.s32.totalorder %s94, %s108
    %p110 = scmp.eq.s32.totalorder %s16, 0
    %p111 = por %p109, %p110
    %s112 = ssub.s32 %s10, %s17
    %p113 = scmp.eq.s32.totalorder %s112, 0
    %s115 = sadd.s32 %s114, 1
    %s116 = scalar_select %p113, %s114, %s115
    %p119 = pneg %p113
    %p120 = scmp.eq.s32.totalorder %s10, 1
    %p121 = por %p119, %p120
    %p122 = scmp.ne.s32.totalorder %s114, %s117
    %p123 = scmp.eq.s32.totalorder %s10, 0
    %p124 = por %p122, %p123
    %p125 = scmp.ne.s32.totalorder %s114, %s117
    %p126 = scmp.eq.s32.totalorder %s15, 1
    %p127 = por %p125, %p126
    %p128 = scmp.ne.s32.totalorder %s117, %s118
    %p129 = scmp.eq.s32.totalorder %s15, 0
    %p130 = por %p128, %p129
    %p131 = scmp.ne.s32.totalorder %s117, %s118
    %p132 = scmp.eq.s32.totalorder %s16, 1
    %p133 = por %p131, %p132
    %p135 = scmp.ne.s32.totalorder %s118, %s134
    %p136 = scmp.eq.s32.totalorder %s16, 0
    %p137 = por %p135, %p136
    %p138 = scmp.le.s32.totalorder 1, %s10
    %p139 = scmp.lt.s32.totalorder %s10, 3
    %p140 = pnand %p138, %p139
    %p141 = pneg %p140
    // Predicated region
    $region9: #{transformer_encoder_layer.5} parent=5 // pred_check
      _
    $region10: #{transformer_encoder_layer.5} parent=5 // pred_check_branch
      %143 = sbr.rel (%p140) target = $region12
    $region11: #{transformer_encoder_layer.5} parent=5 // pred_region
      %s144 = ssub.s32 %s10, 1
      // Predicated region
      $region13: #{transformer_encoder_layer.5} parent=11 // pred_check
        %p145 = pneg %p83
      $region14: #{transformer_encoder_layer.5} parent=11 // pred_check_branch
        %147 = sbr.rel (%p145) target = $region16
      $region15: #{transformer_encoder_layer.5} parent=11 // pred_region
        _
      $region16: #{transformer_encoder_layer.5} parent=11 // pred_fallthru
        _
      // Predicated region
      $region17: #{transformer_encoder_layer.5} parent=11 // pred_check
        %p148 = pneg %p104
      $region18: #{transformer_encoder_layer.5} parent=11 // pred_check_branch
        %150 = sbr.rel (%p148) target = $region20
      $region19: #{transformer_encoder_layer.5} parent=11 // pred_region
        _
      $region20: #{transformer_encoder_layer.5} parent=11 // pred_fallthru
        _
    $region12: #{transformer_encoder_layer.5} parent=5 // pred_fallthru
      _
    %p151 = scmp.lt.s32.totalorder %s10, 2
    // Predicated region
    $region21: #{transformer_encoder_layer.5} parent=5 // pred_check
      %p152 = pneg %p151
    $region22: #{transformer_encoder_layer.5} parent=5 // pred_check_branch
      %154 = sbr.rel (%p152) target = $region24
    $region23: #{transformer_encoder_layer.5} parent=5 // pred_region
      // Predicated region
      $region25: #{transformer_encoder_layer.5} parent=23 // pred_check
        %p155 = pneg %p30
      $region26: #{transformer_encoder_layer.5} parent=23 // pred_check_branch
        %157 = sbr.rel (%p155) target = $region28
      $region27: #{transformer_encoder_layer.5} parent=23 // pred_region
        %p158 = scmp.lt.s32.totalorder %s10, 1
        %s159 = scalar_select %p158, %s10, 1
        %s160 = smul.addr %s159, 8
        %s161 = scalar_lea.vmem %s0, %s160
      $region28: #{transformer_encoder_layer.5} parent=23 // pred_fallthru
        _
      // Predicated region
      $region29: #{transformer_encoder_layer.5} parent=23 // pred_check
        %p162 = pneg %p56
      $region30: #{transformer_encoder_layer.5} parent=23 // pred_check_branch
        %164 = sbr.rel (%p162) target = $region32
      $region31: #{transformer_encoder_layer.5} parent=23 // pred_region
        %p165 = scmp.lt.s32.totalorder %s10, 1
        %s166 = scalar_select %p165, %s10, 1
        %s167 = smul.addr %s166, 8
        %s168 = scalar_lea.vmem %s1, %s167
      $region32: #{transformer_encoder_layer.5} parent=23 // pred_fallthru
        _
    $region24: #{transformer_encoder_layer.5} parent=5 // pred_fallthru
      _
    %p169 = scmp.le.s32.totalorder 1, %s10
    %p170 = scmp.lt.s32.totalorder %s10, 3
    %p171 = pnand %p169, %p170
    %p172 = pneg %p171
    // Predicated region
    $region33: #{transformer_encoder_layer.5} parent=5 // pred_check
      _
    $region34: #{transformer_encoder_layer.5} parent=5 // pred_check_branch
      %174 = sbr.rel (%p171) target = $region36
    $region35: #{transformer_encoder_layer.5} parent=5 // pred_region
      %s175 = ssub.s32 %s10, 1
      %p176 = scmp.lt.s32.totalorder %s15, 1
      %s177 = scalar_select %p176, %s15, 1
      %s178 = smul.addr %s177, 8
      %s179 = scalar_lea.vmem %s0, %s178
      %p180 = pneg %p36
      %p181 = pneg %p33
      %p182 = scmp.lt.s32.totalorder %s15, 1
      %s183 = scalar_select %p182, %s15, 1
      %s184 = smul.addr %s183, 8
      %s185 = scalar_lea.vmem %s1, %s184
      %p186 = pneg %p62
      %p187 = pneg %p59
      %p188 = pneg %p83
      %p189 = pneg %p80
      %p190 = pneg %p104
      %p191 = pneg %p101
      %p192 = pneg %p130
      %p193 = pneg %p127
      %p194 = scmp.lt.s32.totalorder %s15, 1
      %s195 = scalar_select %p194, %s15, 1
      %s196 = smul.addr %s195, 8
      %s197 = scalar_lea.vmem %s4, %s196
      %p198 = scmp.lt.s32.totalorder %s15, 1
      %s199 = scalar_select %p198, %s15, 1
      %s200 = smul.addr %s199, 8
      %s201 = scalar_lea.vmem %s0, %s200
      %p202 = scmp.lt.s32.totalorder %s15, 1
      %s203 = scalar_select %p202, %s15, 1
      %s204 = smul.addr %s203, 8
      %s205 = scalar_lea.vmem %s1, %s204
      %p206 = scmp.lt.s32.totalorder %s15, 1
      %s207 = scalar_select %p206, %s15, 1
      %s208 = smul.addr %s207, 8
      %s209 = scalar_lea.vmem %s4, %s208
      %v210 = vld [vmem:[%s201] sm:$0xff]
      %v211 = vld [vmem:[%s205] sm:$0xff]
      %v212 = vadd.f32 %v210, %v211
      %vm213 = vcmask 261120
      %v214 = vsel %vm213, %v212, 0.0
      %215 = vadd.xlane.f32.xlu0 %v214
      %v216 = vpop.xlane.xlu0 %215
      %v217 = vrcp.pop 32.0
      %v218 = vmul.f32 %v216, %v217
      %v219 = vsub.f32 %v212, %v218
      %v220 = vmul.f32 %v219, %v219
      %v221 = vsel %vm213, %v220, 0.0
      %222 = vadd.xlane.f32.xlu0 %v221
      %v223 = vpop.xlane.xlu0 %222
      %v224 = vmul.f32 %v223, %v217
      %v225 = vadd.f32 %v224, 1e-06
      %v226 = vrsqrt.pop %v225
      %v227 = vmul.f32 %v219, %v226
      %v228 = vld [vmem:[%s2] sm:$0x1]
      %v230 = vlaneseq
      %v231 = vshrl.u32 %v230, 7
      %v232 = vsub.s32 0, %v231
      %v233 = vrot.slane %v228, %v232
      %v235 = vmul.f32 %v227, %v233
      %v236 = vld [vmem:[%s3] sm:$0x1]
      %v238 = vlaneseq
      %v239 = vshrl.u32 %v238, 7
      %v240 = vsub.s32 0, %v239
      %v241 = vrot.slane %v236, %v240
      %v243 = vadd.f32 %v235, %v241
      %244 = vst.msk [vmem:[%s209] sm:$0xff] %vm213, %v243
      %p245 = scmp.lt.s32.totalorder %s15, 1
      %s246 = scalar_select %p245, %s15, 1
      %s247 = smul.addr %s246, 8
      %s248 = scalar_lea.vmem %s4, %s247
      // Predicated region
      $region37: #{transformer_encoder_layer.5} parent=35 // pred_check
        %p249 = pneg %p127
      $region38: #{transformer_encoder_layer.5} parent=35 // pred_check_branch
        %251 = sbr.rel (%p249) target = $region40
      $region39: #{transformer_encoder_layer.5} parent=35 // pred_region
        _
      $region40: #{transformer_encoder_layer.5} parent=35 // pred_fallthru
        _
    $region36: #{transformer_encoder_layer.5} parent=5 // pred_fallthru
      _
    %p252 = scmp.le.s32.totalorder 2, %s10
    // Predicated region
    $region41: #{transformer_encoder_layer.5} parent=5 // pred_check
      %p253 = pneg %p252
    $region42: #{transformer_encoder_layer.5} parent=5 // pred_check_branch
      %255 = sbr.rel (%p253) target = $region44
    $region43: #{transformer_encoder_layer.5} parent=5 // pred_region
      %s256 = ssub.s32 %s10, 2
      // Predicated region
      $region45: #{transformer_encoder_layer.5} parent=43 // pred_check
        %p257 = pneg %p133
      $region46: #{transformer_encoder_layer.5} parent=43 // pred_check_branch
        %259 = sbr.rel (%p257) target = $region48
      $region47: #{transformer_encoder_layer.5} parent=43 // pred_region
        %p260 = scmp.lt.s32.totalorder %s16, 1
        %s261 = scalar_select %p260, %s16, 1
        %s262 = smul.addr %s261, 8
        %s263 = scalar_lea.vmem %s4, %s262
      $region48: #{transformer_encoder_layer.5} parent=43 // pred_fallthru
        _
    $region44: #{transformer_encoder_layer.5} parent=5 // pred_fallthru
      _
  $region6: #{transformer_encoder_layer.5} parent=0 // loop_footer
    %s14 = sadd.s32 1, %s10
  $region7: #{transformer_encoder_layer.5} parent=0 // loop_footer_branch
    %9 = sbr.rel target = $region3
  $region8: #{transformer_encoder_layer.5} parent=0 // loop_exit
    _

// kernel: transformer_encoder_layer.7
$region0: #{transformer_encoder_layer.7}
  #allocation0 [shape = 'u32[]', space=smem, size = 0x4, offset = 0x4, fixed_abs, tag = 'smem constant byte address 0x4 - core index']
  #allocation1 [shape = 'u32[144,128]{1,0:T(1,128)}', space=vmem, size = 0x12000, scoped, tag = 'internal scratch']
  %s0 = inlined_call_operand.vmem [shape: f32[16,32], index: 0, kind: input, shape index: {}]
  %s1 = inlined_call_operand.vmem [shape: f32[16,32], index: 1, kind: input, shape index: {}]
  %s2 = inlined_call_operand.vmem [shape: f32[1,32], index: 2, kind: input, shape index: {}]
  %s3 = inlined_call_operand.vmem [shape: f32[1,32], index: 3, kind: input, shape index: {}]
  %s4 = inlined_call_operand.hbm [shape: f32[16,32], index: 4, kind: output, shape index: {}]
  %s5 = sld [smem:[#allocation0]]
  $region49: #{transformer_encoder_layer.7} parent=0
    _
  %s7 = ssub.s32 1, %s5
  %s8 = scalar_select 0, %s7, %s5
  $region1: #{transformer_encoder_layer.7} parent=0
    #allocation2 [shape = 'u8[8192]{0}', space=vmem, size = 0x2000, scoped, tag = 'output window, operand 0']
    #allocation3 [shape = 's32[2]{0}', space=sflag, size = 0x8, scoped, tag = 'scoped memory for transformer_encoder_layer.7']
    %9 = vsyncpa [#allocation3], 0
    %s10 = scalar_lea.sflag [#allocation3], 1
    %11 = vsyncpa %s10, 0
    loop: start=0, step=1, limit=4
    $region2: #{transformer_encoder_layer.7} parent=1 // loop_pre_header
      _
    $region3: #{transformer_encoder_layer.7} parent=1 // loop_header
      %s13 = sphi 0, %s17
      %p14 = scmp.ge.s32.totalorder %s13, 4
      %s23 = sphi 0, %s25
      %s26 = sphi 0, %s23
      %s27 = sphi 0, %s26
      %s43 = sphi 0, %s27
      %s49 = sphi 0, %s51
      %s52 = sphi 0, %s49
      %s53 = sphi 0, %s52
      %s69 = sphi 0, %s53
      %s73 = sphi 0, %s73
      %s75 = sphi 0, %s73
      %s76 = sphi 0, %s75
      %s90 = sphi 0, %s76
      %s94 = sphi 0, %s94
      %s96 = sphi 0, %s94
      %s97 = sphi 0, %s96
      %s111 = sphi 0, %s97
      %s117 = sphi 0, %s119
      %s120 = sphi 0, %s117
      %s121 = sphi 0, %s120
      %s137 = sphi 0, %s121
    $region4: #{transformer_encoder_layer.7} parent=1 // loop_header_branch
      %16 = sbr.rel (%p14) target = $region8
    $region5: #{transformer_encoder_layer.7} parent=1 // loop_body
      %s18 = ssub.s32 %s13, 1
      %s19 = ssub.s32 %s13, 2
      %s20 = sadd.s32 %s13, 1
      %s21 = ssub.s32 %s13, %s20
      %p22 = scmp.eq.s32.totalorder %s21, 0
      %s24 = sadd.s32 %s23, 1
      %s25 = scalar_select %p22, %s23, %s24
      %p28 = pneg %p22
      %p29 = scmp.eq.s32.totalorder %s13, 1
      %p30 = por %p28, %p29
      %p31 = scmp.ne.s32.totalorder %s23, %s26
      %p32 = scmp.eq.s32.totalorder %s13, 0
      %p33 = por %p31, %p32
      %p34 = scmp.ne.s32.totalorder %s23, %s26
      %p35 = scmp.eq.s32.totalorder %s18, 1
      %p36 = por %p34, %p35
      %p37 = scmp.ne.s32.totalorder %s26, %s27
      %p38 = scmp.eq.s32.totalorder %s18, 0
      %p39 = por %p37, %p38
      %p40 = scmp.ne.s32.totalorder %s26, %s27
      %p41 = scmp.eq.s32.totalorder %s19, 1
      %p42 = por %p40, %p41
      %p44 = scmp.ne.s32.totalorder %s27, %s43
      %p45 = scmp.eq.s32.totalorder %s19, 0
      %p46 = por %p44, %p45
      %s47 = ssub.s32 %s13, %s20
      %p48 = scmp.eq.s32.totalorder %s47, 0
      %s50 = sadd.s32 %s49, 1
      %s51 = scalar_select %p48, %s49, %s50
      %p54 = pneg %p48
      %p55 = scmp.eq.s32.totalorder %s13, 1
      %p56 = por %p54, %p55
      %p57 = scmp.ne.s32.totalorder %s49, %s52
      %p58 = scmp.eq.s32.totalorder %s13, 0
      %p59 = por %p57, %p58
      %p60 = scmp.ne.s32.totalorder %s49, %s52
      %p61 = scmp.eq.s32.totalorder %s18, 1
      %p62 = por %p60, %p61
      %p63 = scmp.ne.s32.totalorder %s52, %s53
      %p64 = scmp.eq.s32.totalorder %s18, 0
      %p65 = por %p63, %p64
      %p66 = scmp.ne.s32.totalorder %s52, %s53
      %p67 = scmp.eq.s32.totalorder %s19, 1
      %p68 = por %p66, %p67
      %p70 = scmp.ne.s32.totalorder %s53, %s69
      %p71 = scmp.eq.s32.totalorder %s19, 0
      %p72 = por %p70, %p71
      %s74 = sadd.s32 %s73, 1
      %p77 = scmp.eq.s32.totalorder %s13, 1
      %p78 = scmp.ne.s32.totalorder %s73, %s75
      %p79 = scmp.eq.s32.totalorder %s13, 0
      %p80 = por %p78, %p79
      %p81 = scmp.ne.s32.totalorder %s73, %s75
      %p82 = scmp.eq.s32.totalorder %s18, 1
      %p83 = por %p81, %p82
      %p84 = scmp.ne.s32.totalorder %s75, %s76
      %p85 = scmp.eq.s32.totalorder %s18, 0
      %p86 = por %p84, %p85
      %p87 = scmp.ne.s32.totalorder %s75, %s76
      %p88 = scmp.eq.s32.totalorder %s19, 1
      %p89 = por %p87, %p88
      %p91 = scmp.ne.s32.totalorder %s76, %s90
      %p92 = scmp.eq.s32.totalorder %s19, 0
      %p93 = por %p91, %p92
      %s95 = sadd.s32 %s94, 1
      %p98 = scmp.eq.s32.totalorder %s13, 1
      %p99 = scmp.ne.s32.totalorder %s94, %s96
      %p100 = scmp.eq.s32.totalorder %s13, 0
      %p101 = por %p99, %p100
      %p102 = scmp.ne.s32.totalorder %s94, %s96
      %p103 = scmp.eq.s32.totalorder %s18, 1
      %p104 = por %p102, %p103
      %p105 = scmp.ne.s32.totalorder %s96, %s97
      %p106 = scmp.eq.s32.totalorder %s18, 0
      %p107 = por %p105, %p106
      %p108 = scmp.ne.s32.totalorder %s96, %s97
      %p109 = scmp.eq.s32.totalorder %s19, 1
      %p110 = por %p108, %p109
      %p112 = scmp.ne.s32.totalorder %s97, %s111
      %p113 = scmp.eq.s32.totalorder %s19, 0
      %p114 = por %p112, %p113
      %s115 = ssub.s32 %s13, %s20
      %p116 = scmp.eq.s32.totalorder %s115, 0
      %s118 = sadd.s32 %s117, 1
      %s119 = scalar_select %p116, %s117, %s118
      %p122 = pneg %p116
      %p123 = scmp.eq.s32.totalorder %s13, 1
      %p124 = por %p122, %p123
      %p125 = scmp.ne.s32.totalorder %s117, %s120
      %p126 = scmp.eq.s32.totalorder %s13, 0
      %p127 = por %p125, %p126
      %p128 = scmp.ne.s32.totalorder %s117, %s120
      %p129 = scmp.eq.s32.totalorder %s18, 1
      %p130 = por %p128, %p129
      %p131 = scmp.ne.s32.totalorder %s120, %s121
      %p132 = scmp.eq.s32.totalorder %s18, 0
      %p133 = por %p131, %p132
      %p134 = scmp.ne.s32.totalorder %s120, %s121
      %p135 = scmp.eq.s32.totalorder %s19, 1
      %p136 = por %p134, %p135
      %p138 = scmp.ne.s32.totalorder %s121, %s137
      %p139 = scmp.eq.s32.totalorder %s19, 0
      %p140 = por %p138, %p139
      %p141 = scmp.le.s32.totalorder 1, %s13
      %p142 = scmp.lt.s32.totalorder %s13, 3
      %p143 = pnand %p141, %p142
      %p144 = pneg %p143
      // Predicated region
      $region9: #{transformer_encoder_layer.7} parent=5 // pred_check
        _
      $region10: #{transformer_encoder_layer.7} parent=5 // pred_check_branch
        %146 = sbr.rel (%p143) target = $region12
      $region11: #{transformer_encoder_layer.7} parent=5 // pred_region
        %s147 = ssub.s32 %s13, 1
        // Predicated region
        $region13: #{transformer_encoder_layer.7} parent=11 // pred_check
          %p148 = pneg %p86
        $region14: #{transformer_encoder_layer.7} parent=11 // pred_check_branch
          %150 = sbr.rel (%p148) target = $region16
        $region15: #{transformer_encoder_layer.7} parent=11 // pred_region
          _
        $region16: #{transformer_encoder_layer.7} parent=11 // pred_fallthru
          _
        // Predicated region
        $region17: #{transformer_encoder_layer.7} parent=11 // pred_check
          %p151 = pneg %p107
        $region18: #{transformer_encoder_layer.7} parent=11 // pred_check_branch
          %153 = sbr.rel (%p151) target = $region20
        $region19: #{transformer_encoder_layer.7} parent=11 // pred_region
          _
        $region20: #{transformer_encoder_layer.7} parent=11 // pred_fallthru
          _
      $region12: #{transformer_encoder_layer.7} parent=5 // pred_fallthru
        _
      %p154 = scmp.lt.s32.totalorder %s13, 2
      // Predicated region
      $region21: #{transformer_encoder_layer.7} parent=5 // pred_check
        %p155 = pneg %p154
      $region22: #{transformer_encoder_layer.7} parent=5 // pred_check_branch
        %157 = sbr.rel (%p155) target = $region24
      $region23: #{transformer_encoder_layer.7} parent=5 // pred_region
        // Predicated region
        $region25: #{transformer_encoder_layer.7} parent=23 // pred_check
          %p158 = pneg %p33
        $region26: #{transformer_encoder_layer.7} parent=23 // pred_check_branch
          %160 = sbr.rel (%p158) target = $region28
        $region27: #{transformer_encoder_layer.7} parent=23 // pred_region
          %p161 = scmp.lt.s32.totalorder %s13, 1
          %s162 = scalar_select %p161, %s13, 1
          %s163 = smul.addr %s162, 8
          %s164 = scalar_lea.vmem %s0, %s163
        $region28: #{transformer_encoder_layer.7} parent=23 // pred_fallthru
          _
        // Predicated region
        $region29: #{transformer_encoder_layer.7} parent=23 // pred_check
          %p165 = pneg %p59
        $region30: #{transformer_encoder_layer.7} parent=23 // pred_check_branch
          %167 = sbr.rel (%p165) target = $region32
        $region31: #{transformer_encoder_layer.7} parent=23 // pred_region
          %p168 = scmp.lt.s32.totalorder %s13, 1
          %s169 = scalar_select %p168, %s13, 1
          %s170 = smul.addr %s169, 8
          %s171 = scalar_lea.vmem %s1, %s170
        $region32: #{transformer_encoder_layer.7} parent=23 // pred_fallthru
          _
      $region24: #{transformer_encoder_layer.7} parent=5 // pred_fallthru
        _
      %p172 = scmp.le.s32.totalorder 1, %s13
      %p173 = scmp.lt.s32.totalorder %s13, 3
      %p174 = pnand %p172, %p173
      %p175 = pneg %p174
      // Predicated region
      $region33: #{transformer_encoder_layer.7} parent=5 // pred_check
        _
      $region34: #{transformer_encoder_layer.7} parent=5 // pred_check_branch
        %177 = sbr.rel (%p174) target = $region36
      $region35: #{transformer_encoder_layer.7} parent=5 // pred_region
        %s178 = ssub.s32 %s13, 1
        %p179 = scmp.lt.s32.totalorder %s18, 1
        %s180 = scalar_select %p179, %s18, 1
        %s181 = smul.addr %s180, 8
        %s182 = scalar_lea.vmem %s0, %s181
        %p183 = pneg %p39
        %p184 = pneg %p36
        %p185 = scmp.lt.s32.totalorder %s18, 1
        %s186 = scalar_select %p185, %s18, 1
        %s187 = smul.addr %s186, 8
        %s188 = scalar_lea.vmem %s1, %s187
        %p189 = pneg %p65
        %p190 = pneg %p62
        %p191 = pneg %p86
        %p192 = pneg %p83
        %p193 = pneg %p107
        %p194 = pneg %p104
        %p195 = pneg %p133
        %p196 = pneg %p130
        %s197 = sand.u32 %s120, 1
        %s198 = scalar_lea.sflag [#allocation3], %s197
        %s199 = sand.u32 %s120, 1
        %s200 = smul.addr %s199, 8
        %s201 = scalar_lea.vmem [#allocation2], %s200
        %p202 = scmp.lt.s32.totalorder %s18, 1
        %s203 = scalar_select %p202, %s18, 1
        %s204 = smul.addr %s203, 8
        %s205 = scalar_lea.vmem %s0, %s204
        %p206 = scmp.lt.s32.totalorder %s18, 1
        %s207 = scalar_select %p206, %s18, 1
        %s208 = smul.addr %s207, 8
        %s209 = scalar_lea.vmem %s1, %s208
        %v210 = vld [vmem:[%s205] sm:$0xff]
        %v211 = vld [vmem:[%s209] sm:$0xff]
        %v212 = vadd.f32 %v210, %v211
        %vm213 = vcmask 261120
        %v214 = vsel %vm213, %v212, 0.0
        %215 = vadd.xlane.f32.xlu0 %v214
        %v216 = vpop.xlane.xlu0 %215
        %v217 = vrcp.pop 32.0
        %v218 = vmul.f32 %v216, %v217
        %v219 = vsub.f32 %v212, %v218
        %v220 = vmul.f32 %v219, %v219
        %v221 = vsel %vm213, %v220, 0.0
        %222 = vadd.xlane.f32.xlu0 %v221
        %v223 = vpop.xlane.xlu0 %222
        %v224 = vmul.f32 %v223, %v217
        %v225 = vadd.f32 %v224, 1e-06
        %v226 = vrsqrt.pop %v225
        %v227 = vmul.f32 %v219, %v226
        %v228 = vld [vmem:[%s2] sm:$0x1]
        %v230 = vlaneseq
        %v231 = vshrl.u32 %v230, 7
        %v232 = vsub.s32 0, %v231
        %v233 = vrot.slane %v228, %v232
        %v235 = vmul.f32 %v227, %v233
        %v236 = vld [vmem:[%s3] sm:$0x1]
        %v238 = vlaneseq
        %v239 = vshrl.u32 %v238, 7
        %v240 = vsub.s32 0, %v239
        %v241 = vrot.slane %v236, %v240
        %v243 = vadd.f32 %v235, %v241
        %244 = vst.msk [vmem:[%s201] sm:$0xff] %vm213, %v243
        %s245 = sand.u32 %s120, 1
        %s246 = scalar_lea.sflag [#allocation3], %s245
        %s247 = sand.u32 %s120, 1
        %s248 = smul.addr %s247, 8
        %s249 = scalar_lea.vmem [#allocation2], %s248
        // Predicated region
        $region37: #{transformer_encoder_layer.7} parent=35 // pred_check
          %p250 = pneg %p130
        $region38: #{transformer_encoder_layer.7} parent=35 // pred_check_branch
          %252 = sbr.rel (%p250) target = $region40
        $region39: #{transformer_encoder_layer.7} parent=35 // pred_region
          %s254 = ssub.s32 128, 128
          %255 = vsyncadd %s246, %s254
          %s256 = smul.addr %s18, 128
          %s257 = scalar_lea.hbm %s4, %s256
          %s259 = sshll.u32 %s249, 4
          %s260 = int_to_ptr.vmem [resolvable:$true] %s259
          %262 = dma.vmem_to_hbm [thread:$0]  %s260, 128, %s257, %s246
        $region40: #{transformer_encoder_layer.7} parent=35 // pred_fallthru
          _
      $region36: #{transformer_encoder_layer.7} parent=5 // pred_fallthru
        _
      %p263 = scmp.le.s32.totalorder 2, %s13
      // Predicated region
      $region41: #{transformer_encoder_layer.7} parent=5 // pred_check
        %p264 = pneg %p263
      $region42: #{transformer_encoder_layer.7} parent=5 // pred_check_branch
        %266 = sbr.rel (%p264) target = $region44
      $region43: #{transformer_encoder_layer.7} parent=5 // pred_region
        %s267 = ssub.s32 %s13, 2
        // Predicated region
        $region45: #{transformer_encoder_layer.7} parent=43 // pred_check
          %p268 = pneg %p136
        $region46: #{transformer_encoder_layer.7} parent=43 // pred_check_branch
          %270 = sbr.rel (%p268) target = $region48
        $region47: #{transformer_encoder_layer.7} parent=43 // pred_region
          %s271 = sand.u32 %s121, 1
          %s272 = scalar_lea.sflag [#allocation3], %s271
          %s273 = sand.u32 %s121, 1
          %s274 = smul.addr %s273, 8
          %s275 = scalar_lea.vmem [#allocation2], %s274
          %276 = dma.done %s272, 128
        $region48: #{transformer_encoder_layer.7} parent=43 // pred_fallthru
          _
      $region44: #{transformer_encoder_layer.7} parent=5 // pred_fallthru
        _
    $region6: #{transformer_encoder_layer.7} parent=1 // loop_footer
      %s17 = sadd.s32 1, %s13
    $region7: #{transformer_encoder_layer.7} parent=1 // loop_footer_branch
      %12 = sbr.rel target = $region3
    $region8: #{transformer_encoder_layer.7} parent=1 // loop_exit
      _
    %277 = vsyncpa [#allocation3], 1
    %s278 = scalar_lea.sflag [#allocation3], 1
    %279 = vsyncpa %s278, 1

// kernel: transformer_encoder_layer.6
$region0: #{transformer_encoder_layer.6}
  #allocation0 [shape = 'u32[]', space=smem, size = 0x4, offset = 0x4, fixed_abs, tag = 'smem constant byte address 0x4 - core index']
  #allocation1 [shape = 'u32[144,128]{1,0:T(1,128)}', space=vmem, size = 0x12000, scoped, tag = 'internal scratch']
  #allocation2 [shape = 'f32[8,32]{1,0:T(8,128)}', space=vmem, size = 0x1000, scoped, tag = 'scratch operand']
  %s0 = inlined_call_operand.vmem [shape: f32[16,32], index: 0, kind: input, shape index: {}]
  %s1 = inlined_call_operand.vmem [shape: f32[32,64], index: 1, kind: input, shape index: {}]
  %s2 = inlined_call_operand.vmem [shape: f32[1,64], index: 2, kind: input, shape index: {}]
  %s3 = inlined_call_operand.vmem [shape: f32[64,32], index: 3, kind: input, shape index: {}]
  %s4 = inlined_call_operand.vmem [shape: f32[1,32], index: 4, kind: input, shape index: {}]
  %s5 = inlined_call_operand.vmem [shape: f32[16,32], index: 5, kind: output, shape index: {}]
  %s6 = sld [smem:[#allocation0]]
  $region61: #{transformer_encoder_layer.6} parent=0
    _
  %s8 = ssub.s32 1, %s6
  %s9 = scalar_select 0, %s8, %s6
  loop: start=0, step=1, limit=4
  $region2: #{transformer_encoder_layer.6} parent=0 // loop_pre_header
    _
  $region3: #{transformer_encoder_layer.6} parent=0 // loop_header
    %s11 = sphi 0, %s15
    %p12 = scmp.ge.s32.totalorder %s11, 4
    %s18 = sphi 0, %s30
    %s19 = sphi 0, %s26
    %s20 = sphi 0, %s18
    %s21 = sphi 0, %s19
    %s22 = sphi 0, %s20
    %s23 = sphi 0, %s21
    %s33 = sphi 0, %s35
    %s36 = sphi 0, %s33
    %s37 = sphi 0, %s36
    %s53 = sphi 0, %s37
    %s59 = sphi 0, %s61
    %s62 = sphi 0, %s59
    %s63 = sphi 0, %s62
    %s79 = sphi 0, %s63
    %s85 = sphi 0, %s87
    %s88 = sphi 0, %s85
    %s89 = sphi 0, %s88
    %s105 = sphi 0, %s89
    %s111 = sphi 0, %s113
    %s114 = sphi 0, %s111
    %s115 = sphi 0, %s114
    %s131 = sphi 0, %s115
    %s135 = sphi 0, %s135
    %s137 = sphi 0, %s135
    %s138 = sphi 0, %s137
    %s152 = sphi 0, %s138
    %s158 = sphi 0, %s160
    %s161 = sphi 0, %s158
    %s162 = sphi 0, %s161
    %s178 = sphi 0, %s162
  $region4: #{transformer_encoder_layer.6} parent=0 // loop_header_branch
    %14 = sbr.rel (%p12) target = $region8
  $region5: #{transformer_encoder_layer.6} parent=0 // loop_body
    %s16 = ssub.s32 %s11, 1
    %s17 = ssub.s32 %s11, 2
    %s24 = sadd.s32 1, %s19
    %p25 = scmp.ge.s32.totalorder %s24, 1
    %s26 = scalar_select %p25, 0, %s24
    %s27 = sadd.s32 1, %s18
    %s28 = scalar_select %p25, %s27, %s18
    %p29 = scmp.ge.s32.totalorder %s28, 2
    %s30 = scalar_select %p29, 0, %s28
    %s31 = ssub.s32 %s18, %s30
    %p32 = scmp.eq.s32.totalorder %s31, 0
    %s34 = sadd.s32 %s33, 1
    %s35 = scalar_select %p32, %s33, %s34
    %p38 = pneg %p32
    %p39 = scmp.eq.s32.totalorder %s11, 1
    %p40 = por %p38, %p39
    %p41 = scmp.ne.s32.totalorder %s33, %s36
    %p42 = scmp.eq.s32.totalorder %s11, 0
    %p43 = por %p41, %p42
    %p44 = scmp.ne.s32.totalorder %s33, %s36
    %p45 = scmp.eq.s32.totalorder %s16, 1
    %p46 = por %p44, %p45
    %p47 = scmp.ne.s32.totalorder %s36, %s37
    %p48 = scmp.eq.s32.totalorder %s16, 0
    %p49 = por %p47, %p48
    %p50 = scmp.ne.s32.totalorder %s36, %s37
    %p51 = scmp.eq.s32.totalorder %s17, 1
    %p52 = por %p50, %p51
    %p54 = scmp.ne.s32.totalorder %s37, %s53
    %p55 = scmp.eq.s32.totalorder %s17, 0
    %p56 = por %p54, %p55
    %s57 = ssub.s32 %s19, %s26
    %p58 = scmp.eq.s32.totalorder %s57, 0
    %s60 = sadd.s32 %s59, 1
    %s61 = scalar_select %p58, %s59, %s60
    %p64 = pneg %p58
    %p65 = scmp.eq.s32.totalorder %s11, 1
    %p66 = por %p64, %p65
    %p67 = scmp.ne.s32.totalorder %s59, %s62
    %p68 = scmp.eq.s32.totalorder %s11, 0
    %p69 = por %p67, %p68
    %p70 = scmp.ne.s32.totalorder %s59, %s62
    %p71 = scmp.eq.s32.totalorder %s16, 1
    %p72 = por %p70, %p71
    %p73 = scmp.ne.s32.totalorder %s62, %s63
    %p74 = scmp.eq.s32.totalorder %s16, 0
    %p75 = por %p73, %p74
    %p76 = scmp.ne.s32.totalorder %s62, %s63
    %p77 = scmp.eq.s32.totalorder %s17, 1
    %p78 = por %p76, %p77
    %p80 = scmp.ne.s32.totalorder %s63, %s79
    %p81 = scmp.eq.s32.totalorder %s17, 0
    %p82 = por %p80, %p81
    %s83 = ssub.s32 %s19, %s26
    %p84 = scmp.eq.s32.totalorder %s83, 0
    %s86 = sadd.s32 %s85, 1
    %s87 = scalar_select %p84, %s85, %s86
    %p90 = pneg %p84
    %p91 = scmp.eq.s32.totalorder %s11, 1
    %p92 = por %p90, %p91
    %p93 = scmp.ne.s32.totalorder %s85, %s88
    %p94 = scmp.eq.s32.totalorder %s11, 0
    %p95 = por %p93, %p94
    %p96 = scmp.ne.s32.totalorder %s85, %s88
    %p97 = scmp.eq.s32.totalorder %s16, 1
    %p98 = por %p96, %p97
    %p99 = scmp.ne.s32.totalorder %s88, %s89
    %p100 = scmp.eq.s32.totalorder %s16, 0
    %p101 = por %p99, %p100
    %p102 = scmp.ne.s32.totalorder %s88, %s89
    %p103 = scmp.eq.s32.totalorder %s17, 1
    %p104 = por %p102, %p103
    %p106 = scmp.ne.s32.totalorder %s89, %s105
    %p107 = scmp.eq.s32.totalorder %s17, 0
    %p108 = por %p106, %p107
    %s109 = ssub.s32 %s19, %s26
    %p110 = scmp.eq.s32.totalorder %s109, 0
    %s112 = sadd.s32 %s111, 1
    %s113 = scalar_select %p110, %s111, %s112
    %p116 = pneg %p110
    %p117 = scmp.eq.s32.totalorder %s11, 1
    %p118 = por %p116, %p117
    %p119 = scmp.ne.s32.totalorder %s111, %s114
    %p120 = scmp.eq.s32.totalorder %s11, 0
    %p121 = por %p119, %p120
    %p122 = scmp.ne.s32.totalorder %s111, %s114
    %p123 = scmp.eq.s32.totalorder %s16, 1
    %p124 = por %p122, %p123
    %p125 = scmp.ne.s32.totalorder %s114, %s115
    %p126 = scmp.eq.s32.totalorder %s16, 0
    %p127 = por %p125, %p126
    %p128 = scmp.ne.s32.totalorder %s114, %s115
    %p129 = scmp.eq.s32.totalorder %s17, 1
    %p130 = por %p128, %p129
    %p132 = scmp.ne.s32.totalorder %s115, %s131
    %p133 = scmp.eq.s32.totalorder %s17, 0
    %p134 = por %p132, %p133
    %s136 = sadd.s32 %s135, 1
    %p139 = scmp.eq.s32.totalorder %s11, 1
    %p140 = scmp.ne.s32.totalorder %s135, %s137
    %p141 = scmp.eq.s32.totalorder %s11, 0
    %p142 = por %p140, %p141
    %p143 = scmp.ne.s32.totalorder %s135, %s137
    %p144 = scmp.eq.s32.totalorder %s16, 1
    %p145 = por %p143, %p144
    %p146 = scmp.ne.s32.totalorder %s137, %s138
    %p147 = scmp.eq.s32.totalorder %s16, 0
    %p148 = por %p146, %p147
    %p149 = scmp.ne.s32.totalorder %s137, %s138
    %p150 = scmp.eq.s32.totalorder %s17, 1
    %p151 = por %p149, %p150
    %p153 = scmp.ne.s32.totalorder %s138, %s152
    %p154 = scmp.eq.s32.totalorder %s17, 0
    %p155 = por %p153, %p154
    %s156 = ssub.s32 %s18, %s30
    %p157 = scmp.eq.s32.totalorder %s156, 0
    %s159 = sadd.s32 %s158, 1
    %s160 = scalar_select %p157, %s158, %s159
    %p163 = pneg %p157
    %p164 = scmp.eq.s32.totalorder %s11, 1
    %p165 = por %p163, %p164
    %p166 = scmp.ne.s32.totalorder %s158, %s161
    %p167 = scmp.eq.s32.totalorder %s11, 0
    %p168 = por %p166, %p167
    %p169 = scmp.ne.s32.totalorder %s158, %s161
    %p170 = scmp.eq.s32.totalorder %s16, 1
    %p171 = por %p169, %p170
    %p172 = scmp.ne.s32.totalorder %s161, %s162
    %p173 = scmp.eq.s32.totalorder %s16, 0
    %p174 = por %p172, %p173
    %p175 = scmp.ne.s32.totalorder %s161, %s162
    %p176 = scmp.eq.s32.totalorder %s17, 1
    %p177 = por %p175, %p176
    %p179 = scmp.ne.s32.totalorder %s162, %s178
    %p180 = scmp.eq.s32.totalorder %s17, 0
    %p181 = por %p179, %p180
    %p182 = scmp.le.s32.totalorder 1, %s11
    %p183 = scmp.lt.s32.totalorder %s11, 3
    %p184 = pnand %p182, %p183
    %p185 = pneg %p184
    // Predicated region
    $region9: #{transformer_encoder_layer.6} parent=5 // pred_check
      _
    $region10: #{transformer_encoder_layer.6} parent=5 // pred_check_branch
      %187 = sbr.rel (%p184) target = $region12
    $region11: #{transformer_encoder_layer.6} parent=5 // pred_region
      %s188 = ssub.s32 %s11, 1
      // Predicated region
      $region13: #{transformer_encoder_layer.6} parent=11 // pred_check
        %p189 = pneg %p75
      $region14: #{transformer_encoder_layer.6} parent=11 // pred_check_branch
        %191 = sbr.rel (%p189) target = $region16
      $region15: #{transformer_encoder_layer.6} parent=11 // pred_region
        %p192 = scmp.lt.s32.totalorder %s21, 0
        %s193 = scalar_select %p192, %s21, 0
        %s194 = smul.addr %s193, 8
        %s195 = scalar_lea.vmem %s1, %s194
      $region16: #{transformer_encoder_layer.6} parent=11 // pred_fallthru
        _
      // Predicated region
      $region17: #{transformer_encoder_layer.6} parent=11 // pred_check
        %p196 = pneg %p101
      $region18: #{transformer_encoder_layer.6} parent=11 // pred_check_branch
        %198 = sbr.rel (%p196) target = $region20
      $region19: #{transformer_encoder_layer.6} parent=11 // pred_region
        %p199 = scmp.lt.s32.totalorder %s21, 0
        %s200 = scalar_select %p199, %s21, 0
        %s201 = scalar_lea.vmem %s2, %s200
      $region20: #{transformer_encoder_layer.6} parent=11 // pred_fallthru
        _
      // Predicated region
      $region21: #{transformer_encoder_layer.6} parent=11 // pred_check
        %p202 = pneg %p127
      $region22: #{transformer_encoder_layer.6} parent=11 // pred_check_branch
        %204 = sbr.rel (%p202) target = $region24
      $region23: #{transformer_encoder_layer.6} parent=11 // pred_region
        %s205 = smul.u32 8, %s21
        %p206 = scmp.lt.s32.totalorder %s205, 7
        %s207 = scalar_select %p206, %s205, 7
        %s208 = smul.addr %s207, 8
        %s209 = scalar_lea.vmem %s3, %s208
        %s210 = smul.u32 8, %s21
      $region24: #{transformer_encoder_layer.6} parent=11 // pred_fallthru
        _
      // Predicated region
      $region25: #{transformer_encoder_layer.6} parent=11 // pred_check
        %p211 = pneg %p148
      $region26: #{transformer_encoder_layer.6} parent=11 // pred_check_branch
        %213 = sbr.rel (%p211) target = $region28
      $region27: #{transformer_encoder_layer.6} parent=11 // pred_region
        _
      $region28: #{transformer_encoder_layer.6} parent=11 // pred_fallthru
        _
    $region12: #{transformer_encoder_layer.6} parent=5 // pred_fallthru
      _
    %p214 = scmp.lt.s32.totalorder %s11, 2
    // Predicated region
    $region29: #{transformer_encoder_layer.6} parent=5 // pred_check
      %p215 = pneg %p214
    $region30: #{transformer_encoder_layer.6} parent=5 // pred_check_branch
      %217 = sbr.rel (%p215) target = $region32
    $region31: #{transformer_encoder_layer.6} parent=5 // pred_region
      // Predicated region
      $region33: #{transformer_encoder_layer.6} parent=31 // pred_check
        %p218 = pneg %p43
      $region34: #{transformer_encoder_layer.6} parent=31 // pred_check_branch
        %220 = sbr.rel (%p218) target = $region36
      $region35: #{transformer_encoder_layer.6} parent=31 // pred_region
        %p221 = scmp.lt.s32.totalorder %s18, 1
        %s222 = scalar_select %p221, %s18, 1
        %s223 = smul.addr %s222, 8
        %s224 = scalar_lea.vmem %s0, %s223
      $region36: #{transformer_encoder_layer.6} parent=31 // pred_fallthru
        _
    $region32: #{transformer_encoder_layer.6} parent=5 // pred_fallthru
      _
    %p225 = scmp.le.s32.totalorder 1, %s11
    %p226 = scmp.lt.s32.totalorder %s11, 3
    %p227 = pnand %p225, %p226
    %p228 = pneg %p227
    // Predicated region
    $region37: #{transformer_encoder_layer.6} parent=5 // pred_check
      _
    $region38: #{transformer_encoder_layer.6} parent=5 // pred_check_branch
      %230 = sbr.rel (%p227) target = $region40
    $region39: #{transformer_encoder_layer.6} parent=5 // pred_region
      %s231 = ssub.s32 %s11, 1
      %p232 = scmp.lt.s32.totalorder %s20, 1
      %s233 = scalar_select %p232, %s20, 1
      %s234 = smul.addr %s233, 8
      %s235 = scalar_lea.vmem %s0, %s234
      %p236 = pneg %p49
      %p237 = pneg %p46
      %p238 = scmp.lt.s32.totalorder %s21, 0
      %s239 = scalar_select %p238, %s21, 0
      %s240 = smul.addr %s239, 8
      %s241 = scalar_lea.vmem %s1, %s240
      %p242 = pneg %p75
      %p243 = pneg %p72
      %p244 = scmp.lt.s32.totalorder %s21, 0
      %s245 = scalar_select %p244, %s21, 0
      %s246 = scalar_lea.vmem %s2, %s245
      %p247 = pneg %p101
      %p248 = pneg %p98
      %s249 = smul.u32 8, %s21
      %p250 = scmp.lt.s32.totalorder %s249, 7
      %s251 = scalar_select %p250, %s249, 7
      %s252 = smul.addr %s251, 8
      %s253 = scalar_lea.vmem %s3, %s252
      %p254 = pneg %p127
      %p255 = pneg %p124
      %p256 = pneg %p148
      %p257 = pneg %p145
      %p258 = pneg %p174
      %p259 = pneg %p171
      %p260 = scmp.lt.s32.totalorder %s20, 1
      %s261 = scalar_select %p260, %s20, 1
      %s262 = smul.addr %s261, 8
      %s263 = scalar_lea.vmem %s5, %s262
      %p264 = scmp.lt.s32.totalorder %s20, 1
      %s265 = scalar_select %p264, %s20, 1
      %s266 = smul.addr %s265, 8
      %s267 = scalar_lea.vmem %s0, %s266
      %p268 = scmp.lt.s32.totalorder %s21, 0
      %s269 = scalar_select %p268, %s21, 0
      %s270 = smul.addr %s269, 8
      %s271 = scalar_lea.vmem %s1, %s270
      %p272 = scmp.lt.s32.totalorder %s21, 0
      %s273 = scalar_select %p272, %s21, 0
      %s274 = scalar_lea.vmem %s2, %s273
      %s275 = smul.u32 8, %s21
      %p276 = scmp.lt.s32.totalorder %s275, 7
      %s277 = scalar_select %p276, %s275, 7
      %s278 = smul.addr %s277, 8
      %s279 = scalar_lea.vmem %s3, %s278
      %s280 = smul.u32 8, %s21
      %p281 = scmp.lt.s32.totalorder %s20, 1
      %s282 = scalar_select %p281, %s20, 1
      %s283 = smul.addr %s282, 8
      %s284 = scalar_lea.vmem %s5, %s283
      %p285 = scmp.eq.s32.totalorder %s21, 0
      // Predicated region
      $region41: #{transformer_encoder_layer.6} parent=39 // pred_check
        %p286 = pneg %p285
      $region42: #{transformer_encoder_layer.6} parent=39 // pred_check_branch
        %288 = sbr.rel (%p286) target = $region44
      $region43: #{transformer_encoder_layer.6} parent=39 // pred_region
        %vm289 = vcmask 261120
        %290 = vst.msk [vmem:[#allocation2] sm:$0xff] %vm289, 0.0
      $region44: #{transformer_encoder_layer.6} parent=39 // pred_fallthru
        _
      %v291 = vld [vmem:[%s267] sm:$0xff]
      %v292 = vld [vmem:[%s271] sm:$0xff]
      %v293 = vld [vmem:[%s271 + $0x8] sm:$0xff]
      %v294 = vld [vmem:[%s271 + $0x10] sm:$0xff]
      %v295 = vld [vmem:[%s271 + $0x18] sm:$0xff]
      %v296 = vld [vmem:[%s274] sm:$0x1]
      %v298 = vlaneseq
      %v299 = vshrl.u32 %v298, 7
      %v300 = vsub.s32 0, %v299
      %v301 = vrot.slane %v296, %v300
      %vm303 = vcmask 261120
      %v305 = vsel %vm303, %v291, 0
      %307 = vmatprep.subr.mxu0 0.0
      %308 = vmatpush1.msra.mxu0 %v292
      %309 = vmatprep.subr.mxu0 0.0
      %310 = vmatpush1.msra.mxu0 %v293
      %311 = vmatprep.subr.mxu0 0.0
      %312 = vmatpush1.msra.mxu0 %v294
      %313 = vmatprep.subr.mxu0 0.0
      %314 = vmatpush1.msra.mxu0 %v295
      %315 = vmatprep.subr.mxu0 0.0
      %316 = vmatpush1.msra.mxu0 0.0
      %317 = vmatprep.subr.mxu0 0.0
      %318 = vmatpush1.msra.mxu0 0.0
      %319 = vmatprep.subr.mxu0 0.0
      %320 = vmatpush1.msra.mxu0 0.0
      %321 = vmatprep.subr.mxu0 0.0
      %322 = vmatpush1.msra.mxu0 0.0
      %323 = vmatprep.subr.mxu0 0.0
      %324 = vmatpush1.msra.mxu0 0.0
      %325 = vmatprep.subr.mxu0 0.0
      %326 = vmatpush1.msra.mxu0 0.0
      %327 = vmatprep.subr.mxu0 0.0
      %328 = vmatpush1.msra.mxu0 0.0
      %329 = vmatprep.subr.mxu0 0.0
      %330 = vmatpush1.msra.mxu0 0.0
      %331 = vmatprep.subr.mxu0 0.0
      %332 = vmatpush1.msra.mxu0 0.0
      %333 = vmatprep.subr.mxu0 0.0
      %334 = vmatpush1.msra.mxu0 0.0
      %335 = vmatprep.subr.mxu0 0.0
      %336 = vmatpush1.msra.mxu0 0.0
      %337 = vmatprep.subr.mxu0 0.0
      %338 = vmatpush1.msra.mxu0 0.0
      %339 = vmatprep.subr.mxu0 0.0
      %340 = vmatpush1.msra.mxu0 0.0
      %341 = vmatprep.subr.mxu0 0.0
      %342 = vmatpush1.msra.mxu0 0.0
      %343 = vmatprep.subr.mxu0 0.0
      %344 = vmatpush1.msra.mxu0 0.0
      %345 = vmatprep.subr.mxu0 0.0
      %346 = vmatpush1.msra.mxu0 0.0
      %347 = vmatprep.subr.mxu0 0.0
      %348 = vmatpush1.msra.mxu0 0.0
      %349 = vmatprep.subr.mxu0 0.0
      %350 = vmatpush1.msra.mxu0 0.0
      %351 = vmatprep.subr.mxu0 0.0
      %352 = vmatpush1.msra.mxu0 0.0
      %353 = vmatprep.subr.mxu0 0.0
      %354 = vmatpush1.msra.mxu0 0.0
      %355 = vmatprep.subr.mxu0 0.0
      %356 = vmatpush1.msra.mxu0 0.0
      %357 = vmatprep.subr.mxu0 0.0
      %358 = vmatpush1.msra.mxu0 0.0
      %359 = vmatprep.subr.mxu0 0.0
      %360 = vmatpush1.msra.mxu0 0.0
      %361 = vmatprep.subr.mxu0 0.0
      %362 = vmatpush1.msra.mxu0 0.0
      %363 = vmatprep.subr.mxu0 0.0
      %364 = vmatpush1.msra.mxu0 0.0
      %365 = vmatprep.subr.mxu0 0.0
      %366 = vmatpush1.msra.mxu0 0.0
      %367 = vmatprep.subr.mxu0 0.0
      %368 = vmatpush1.msra.mxu0 0.0
      %369 = vmatprep.subr.mxu0 0.0
      %370 = vmatpush1.msra.mxu0 0.0
      %371 = vmatprep.mubr.f32.mxu0 0.0
      %372 = vmatmul.mubr.f32.gmra.mrb[0].mxu0 %v305
      %v373 = vpop.f32.mrb[0].mxu0
      %v374 = vadd.f32 %v301, %v373
      %v375 = vpop.f32.mrb[0].mxu0
      %376 = vdwg.mxu0
      %v377 = vmul.f32 %v374, %v374
      %v378 = vmul.f32 %v374, 0.5
      %v379 = vmul.f32 %v377, 0.035677407
      %v380 = vadd.f32 %v379, 0.7978846
      %v381 = vmul.f32 %v374, %v380
      %v382 = vtanh.pop %v381
      %v383 = vadd.f32 %v382, 1.0
      %v384 = vmul.f32 %v378, %v383
      %v385 = vld [vmem:[#allocation2] sm:$0xff]
      %v386 = vld [vmem:[%s279] sm:$0xff]
      %v387 = vld [vmem:[%s279 + $0x8] sm:$0xff]
      %v388 = vld [vmem:[%s279 + $0x10] sm:$0xff]
      %v389 = vld [vmem:[%s279 + $0x18] sm:$0xff]
      %v390 = vld [vmem:[%s279 + $0x20] sm:$0xff]
      %v391 = vld [vmem:[%s279 + $0x28] sm:$0xff]
      %v392 = vld [vmem:[%s279 + $0x30] sm:$0xff]
      %v393 = vld [vmem:[%s279 + $0x38] sm:$0xff]
      %vm394 = vcmask 523264
      %v396 = vsel %vm394, %v384, 0
      %398 = vmatprep.subr.mxu0 0.0
      %399 = vmatpush1.msra.mxu0 %v386
      %400 = vmatprep.subr.mxu0 0.0
      %401 = vmatpush1.msra.mxu0 %v387
      %402 = vmatprep.subr.mxu0 0.0
      %403 = vmatpush1.msra.mxu0 %v388
      %404 = vmatprep.subr.mxu0 0.0
      %405 = vmatpush1.msra.mxu0 %v389
      %406 = vmatprep.subr.mxu0 0.0
      %407 = vmatpush1.msra.mxu0 %v390
      %408 = vmatprep.subr.mxu0 0.0
      %409 = vmatpush1.msra.mxu0 %v391
      %410 = vmatprep.subr.mxu0 0.0
      %411 = vmatpush1.msra.mxu0 %v392
      %412 = vmatprep.subr.mxu0 0.0
      %413 = vmatpush1.msra.mxu0 %v393
      %414 = vmatprep.subr.mxu0 0.0
      %415 = vmatpush1.msra.mxu0 0.0
      %416 = vmatprep.subr.mxu0 0.0
      %417 = vmatpush1.msra.mxu0 0.0
      %418 = vmatprep.subr.mxu0 0.0
      %419 = vmatpush1.msra.mxu0 0.0
      %420 = vmatprep.subr.mxu0 0.0
      %421 = vmatpush1.msra.mxu0 0.0
      %422 = vmatprep.subr.mxu0 0.0
      %423 = vmatpush1.msra.mxu0 0.0
      %424 = vmatprep.subr.mxu0 0.0
      %425 = vmatpush1.msra.mxu0 0.0
      %426 = vmatprep.subr.mxu0 0.0
      %427 = vmatpush1.msra.mxu0 0.0
      %428 = vmatprep.subr.mxu0 0.0
      %429 = vmatpush1.msra.mxu0 0.0
      %430 = vmatprep.subr.mxu0 0.0
      %431 = vmatpush1.msra.mxu0 0.0
      %432 = vmatprep.subr.mxu0 0.0
      %433 = vmatpush1.msra.mxu0 0.0
      %434 = vmatprep.subr.mxu0 0.0
      %435 = vmatpush1.msra.mxu0 0.0
      %436 = vmatprep.subr.mxu0 0.0
      %437 = vmatpush1.msra.mxu0 0.0
      %438 = vmatprep.subr.mxu0 0.0
      %439 = vmatpush1.msra.mxu0 0.0
      %440 = vmatprep.subr.mxu0 0.0
      %441 = vmatpush1.msra.mxu0 0.0
      %442 = vmatprep.subr.mxu0 0.0
      %443 = vmatpush1.msra.mxu0 0.0
      %444 = vmatprep.subr.mxu0 0.0
      %445 = vmatpush1.msra.mxu0 0.0
      %446 = vmatprep.subr.mxu0 0.0
      %447 = vmatpush1.msra.mxu0 0.0
      %448 = vmatprep.subr.mxu0 0.0
      %449 = vmatpush1.msra.mxu0 0.0
      %450 = vmatprep.subr.mxu0 0.0
      %451 = vmatpush1.msra.mxu0 0.0
      %452 = vmatprep.subr.mxu0 0.0
      %453 = vmatpush1.msra.mxu0 0.0
      %454 = vmatprep.subr.mxu0 0.0
      %455 = vmatpush1.msra.mxu0 0.0
      %456 = vmatprep.subr.mxu0 0.0
      %457 = vmatpush1.msra.mxu0 0.0
      %458 = vmatprep.subr.mxu0 0.0
      %459 = vmatpush1.msra.mxu0 0.0
      %460 = vmatprep.subr.mxu0 0.0
      %461 = vmatpush1.msra.mxu0 0.0
      %462 = vmatprep.mubr.f32.mxu0 0.0
      %463 = vmatmul.mubr.f32.gmra.mrb[0].mxu0 %v396
      %v464 = vpop.f32.mrb[0].mxu0
      %v465 = vadd.f32 0.0, %v464
      %v466 = vpop.f32.mrb[0].mxu0
      %467 = vdwg.mxu0
      %v468 = vadd.f32 %v385, %v465
      %469 = vst.msk [vmem:[#allocation2] sm:$0xff] %vm303, %v468
      // Predicated region
      $region45: #{transformer_encoder_layer.6} parent=39 // pred_check
        %p470 = pneg %p285
      $region46: #{transformer_encoder_layer.6} parent=39 // pred_check_branch
        %472 = sbr.rel (%p470) target = $region48
      $region47: #{transformer_encoder_layer.6} parent=39 // pred_region
        %v473 = vld [vmem:[#allocation2] sm:$0xff]
        %v474 = vld [vmem:[%s4] sm:$0x1]
        %v476 = vlaneseq
        %v477 = vshrl.u32 %v476, 7
        %v478 = vsub.s32 0, %v477
        %v479 = vrot.slane %v474, %v478
        %v481 = vadd.f32 %v473, %v479
        %482 = vst.msk [vmem:[%s284] sm:$0xff] %vm303, %v481
      $region48: #{transformer_encoder_layer.6} parent=39 // pred_fallthru
        _
      %p483 = scmp.lt.s32.totalorder %s20, 1
      %s484 = scalar_select %p483, %s20, 1
      %s485 = smul.addr %s484, 8
      %s486 = scalar_lea.vmem %s5, %s485
      // Predicated region
      $region49: #{transformer_encoder_layer.6} parent=39 // pred_check
        %p487 = pneg %p171
      $region50: #{transformer_encoder_layer.6} parent=39 // pred_check_branch
        %489 = sbr.rel (%p487) target = $region52
      $region51: #{transformer_encoder_layer.6} parent=39 // pred_region
        _
      $region52: #{transformer_encoder_layer.6} parent=39 // pred_fallthru
        _
    $region40: #{transformer_encoder_layer.6} parent=5 // pred_fallthru
      _
    %p490 = scmp.le.s32.totalorder 2, %s11
    // Predicated region
    $region53: #{transformer_encoder_layer.6} parent=5 // pred_check
      %p491 = pneg %p490
    $region54: #{transformer_encoder_layer.6} parent=5 // pred_check_branch
      %493 = sbr.rel (%p491) target = $region56
    $region55: #{transformer_encoder_layer.6} parent=5 // pred_region
      %s494 = ssub.s32 %s11, 2
      // Predicated region
      $region57: #{transformer_encoder_layer.6} parent=55 // pred_check
        %p495 = pneg %p177
      $region58: #{transformer_encoder_layer.6} parent=55 // pred_check_branch
        %497 = sbr.rel (%p495) target = $region60
      $region59: #{transformer_encoder_layer.6} parent=55 // pred_region
        %p498 = scmp.lt.s32.totalorder %s22, 1
        %s499 = scalar_select %p498, %s22, 1
        %s500 = smul.addr %s499, 8
        %s501 = scalar_lea.vmem %s5, %s500
      $region60: #{transformer_encoder_layer.6} parent=55 // pred_fallthru
        _
    $region56: #{transformer_encoder_layer.6} parent=5 // pred_fallthru
      _
  $region6: #{transformer_encoder_layer.6} parent=0 // loop_footer
    %s15 = sadd.s32 1, %s11
  $region7: #{transformer_encoder_layer.6} parent=0 // loop_footer_branch
    %10 = sbr.rel target = $region3
  $region8: #{transformer_encoder_layer.6} parent=0 // loop_exit
    _

// kernel: transformer_encoder_layer.4
$region0: #{transformer_encoder_layer.4}
  #allocation0 [shape = 'u32[]', space=smem, size = 0x4, offset = 0x4, fixed_abs, tag = 'smem constant byte address 0x4 - core index']
  #allocation1 [shape = 'u32[144,128]{1,0:T(1,128)}', space=vmem, size = 0x12000, scoped, tag = 'internal scratch']
  %s0 = inlined_call_operand.vmem [shape: f32[2,8,32], index: 0, kind: input, shape index: {}]
  %s1 = inlined_call_operand.vmem [shape: f32[4,32,8], index: 1, kind: input, shape index: {}]
  %s2 = inlined_call_operand.vmem [shape: f32[4,1,8], index: 2, kind: input, shape index: {}]
  %s3 = inlined_call_operand.vmem [shape: f32[4,32,8], index: 3, kind: input, shape index: {}]
  %s4 = inlined_call_operand.vmem [shape: f32[4,1,8], index: 4, kind: input, shape index: {}]
  %s5 = inlined_call_operand.vmem [shape: f32[4,32,8], index: 5, kind: input, shape index: {}]
  %s6 = inlined_call_operand.vmem [shape: f32[4,1,8], index: 6, kind: input, shape index: {}]
  %s7 = inlined_call_operand.vmem [shape: f32[4,8,32], index: 7, kind: input, shape index: {}]
  %s8 = inlined_call_operand.vmem [shape: f32[1,32], index: 8, kind: input, shape index: {}]
  %s9 = inlined_call_operand.vmem [shape: f32[2,8,32], index: 9, kind: output, shape index: {}]
  %s10 = sld [smem:[#allocation0]]
  $region69: #{transformer_encoder_layer.4} parent=0
    _
  %s12 = ssub.s32 1, %s10
  %s13 = scalar_select 0, %s12, %s10
  loop: start=0, step=1, limit=4
  $region2: #{transformer_encoder_layer.4} parent=0 // loop_pre_header
    _
  $region3: #{transformer_encoder_layer.4} parent=0 // loop_header
    %s15 = sphi 0, %s19
    %p16 = scmp.ge.s32.totalorder %s15, 4
    %s25 = sphi 0, %s27
    %s28 = sphi 0, %s25
    %s29 = sphi 0, %s28
    %s45 = sphi 0, %s29
    %s49 = sphi 0, %s49
    %s51 = sphi 0, %s49
    %s52 = sphi 0, %s51
    %s66 = sphi 0, %s52
    %s70 = sphi 0, %s70
    %s72 = sphi 0, %s70
    %s73 = sphi 0, %s72
    %s87 = sphi 0, %s73
    %s91 = sphi 0, %s91
    %s93 = sphi 0, %s91
    %s94 = sphi 0, %s93
    %s108 = sphi 0, %s94
    %s112 = sphi 0, %s112
    %s114 = sphi 0, %s112
    %s115 = sphi 0, %s114
    %s129 = sphi 0, %s115
    %s133 = sphi 0, %s133
    %s135 = sphi 0, %s133
    %s136 = sphi 0, %s135
    %s150 = sphi 0, %s136
    %s154 = sphi 0, %s154
    %s156 = sphi 0, %s154
    %s157 = sphi 0, %s156
    %s171 = sphi 0, %s157
    %s175 = sphi 0, %s175
    %s177 = sphi 0, %s175
    %s178 = sphi 0, %s177
    %s192 = sphi 0, %s178
    %s196 = sphi 0, %s196
    %s198 = sphi 0, %s196
    %s199 = sphi 0, %s198
    %s213 = sphi 0, %s199
    %s219 = sphi 0, %s221
    %s222 = sphi 0, %s219
    %s223 = sphi 0, %s222
    %s239 = sphi 0, %s223
  $region4: #{transformer_encoder_layer.4} parent=0 // loop_header_branch
    %18 = sbr.rel (%p16) target = $region8
  $region5: #{transformer_encoder_layer.4} parent=0 // loop_body
    %s20 = ssub.s32 %s15, 1
    %s21 = ssub.s32 %s15, 2
    %s22 = sadd.s32 %s15, 1
    %s23 = ssub.s32 %s15, %s22
    %p24 = scmp.eq.s32.totalorder %s23, 0
    %s26 = sadd.s32 %s25, 1
    %s27 = scalar_select %p24, %s25, %s26
    %p30 = pneg %p24
    %p31 = scmp.eq.s32.totalorder %s15, 1
    %p32 = por %p30, %p31
    %p33 = scmp.ne.s32.totalorder %s25, %s28
    %p34 = scmp.eq.s32.totalorder %s15, 0
    %p35 = por %p33, %p34
    %p36 = scmp.ne.s32.totalorder %s25, %s28
    %p37 = scmp.eq.s32.totalorder %s20, 1
    %p38 = por %p36, %p37
    %p39 = scmp.ne.s32.totalorder %s28, %s29
    %p40 = scmp.eq.s32.totalorder %s20, 0
    %p41 = por %p39, %p40
    %p42 = scmp.ne.s32.totalorder %s28, %s29
    %p43 = scmp.eq.s32.totalorder %s21, 1
    %p44 = por %p42, %p43
    %p46 = scmp.ne.s32.totalorder %s29, %s45
    %p47 = scmp.eq.s32.totalorder %s21, 0
    %p48 = por %p46, %p47
    %s50 = sadd.s32 %s49, 1
    %p53 = scmp.eq.s32.totalorder %s15, 1
    %p54 = scmp.ne.s32.totalorder %s49, %s51
    %p55 = scmp.eq.s32.totalorder %s15, 0
    %p56 = por %p54, %p55
    %p57 = scmp.ne.s32.totalorder %s49, %s51
    %p58 = scmp.eq.s32.totalorder %s20, 1
    %p59 = por %p57, %p58
    %p60 = scmp.ne.s32.totalorder %s51, %s52
    %p61 = scmp.eq.s32.totalorder %s20, 0
    %p62 = por %p60, %p61
    %p63 = scmp.ne.s32.totalorder %s51, %s52
    %p64 = scmp.eq.s32.totalorder %s21, 1
    %p65 = por %p63, %p64
    %p67 = scmp.ne.s32.totalorder %s52, %s66
    %p68 = scmp.eq.s32.totalorder %s21, 0
    %p69 = por %p67, %p68
    %s71 = sadd.s32 %s70, 1
    %p74 = scmp.eq.s32.totalorder %s15, 1
    %p75 = scmp.ne.s32.totalorder %s70, %s72
    %p76 = scmp.eq.s32.totalorder %s15, 0
    %p77 = por %p75, %p76
    %p78 = scmp.ne.s32.totalorder %s70, %s72
    %p79 = scmp.eq.s32.totalorder %s20, 1
    %p80 = por %p78, %p79
    %p81 = scmp.ne.s32.totalorder %s72, %s73
    %p82 = scmp.eq.s32.totalorder %s20, 0
    %p83 = por %p81, %p82
    %p84 = scmp.ne.s32.totalorder %s72, %s73
    %p85 = scmp.eq.s32.totalorder %s21, 1
    %p86 = por %p84, %p85
    %p88 = scmp.ne.s32.totalorder %s73, %s87
    %p89 = scmp.eq.s32.totalorder %s21, 0
    %p90 = por %p88, %p89
    %s92 = sadd.s32 %s91, 1
    %p95 = scmp.eq.s32.totalorder %s15, 1
    %p96 = scmp.ne.s32.totalorder %s91, %s93
    %p97 = scmp.eq.s32.totalorder %s15, 0
    %p98 = por %p96, %p97
    %p99 = scmp.ne.s32.totalorder %s91, %s93
    %p100 = scmp.eq.s32.totalorder %s20, 1
    %p101 = por %p99, %p100
    %p102 = scmp.ne.s32.totalorder %s93, %s94
    %p103 = scmp.eq.s32.totalorder %s20, 0
    %p104 = por %p102, %p103
    %p105 = scmp.ne.s32.totalorder %s93, %s94
    %p106 = scmp.eq.s32.totalorder %s21, 1
    %p107 = por %p105, %p106
    %p109 = scmp.ne.s32.totalorder %s94, %s108
    %p110 = scmp.eq.s32.totalorder %s21, 0
    %p111 = por %p109, %p110
    %s113 = sadd.s32 %s112, 1
    %p116 = scmp.eq.s32.totalorder %s15, 1
    %p117 = scmp.ne.s32.totalorder %s112, %s114
    %p118 = scmp.eq.s32.totalorder %s15, 0
    %p119 = por %p117, %p118
    %p120 = scmp.ne.s32.totalorder %s112, %s114
    %p121 = scmp.eq.s32.totalorder %s20, 1
    %p122 = por %p120, %p121
    %p123 = scmp.ne.s32.totalorder %s114, %s115
    %p124 = scmp.eq.s32.totalorder %s20, 0
    %p125 = por %p123, %p124
    %p126 = scmp.ne.s32.totalorder %s114, %s115
    %p127 = scmp.eq.s32.totalorder %s21, 1
    %p128 = por %p126, %p127
    %p130 = scmp.ne.s32.totalorder %s115, %s129
    %p131 = scmp.eq.s32.totalorder %s21, 0
    %p132 = por %p130, %p131
    %s134 = sadd.s32 %s133, 1
    %p137 = scmp.eq.s32.totalorder %s15, 1
    %p138 = scmp.ne.s32.totalorder %s133, %s135
    %p139 = scmp.eq.s32.totalorder %s15, 0
    %p140 = por %p138, %p139
    %p141 = scmp.ne.s32.totalorder %s133, %s135
    %p142 = scmp.eq.s32.totalorder %s20, 1
    %p143 = por %p141, %p142
    %p144 = scmp.ne.s32.totalorder %s135, %s136
    %p145 = scmp.eq.s32.totalorder %s20, 0
    %p146 = por %p144, %p145
    %p147 = scmp.ne.s32.totalorder %s135, %s136
    %p148 = scmp.eq.s32.totalorder %s21, 1
    %p149 = por %p147, %p148
    %p151 = scmp.ne.s32.totalorder %s136, %s150
    %p152 = scmp.eq.s32.totalorder %s21, 0
    %p153 = por %p151, %p152
    %s155 = sadd.s32 %s154, 1
    %p158 = scmp.eq.s32.totalorder %s15, 1
    %p159 = scmp.ne.s32.totalorder %s154, %s156
    %p160 = scmp.eq.s32.totalorder %s15, 0
    %p161 = por %p159, %p160
    %p162 = scmp.ne.s32.totalorder %s154, %s156
    %p163 = scmp.eq.s32.totalorder %s20, 1
    %p164 = por %p162, %p163
    %p165 = scmp.ne.s32.totalorder %s156, %s157
    %p166 = scmp.eq.s32.totalorder %s20, 0
    %p167 = por %p165, %p166
    %p168 = scmp.ne.s32.totalorder %s156, %s157
    %p169 = scmp.eq.s32.totalorder %s21, 1
    %p170 = por %p168, %p169
    %p172 = scmp.ne.s32.totalorder %s157, %s171
    %p173 = scmp.eq.s32.totalorder %s21, 0
    %p174 = por %p172, %p173
    %s176 = sadd.s32 %s175, 1
    %p179 = scmp.eq.s32.totalorder %s15, 1
    %p180 = scmp.ne.s32.totalorder %s175, %s177
    %p181 = scmp.eq.s32.totalorder %s15, 0
    %p182 = por %p180, %p181
    %p183 = scmp.ne.s32.totalorder %s175, %s177
    %p184 = scmp.eq.s32.totalorder %s20, 1
    %p185 = por %p183, %p184
    %p186 = scmp.ne.s32.totalorder %s177, %s178
    %p187 = scmp.eq.s32.totalorder %s20, 0
    %p188 = por %p186, %p187
    %p189 = scmp.ne.s32.totalorder %s177, %s178
    %p190 = scmp.eq.s32.totalorder %s21, 1
    %p191 = por %p189, %p190
    %p193 = scmp.ne.s32.totalorder %s178, %s192
    %p194 = scmp.eq.s32.totalorder %s21, 0
    %p195 = por %p193, %p194
    %s197 = sadd.s32 %s196, 1
    %p200 = scmp.eq.s32.totalorder %s15, 1
    %p201 = scmp.ne.s32.totalorder %s196, %s198
    %p202 = scmp.eq.s32.totalorder %s15, 0
    %p203 = por %p201, %p202
    %p204 = scmp.ne.s32.totalorder %s196, %s198
    %p205 = scmp.eq.s32.totalorder %s20, 1
    %p206 = por %p204, %p205
    %p207 = scmp.ne.s32.totalorder %s198, %s199
    %p208 = scmp.eq.s32.totalorder %s20, 0
    %p209 = por %p207, %p208
    %p210 = scmp.ne.s32.totalorder %s198, %s199
    %p211 = scmp.eq.s32.totalorder %s21, 1
    %p212 = por %p210, %p211
    %p214 = scmp.ne.s32.totalorder %s199, %s213
    %p215 = scmp.eq.s32.totalorder %s21, 0
    %p216 = por %p214, %p215
    %s217 = ssub.s32 %s15, %s22
    %p218 = scmp.eq.s32.totalorder %s217, 0
    %s220 = sadd.s32 %s219, 1
    %s221 = scalar_select %p218, %s219, %s220
    %p224 = pneg %p218
    %p225 = scmp.eq.s32.totalorder %s15, 1
    %p226 = por %p224, %p225
    %p227 = scmp.ne.s32.totalorder %s219, %s222
    %p228 = scmp.eq.s32.totalorder %s15, 0
    %p229 = por %p227, %p228
    %p230 = scmp.ne.s32.totalorder %s219, %s222
    %p231 = scmp.eq.s32.totalorder %s20, 1
    %p232 = por %p230, %p231
    %p233 = scmp.ne.s32.totalorder %s222, %s223
    %p234 = scmp.eq.s32.totalorder %s20, 0
    %p235 = por %p233, %p234
    %p236 = scmp.ne.s32.totalorder %s222, %s223
    %p237 = scmp.eq.s32.totalorder %s21, 1
    %p238 = por %p236, %p237
    %p240 = scmp.ne.s32.totalorder %s223, %s239
    %p241 = scmp.eq.s32.totalorder %s21, 0
    %p242 = por %p240, %p241
    %p243 = scmp.le.s32.totalorder 1, %s15
    %p244 = scmp.lt.s32.totalorder %s15, 3
    %p245 = pnand %p243, %p244
    %p246 = pneg %p245
    // Predicated region
    $region9: #{transformer_encoder_layer.4} parent=5 // pred_check
      _
    $region10: #{transformer_encoder_layer.4} parent=5 // pred_check_branch
      %248 = sbr.rel (%p245) target = $region12
    $region11: #{transformer_encoder_layer.4} parent=5 // pred_region
      %s249 = ssub.s32 %s15, 1
      // Predicated region
      $region13: #{transformer_encoder_layer.4} parent=11 // pred_check
        %p250 = pneg %p62
      $region14: #{transformer_encoder_layer.4} parent=11 // pred_check_branch
        %252 = sbr.rel (%p250) target = $region16
      $region15: #{transformer_encoder_layer.4} parent=11 // pred_region
        _
      $region16: #{transformer_encoder_layer.4} parent=11 // pred_fallthru
        _
      // Predicated region
      $region17: #{transformer_encoder_layer.4} parent=11 // pred_check
        %p253 = pneg %p83
      $region18: #{transformer_encoder_layer.4} parent=11 // pred_check_branch
        %255 = sbr.rel (%p253) target = $region20
      $region19: #{transformer_encoder_layer.4} parent=11 // pred_region
        _
      $region20: #{transformer_encoder_layer.4} parent=11 // pred_fallthru
        _
      // Predicated region
      $region21: #{transformer_encoder_layer.4} parent=11 // pred_check
        %p256 = pneg %p104
      $region22: #{transformer_encoder_layer.4} parent=11 // pred_check_branch
        %258 = sbr.rel (%p256) target = $region24
      $region23: #{transformer_encoder_layer.4} parent=11 // pred_region
        _
      $region24: #{transformer_encoder_layer.4} parent=11 // pred_fallthru
        _
      // Predicated region
      $region25: #{transformer_encoder_layer.4} parent=11 // pred_check
        %p259 = pneg %p125
      $region26: #{transformer_encoder_layer.4} parent=11 // pred_check_branch
        %261 = sbr.rel (%p259) target = $region28
      $region27: #{transformer_encoder_layer.4} parent=11 // pred_region
        _
      $region28: #{transformer_encoder_layer.4} parent=11 // pred_fallthru
        _
      // Predicated region
      $region29: #{transformer_encoder_layer.4} parent=11 // pred_check
        %p262 = pneg %p146
      $region30: #{transformer_encoder_layer.4} parent=11 // pred_check_branch
        %264 = sbr.rel (%p262) target = $region32
      $region31: #{transformer_encoder_layer.4} parent=11 // pred_region
        _
      $region32: #{transformer_encoder_layer.4} parent=11 // pred_fallthru
        _
      // Predicated region
      $region33: #{transformer_encoder_layer.4} parent=11 // pred_check
        %p265 = pneg %p167
      $region34: #{transformer_encoder_layer.4} parent=11 // pred_check_branch
        %267 = sbr.rel (%p265) target = $region36
      $region35: #{transformer_encoder_layer.4} parent=11 // pred_region
        _
      $region36: #{transformer_encoder_layer.4} parent=11 // pred_fallthru
        _
      // Predicated region
      $region37: #{transformer_encoder_layer.4} parent=11 // pred_check
        %p268 = pneg %p188
      $region38: #{transformer_encoder_layer.4} parent=11 // pred_check_branch
        %270 = sbr.rel (%p268) target = $region40
      $region39: #{transformer_encoder_layer.4} parent=11 // pred_region
        _
      $region40: #{transformer_encoder_layer.4} parent=11 // pred_fallthru
        _
      // Predicated region
      $region41: #{transformer_encoder_layer.4} parent=11 // pred_check
        %p271 = pneg %p209
      $region42: #{transformer_encoder_layer.4} parent=11 // pred_check_branch
        %273 = sbr.rel (%p271) target = $region44
      $region43: #{transformer_encoder_layer.4} parent=11 // pred_region
        _
      $region44: #{transformer_encoder_layer.4} parent=11 // pred_fallthru
        _
    $region12: #{transformer_encoder_layer.4} parent=5 // pred_fallthru
      _
    %p274 = scmp.lt.s32.totalorder %s15, 2
    // Predicated region
    $region45: #{transformer_encoder_layer.4} parent=5 // pred_check
      %p275 = pneg %p274
    $region46: #{transformer_encoder_layer.4} parent=5 // pred_check_branch
      %277 = sbr.rel (%p275) target = $region48
    $region47: #{transformer_encoder_layer.4} parent=5 // pred_region
      // Predicated region
      $region49: #{transformer_encoder_layer.4} parent=47 // pred_check
        %p278 = pneg %p35
      $region50: #{transformer_encoder_layer.4} parent=47 // pred_check_branch
        %280 = sbr.rel (%p278) target = $region52
      $region51: #{transformer_encoder_layer.4} parent=47 // pred_region
        %p281 = scmp.lt.s32.totalorder %s15, 1
        %s282 = scalar_select %p281, %s15, 1
        %s283 = smul.addr %s282, 8
        %s284 = scalar_lea.vmem %s0, %s283
      $region52: #{transformer_encoder_layer.4} parent=47 // pred_fallthru
        _
    $region48: #{transformer_encoder_layer.4} parent=5 // pred_fallthru
      _
    %p285 = scmp.le.s32.totalorder 1, %s15
    %p286 = scmp.lt.s32.totalorder %s15, 3
    %p287 = pnand %p285, %p286
    %p288 = pneg %p287
    // Predicated region
    $region53: #{transformer_encoder_layer.4} parent=5 // pred_check
      _
    $region54: #{transformer_encoder_layer.4} parent=5 // pred_check_branch
      %290 = sbr.rel (%p287) target = $region56
    $region55: #{transformer_encoder_layer.4} parent=5 // pred_region
      %s291 = ssub.s32 %s15, 1
      %p292 = scmp.lt.s32.totalorder %s20, 1
      %s293 = scalar_select %p292, %s20, 1
      %s294 = smul.addr %s293, 8
      %s295 = scalar_lea.vmem %s0, %s294
      %p296 = pneg %p41
      %p297 = pneg %p38
      %p298 = pneg %p62
      %p299 = pneg %p59
      %p300 = pneg %p83
      %p301 = pneg %p80
      %p302 = pneg %p104
      %p303 = pneg %p101
      %p304 = pneg %p125
      %p305 = pneg %p122
      %p306 = pneg %p146
      %p307 = pneg %p143
      %p308 = pneg %p167
      %p309 = pneg %p164
      %p310 = pneg %p188
      %p311 = pneg %p185
      %p312 = pneg %p209
      %p313 = pneg %p206
      %p314 = pneg %p235
      %p315 = pneg %p232
      %p316 = scmp.lt.s32.totalorder %s20, 1
      %s317 = scalar_select %p316, %s20, 1
      %s318 = smul.addr %s317, 8
      %s319 = scalar_lea.vmem %s9, %s318
      %p320 = scmp.lt.s32.totalorder %s20, 1
      %s321 = scalar_select %p320, %s20, 1
      %s322 = smul.addr %s321, 8
      %s323 = scalar_lea.vmem %s0, %s322
      %p324 = scmp.lt.s32.totalorder %s20, 1
      %s325 = scalar_select %p324, %s20, 1
      %s326 = smul.addr %s325, 8
      %s327 = scalar_lea.vmem %s9, %s326
      %v328 = vld [vmem:[%s323] sm:$0xff]
      %v329 = vld [vmem:[%s1] sm:$0xff]
      %v330 = vld [vmem:[%s1 + $0x8] sm:$0xff]
      %v331 = vld [vmem:[%s1 + $0x10] sm:$0xff]
      %v332 = vld [vmem:[%s1 + $0x18] sm:$0xff]
      %v333 = vld [vmem:[%s2] sm:$0x1]
      %v335 = vlaneseq
      %v336 = vshrl.u32 %v335, 7
      %v337 = vsub.s32 0, %v336
      %v338 = vrot.slane %v333, %v337
      %vm340 = vcmask 261120
      %v342 = vsel %vm340, %v328, 0
      %344 = vmatprep.subr.mxu0 0.0
      %345 = vmatpush1.msra.mxu0 %v329
      %346 = vmatprep.subr.mxu0 0.0
      %347 = vmatpush1.msra.mxu0 %v330
      %348 = vmatprep.subr.mxu0 0.0
      %349 = vmatpush1.msra.mxu0 %v331
      %350 = vmatprep.subr.mxu0 0.0
      %351 = vmatpush1.msra.mxu0 %v332
      %352 = vmatprep.subr.mxu0 0.0
      %353 = vmatpush1.msra.mxu0 0.0
      %354 = vmatprep.subr.mxu0 0.0
      %355 = vmatpush1.msra.mxu0 0.0
      %356 = vmatprep.subr.mxu0 0.0
      %357 = vmatpush1.msra.mxu0 0.0
      %358 = vmatprep.subr.mxu0 0.0
      %359 = vmatpush1.msra.mxu0 0.0
      %360 = vmatprep.subr.mxu0 0.0
      %361 = vmatpush1.msra.mxu0 0.0
      %362 = vmatprep.subr.mxu0 0.0
      %363 = vmatpush1.msra.mxu0 0.0
      %364 = vmatprep.subr.mxu0 0.0
      %365 = vmatpush1.msra.mxu0 0.0
      %366 = vmatprep.subr.mxu0 0.0
      %367 = vmatpush1.msra.mxu0 0.0
      %368 = vmatprep.subr.mxu0 0.0
      %369 = vmatpush1.msra.mxu0 0.0
      %370 = vmatprep.subr.mxu0 0.0
      %371 = vmatpush1.msra.mxu0 0.0
      %372 = vmatprep.subr.mxu0 0.0
      %373 = vmatpush1.msra.mxu0 0.0
      %374 = vmatprep.subr.mxu0 0.0
      %375 = vmatpush1.msra.mxu0 0.0
      %376 = vmatprep.subr.mxu0 0.0
      %377 = vmatpush1.msra.mxu0 0.0
      %378 = vmatprep.subr.mxu0 0.0
      %379 = vmatpush1.msra.mxu0 0.0
      %380 = vmatprep.subr.mxu0 0.0
      %381 = vmatpush1.msra.mxu0 0.0
      %382 = vmatprep.subr.mxu0 0.0
      %383 = vmatpush1.msra.mxu0 0.0
      %384 = vmatprep.subr.mxu0 0.0
      %385 = vmatpush1.msra.mxu0 0.0
      %386 = vmatprep.subr.mxu0 0.0
      %387 = vmatpush1.msra.mxu0 0.0
      %388 = vmatprep.subr.mxu0 0.0
      %389 = vmatpush1.msra.mxu0 0.0
      %390 = vmatprep.subr.mxu0 0.0
      %391 = vmatpush1.msra.mxu0 0.0
      %392 = vmatprep.subr.mxu0 0.0
      %393 = vmatpush1.msra.mxu0 0.0
      %394 = vmatprep.subr.mxu0 0.0
      %395 = vmatpush1.msra.mxu0 0.0
      %396 = vmatprep.subr.mxu0 0.0
      %397 = vmatpush1.msra.mxu0 0.0
      %398 = vmatprep.subr.mxu0 0.0
      %399 = vmatpush1.msra.mxu0 0.0
      %400 = vmatprep.subr.mxu0 0.0
      %401 = vmatpush1.msra.mxu0 0.0
      %402 = vmatprep.subr.mxu0 0.0
      %403 = vmatpush1.msra.mxu0 0.0
      %404 = vmatprep.subr.mxu0 0.0
      %405 = vmatpush1.msra.mxu0 0.0
      %406 = vmatprep.subr.mxu0 0.0
      %407 = vmatpush1.msra.mxu0 0.0
      %408 = vmatprep.mubr.f32.mxu0 0.0
      %409 = vmatmul.mubr.f32.gmra.mrb[0].mxu0 %v342
      %v410 = vpop.f32.mrb[0].mxu0
      %v411 = vadd.f32 %v338, %v410
      %v412 = vpop.f32.mrb[0].mxu0
      %413 = vdwg.mxu0
      %v414 = vmul.f32 %v411, 0.35355338
      %v415 = vld [vmem:[%s3] sm:$0xff]
      %v416 = vld [vmem:[%s3 + $0x8] sm:$0xff]
      %v417 = vld [vmem:[%s3 + $0x10] sm:$0xff]
      %v418 = vld [vmem:[%s3 + $0x18] sm:$0xff]
      %v419 = vld [vmem:[%s4] sm:$0x1]
      %v421 = vlaneseq
      %v422 = vshrl.u32 %v421, 7
      %v423 = vsub.s32 0, %v422
      %v424 = vrot.slane %v419, %v423
      %426 = vmatprep.subr.mxu0 0.0
      %427 = vmatpush1.msra.mxu0 %v415
      %428 = vmatprep.subr.mxu0 0.0
      %429 = vmatpush1.msra.mxu0 %v416
      %430 = vmatprep.subr.mxu0 0.0
      %431 = vmatpush1.msra.mxu0 %v417
      %432 = vmatprep.subr.mxu0 0.0
      %433 = vmatpush1.msra.mxu0 %v418
      %434 = vmatprep.subr.mxu0 0.0
      %435 = vmatpush1.msra.mxu0 0.0
      %436 = vmatprep.subr.mxu0 0.0
      %437 = vmatpush1.msra.mxu0 0.0
      %438 = vmatprep.subr.mxu0 0.0
      %439 = vmatpush1.msra.mxu0 0.0
      %440 = vmatprep.subr.mxu0 0.0
      %441 = vmatpush1.msra.mxu0 0.0
      %442 = vmatprep.subr.mxu0 0.0
      %443 = vmatpush1.msra.mxu0 0.0
      %444 = vmatprep.subr.mxu0 0.0
      %445 = vmatpush1.msra.mxu0 0.0
      %446 = vmatprep.subr.mxu0 0.0
      %447 = vmatpush1.msra.mxu0 0.0
      %448 = vmatprep.subr.mxu0 0.0
      %449 = vmatpush1.msra.mxu0 0.0
      %450 = vmatprep.subr.mxu0 0.0
      %451 = vmatpush1.msra.mxu0 0.0
      %452 = vmatprep.subr.mxu0 0.0
      %453 = vmatpush1.msra.mxu0 0.0
      %454 = vmatprep.subr.mxu0 0.0
      %455 = vmatpush1.msra.mxu0 0.0
      %456 = vmatprep.subr.mxu0 0.0
      %457 = vmatpush1.msra.mxu0 0.0
      %458 = vmatprep.subr.mxu0 0.0
      %459 = vmatpush1.msra.mxu0 0.0
      %460 = vmatprep.subr.mxu0 0.0
      %461 = vmatpush1.msra.mxu0 0.0
      %462 = vmatprep.subr.mxu0 0.0
      %463 = vmatpush1.msra.mxu0 0.0
      %464 = vmatprep.subr.mxu0 0.0
      %465 = vmatpush1.msra.mxu0 0.0
      %466 = vmatprep.subr.mxu0 0.0
      %467 = vmatpush1.msra.mxu0 0.0
      %468 = vmatprep.subr.mxu0 0.0
      %469 = vmatpush1.msra.mxu0 0.0
      %470 = vmatprep.subr.mxu0 0.0
      %471 = vmatpush1.msra.mxu0 0.0
      %472 = vmatprep.subr.mxu0 0.0
      %473 = vmatpush1.msra.mxu0 0.0
      %474 = vmatprep.subr.mxu0 0.0
      %475 = vmatpush1.msra.mxu0 0.0
      %476 = vmatprep.subr.mxu0 0.0
      %477 = vmatpush1.msra.mxu0 0.0
      %478 = vmatprep.subr.mxu0 0.0
      %479 = vmatpush1.msra.mxu0 0.0
      %480 = vmatprep.subr.mxu0 0.0
      %481 = vmatpush1.msra.mxu0 0.0
      %482 = vmatprep.subr.mxu0 0.0
      %483 = vmatpush1.msra.mxu0 0.0
      %484 = vmatprep.subr.mxu0 0.0
      %485 = vmatpush1.msra.mxu0 0.0
      %486 = vmatprep.subr.mxu0 0.0
      %487 = vmatpush1.msra.mxu0 0.0
      %488 = vmatprep.subr.mxu0 0.0
      %489 = vmatpush1.msra.mxu0 0.0
      %490 = vmatprep.mubr.f32.mxu0 0.0
      %491 = vmatmul.mubr.f32.gmra.mrb[0].mxu0 %v342
      %v492 = vpop.f32.mrb[0].mxu0
      %v493 = vadd.f32 %v424, %v492
      %v494 = vpop.f32.mrb[0].mxu0
      %495 = vdwg.mxu0
      %v496 = vld [vmem:[%s5] sm:$0xff]
      %v497 = vld [vmem:[%s5 + $0x8] sm:$0xff]
      %v498 = vld [vmem:[%s5 + $0x10] sm:$0xff]
      %v499 = vld [vmem:[%s5 + $0x18] sm:$0xff]
      %v500 = vld [vmem:[%s6] sm:$0x1]
      %v502 = vlaneseq
      %v503 = vshrl.u32 %v502, 7
      %v504 = vsub.s32 0, %v503
      %v505 = vrot.slane %v500, %v504
      %507 = vmatprep.subr.mxu0 0.0
      %508 = vmatpush1.msra.mxu0 %v496
      %509 = vmatprep.subr.mxu0 0.0
      %510 = vmatpush1.msra.mxu0 %v497
      %511 = vmatprep.subr.mxu0 0.0
      %512 = vmatpush1.msra.mxu0 %v498
      %513 = vmatprep.subr.mxu0 0.0
      %514 = vmatpush1.msra.mxu0 %v499
      %515 = vmatprep.subr.mxu0 0.0
      %516 = vmatpush1.msra.mxu0 0.0
      %517 = vmatprep.subr.mxu0 0.0
      %518 = vmatpush1.msra.mxu0 0.0
      %519 = vmatprep.subr.mxu0 0.0
      %520 = vmatpush1.msra.mxu0 0.0
      %521 = vmatprep.subr.mxu0 0.0
      %522 = vmatpush1.msra.mxu0 0.0
      %523 = vmatprep.subr.mxu0 0.0
      %524 = vmatpush1.msra.mxu0 0.0
      %525 = vmatprep.subr.mxu0 0.0
      %526 = vmatpush1.msra.mxu0 0.0
      %527 = vmatprep.subr.mxu0 0.0
      %528 = vmatpush1.msra.mxu0 0.0
      %529 = vmatprep.subr.mxu0 0.0
      %530 = vmatpush1.msra.mxu0 0.0
      %531 = vmatprep.subr.mxu0 0.0
      %532 = vmatpush1.msra.mxu0 0.0
      %533 = vmatprep.subr.mxu0 0.0
      %534 = vmatpush1.msra.mxu0 0.0
      %535 = vmatprep.subr.mxu0 0.0
      %536 = vmatpush1.msra.mxu0 0.0
      %537 = vmatprep.subr.mxu0 0.0
      %538 = vmatpush1.msra.mxu0 0.0
      %539 = vmatprep.subr.mxu0 0.0
      %540 = vmatpush1.msra.mxu0 0.0
      %541 = vmatprep.subr.mxu0 0.0
      %542 = vmatpush1.msra.mxu0 0.0
      %543 = vmatprep.subr.mxu0 0.0
      %544 = vmatpush1.msra.mxu0 0.0
      %545 = vmatprep.subr.mxu0 0.0
      %546 = vmatpush1.msra.mxu0 0.0
      %547 = vmatprep.subr.mxu0 0.0
      %548 = vmatpush1.msra.mxu0 0.0
      %549 = vmatprep.subr.mxu0 0.0
      %550 = vmatpush1.msra.mxu0 0.0
      %551 = vmatprep.subr.mxu0 0.0
      %552 = vmatpush1.msra.mxu0 0.0
      %553 = vmatprep.subr.mxu0 0.0
      %554 = vmatpush1.msra.mxu0 0.0
      %555 = vmatprep.subr.mxu0 0.0
      %556 = vmatpush1.msra.mxu0 0.0
      %557 = vmatprep.subr.mxu0 0.0
      %558 = vmatpush1.msra.mxu0 0.0
      %559 = vmatprep.subr.mxu0 0.0
      %560 = vmatpush1.msra.mxu0 0.0
      %561 = vmatprep.subr.mxu0 0.0
      %562 = vmatpush1.msra.mxu0 0.0
      %563 = vmatprep.subr.mxu0 0.0
      %564 = vmatpush1.msra.mxu0 0.0
      %565 = vmatprep.subr.mxu0 0.0
      %566 = vmatpush1.msra.mxu0 0.0
      %567 = vmatprep.subr.mxu0 0.0
      %568 = vmatpush1.msra.mxu0 0.0
      %569 = vmatprep.subr.mxu0 0.0
      %570 = vmatpush1.msra.mxu0 0.0
      %571 = vmatprep.mubr.f32.mxu0 0.0
      %572 = vmatmul.mubr.f32.gmra.mrb[0].mxu0 %v342
      %v573 = vpop.f32.mrb[0].mxu0
      %v574 = vadd.f32 %v505, %v573
      %v575 = vpop.f32.mrb[0].mxu0
      %576 = vdwg.mxu0
      %vm577 = vcmask 64512
      %v579 = vsel %vm577, %v414, 0
      %v582 = vsel %vm577, %v493, 0
      %584 = vmatprep.subr.mxu0 0.0
      %585 = vmatpush1.xpose.msra.mxu0 %v582
      %586 = vmatprep.subr.mxu0 0.0
      %587 = vmatpush1.xpose.msra.mxu0 0.0
      %588 = vmatprep.subr.mxu0 0.0
      %589 = vmatpush1.xpose.msra.mxu0 0.0
      %590 = vmatprep.subr.mxu0 0.0
      %591 = vmatpush1.xpose.msra.mxu0 0.0
      %592 = vmatprep.subr.mxu0 0.0
      %593 = vmatpush1.xpose.msra.mxu0 0.0
      %594 = vmatprep.subr.mxu0 0.0
      %595 = vmatpush1.xpose.msra.mxu0 0.0
      %596 = vmatprep.subr.mxu0 0.0
      %597 = vmatpush1.xpose.msra.mxu0 0.0
      %598 = vmatprep.subr.mxu0 0.0
      %599 = vmatpush1.xpose.msra.mxu0 0.0
      %600 = vmatprep.subr.mxu0 0.0
      %601 = vmatpush1.xpose.msra.mxu0 0.0
      %602 = vmatprep.subr.mxu0 0.0
      %603 = vmatpush1.xpose.msra.mxu0 0.0
      %604 = vmatprep.subr.mxu0 0.0
      %605 = vmatpush1.xpose.msra.mxu0 0.0
      %606 = vmatprep.subr.mxu0 0.0
      %607 = vmatpush1.xpose.msra.mxu0 0.0
      %608 = vmatprep.subr.mxu0 0.0
      %609 = vmatpush1.xpose.msra.mxu0 0.0
      %610 = vmatprep.subr.mxu0 0.0
      %611 = vmatpush1.xpose.msra.mxu0 0.0
      %612 = vmatprep.subr.mxu0 0.0
      %613 = vmatpush1.xpose.msra.mxu0 0.0
      %614 = vmatprep.subr.mxu0 0.0
      %615 = vmatpush1.xpose.msra.mxu0 0.0
      %616 = vmatprep.subr.mxu0 0.0
      %617 = vmatpush1.xpose.msra.mxu0 0.0
      %618 = vmatprep.subr.mxu0 0.0
      %619 = vmatpush1.xpose.msra.mxu0 0.0
      %620 = vmatprep.subr.mxu0 0.0
      %621 = vmatpush1.xpose.msra.mxu0 0.0
      %622 = vmatprep.subr.mxu0 0.0
      %623 = vmatpush1.xpose.msra.mxu0 0.0
      %624 = vmatprep.subr.mxu0 0.0
      %625 = vmatpush1.xpose.msra.mxu0 0.0
      %626 = vmatprep.subr.mxu0 0.0
      %627 = vmatpush1.xpose.msra.mxu0 0.0
      %628 = vmatprep.subr.mxu0 0.0
      %629 = vmatpush1.xpose.msra.mxu0 0.0
      %630 = vmatprep.subr.mxu0 0.0
      %631 = vmatpush1.xpose.msra.mxu0 0.0
      %632 = vmatprep.subr.mxu0 0.0
      %633 = vmatpush1.xpose.msra.mxu0 0.0
      %634 = vmatprep.subr.mxu0 0.0
      %635 = vmatpush1.xpose.msra.mxu0 0.0
      %636 = vmatprep.subr.mxu0 0.0
      %637 = vmatpush1.xpose.msra.mxu0 0.0
      %638 = vmatprep.subr.mxu0 0.0
      %639 = vmatpush1.xpose.msra.mxu0 0.0
      %640 = vmatprep.subr.mxu0 0.0
      %641 = vmatpush1.xpose.msra.mxu0 0.0
      %642 = vmatprep.subr.mxu0 0.0
      %643 = vmatpush1.xpose.msra.mxu0 0.0
      %644 = vmatprep.subr.mxu0 0.0
      %645 = vmatpush1.xpose.msra.mxu0 0.0
      %646 = vmatprep.subr.mxu0 0.0
      %647 = vmatpush1.xpose.msra.mxu0 0.0
      %648 = vmatprep.mubr.f32.mxu0 0.0
      %649 = vmatmul.mubr.f32.gmra.mrb[0].mxu0 %v579
      %v650 = vpop.f32.mrb[0].mxu0
      %v651 = vadd.f32 0.0, %v650
      %v652 = vpop.f32.mrb[0].mxu0
      %653 = vdwg.mxu0
      %v654 = vsel %vm577, %v651, -inf
      %655 = vmax.xlane.f32.xlu0 %v654
      %v656 = vpop.xlane.xlu0 %655
      %v657 = vsub.f32 %v651, %v656
      %v658 = vmul.f32 %v657, 1.442695
      %v659 = vpow.pop %v658
      %v660 = vsel %vm577, %v659, 0.0
      %661 = vadd.xlane.f32.xlu0 %v660
      %v662 = vpop.xlane.xlu0 %661
      %v663 = vrcp.pop %v662
      %v664 = vmul.f32 %v659, %v663
      %v666 = vsel %vm577, %v664, 0
      %668 = vmatprep.subr.mxu0 0.0
      %669 = vmatpush1.msra.mxu0 %v574
      %670 = vmatprep.subr.mxu0 0.0
      %671 = vmatpush1.msra.mxu0 0.0
      %672 = vmatprep.subr.mxu0 0.0
      %673 = vmatpush1.msra.mxu0 0.0
      %674 = vmatprep.subr.mxu0 0.0
      %675 = vmatpush1.msra.mxu0 0.0
      %676 = vmatprep.subr.mxu0 0.0
      %677 = vmatpush1.msra.mxu0 0.0
      %678 = vmatprep.subr.mxu0 0.0
      %679 = vmatpush1.msra.mxu0 0.0
      %680 = vmatprep.subr.mxu0 0.0
      %681 = vmatpush1.msra.mxu0 0.0
      %682 = vmatprep.subr.mxu0 0.0
      %683 = vmatpush1.msra.mxu0 0.0
      %684 = vmatprep.subr.mxu0 0.0
      %685 = vmatpush1.msra.mxu0 0.0
      %686 = vmatprep.subr.mxu0 0.0
      %687 = vmatpush1.msra.mxu0 0.0
      %688 = vmatprep.subr.mxu0 0.0
      %689 = vmatpush1.msra.mxu0 0.0
      %690 = vmatprep.subr.mxu0 0.0
      %691 = vmatpush1.msra.mxu0 0.0
      %692 = vmatprep.subr.mxu0 0.0
      %693 = vmatpush1.msra.mxu0 0.0
      %694 = vmatprep.subr.mxu0 0.0
      %695 = vmatpush1.msra.mxu0 0.0
      %696 = vmatprep.subr.mxu0 0.0
      %697 = vmatpush1.msra.mxu0 0.0
      %698 = vmatprep.subr.mxu0 0.0
      %699 = vmatpush1.msra.mxu0 0.0
      %700 = vmatprep.subr.mxu0 0.0
      %701 = vmatpush1.msra.mxu0 0.0
      %702 = vmatprep.subr.mxu0 0.0
      %703 = vmatpush1.msra.mxu0 0.0
      %704 = vmatprep.subr.mxu0 0.0
      %705 = vmatpush1.msra.mxu0 0.0
      %706 = vmatprep.subr.mxu0 0.0
      %707 = vmatpush1.msra.mxu0 0.0
      %708 = vmatprep.subr.mxu0 0.0
      %709 = vmatpush1.msra.mxu0 0.0
      %710 = vmatprep.subr.mxu0 0.0
      %711 = vmatpush1.msra.mxu0 0.0
      %712 = vmatprep.subr.mxu0 0.0
      %713 = vmatpush1.msra.mxu0 0.0
      %714 = vmatprep.subr.mxu0 0.0
      %715 = vmatpush1.msra.mxu0 0.0
      %716 = vmatprep.subr.mxu0 0.0
      %717 = vmatpush1.msra.mxu0 0.0
      %718 = vmatprep.subr.mxu0 0.0
      %719 = vmatpush1.msra.mxu0 0.0
      %720 = vmatprep.subr.mxu0 0.0
      %721 = vmatpush1.msra.mxu0 0.0
      %722 = vmatprep.subr.mxu0 0.0
      %723 = vmatpush1.msra.mxu0 0.0
      %724 = vmatprep.subr.mxu0 0.0
      %725 = vmatpush1.msra.mxu0 0.0
      %726 = vmatprep.subr.mxu0 0.0
      %727 = vmatpush1.msra.mxu0 0.0
      %728 = vmatprep.subr.mxu0 0.0
      %729 = vmatpush1.msra.mxu0 0.0
      %730 = vmatprep.subr.mxu0 0.0
      %731 = vmatpush1.msra.mxu0 0.0
      %732 = vmatprep.mubr.f32.mxu0 0.0
      %733 = vmatmul.mubr.f32.gmra.mrb[0].mxu0 %v666
      %v734 = vpop.f32.mrb[0].mxu0
      %v735 = vadd.f32 0.0, %v734
      %v736 = vpop.f32.mrb[0].mxu0
      %737 = vdwg.mxu0
      %v738 = vld [vmem:[%s7] sm:$0xff]
      %s739 = scalar_lea.vmem %s1, 32
      %v740 = vld [vmem:[%s739] sm:$0xff]
      %v741 = vld [vmem:[%s739 + $0x8] sm:$0xff]
      %v742 = vld [vmem:[%s739 + $0x10] sm:$0xff]
      %v743 = vld [vmem:[%s739 + $0x18] sm:$0xff]
      %s744 = scalar_lea.vmem %s2, 1
      %v745 = vld [vmem:[%s744] sm:$0x1]
      %v747 = vlaneseq
      %v748 = vshrl.u32 %v747, 7
      %v749 = vsub.s32 0, %v748
      %v750 = vrot.slane %v745, %v749
      %752 = vmatprep.subr.mxu0 0.0
      %753 = vmatpush1.msra.mxu0 %v740
      %754 = vmatprep.subr.mxu0 0.0
      %755 = vmatpush1.msra.mxu0 %v741
      %756 = vmatprep.subr.mxu0 0.0
      %757 = vmatpush1.msra.mxu0 %v742
      %758 = vmatprep.subr.mxu0 0.0
      %759 = vmatpush1.msra.mxu0 %v743
      %760 = vmatprep.subr.mxu0 0.0
      %761 = vmatpush1.msra.mxu0 0.0
      %762 = vmatprep.subr.mxu0 0.0
      %763 = vmatpush1.msra.mxu0 0.0
      %764 = vmatprep.subr.mxu0 0.0
      %765 = vmatpush1.msra.mxu0 0.0
      %766 = vmatprep.subr.mxu0 0.0
      %767 = vmatpush1.msra.mxu0 0.0
      %768 = vmatprep.subr.mxu0 0.0
      %769 = vmatpush1.msra.mxu0 0.0
      %770 = vmatprep.subr.mxu0 0.0
      %771 = vmatpush1.msra.mxu0 0.0
      %772 = vmatprep.subr.mxu0 0.0
      %773 = vmatpush1.msra.mxu0 0.0
      %774 = vmatprep.subr.mxu0 0.0
      %775 = vmatpush1.msra.mxu0 0.0
      %776 = vmatprep.subr.mxu0 0.0
      %777 = vmatpush1.msra.mxu0 0.0
      %778 = vmatprep.subr.mxu0 0.0
      %779 = vmatpush1.msra.mxu0 0.0
      %780 = vmatprep.subr.mxu0 0.0
      %781 = vmatpush1.msra.mxu0 0.0
      %782 = vmatprep.subr.mxu0 0.0
      %783 = vmatpush1.msra.mxu0 0.0
      %784 = vmatprep.subr.mxu0 0.0
      %785 = vmatpush1.msra.mxu0 0.0
      %786 = vmatprep.subr.mxu0 0.0
      %787 = vmatpush1.msra.mxu0 0.0
      %788 = vmatprep.subr.mxu0 0.0
      %789 = vmatpush1.msra.mxu0 0.0
      %790 = vmatprep.subr.mxu0 0.0
      %791 = vmatpush1.msra.mxu0 0.0
      %792 = vmatprep.subr.mxu0 0.0
      %793 = vmatpush1.msra.mxu0 0.0
      %794 = vmatprep.subr.mxu0 0.0
      %795 = vmatpush1.msra.mxu0 0.0
      %796 = vmatprep.subr.mxu0 0.0
      %797 = vmatpush1.msra.mxu0 0.0
      %798 = vmatprep.subr.mxu0 0.0
      %799 = vmatpush1.msra.mxu0 0.0
      %800 = vmatprep.subr.mxu0 0.0
      %801 = vmatpush1.msra.mxu0 0.0
      %802 = vmatprep.subr.mxu0 0.0
      %803 = vmatpush1.msra.mxu0 0.0
      %804 = vmatprep.subr.mxu0 0.0
      %805 = vmatpush1.msra.mxu0 0.0
      %806 = vmatprep.subr.mxu0 0.0
      %807 = vmatpush1.msra.mxu0 0.0
      %808 = vmatprep.subr.mxu0 0.0
      %809 = vmatpush1.msra.mxu0 0.0
      %810 = vmatprep.subr.mxu0 0.0
      %811 = vmatpush1.msra.mxu0 0.0
      %812 = vmatprep.subr.mxu0 0.0
      %813 = vmatpush1.msra.mxu0 0.0
      %814 = vmatprep.subr.mxu0 0.0
      %815 = vmatpush1.msra.mxu0 0.0
      %816 = vmatprep.mubr.f32.mxu0 0.0
      %817 = vmatmul.mubr.f32.gmra.mrb[0].mxu0 %v342
      %v818 = vpop.f32.mrb[0].mxu0
      %v819 = vadd.f32 %v750, %v818
      %v820 = vpop.f32.mrb[0].mxu0
      %821 = vdwg.mxu0
      %v822 = vmul.f32 %v819, 0.35355338
      %s823 = scalar_lea.vmem %s3, 32
      %v824 = vld [vmem:[%s823] sm:$0xff]
      %v825 = vld [vmem:[%s823 + $0x8] sm:$0xff]
      %v826 = vld [vmem:[%s823 + $0x10] sm:$0xff]
      %v827 = vld [vmem:[%s823 + $0x18] sm:$0xff]
      %s828 = scalar_lea.vmem %s4, 1
      %v829 = vld [vmem:[%s828] sm:$0x1]
      %v831 = vlaneseq
      %v832 = vshrl.u32 %v831, 7
      %v833 = vsub.s32 0, %v832
      %v834 = vrot.slane %v829, %v833
      %836 = vmatprep.subr.mxu0 0.0
      %837 = vmatpush1.msra.mxu0 %v824
      %838 = vmatprep.subr.mxu0 0.0
      %839 = vmatpush1.msra.mxu0 %v825
      %840 = vmatprep.subr.mxu0 0.0
      %841 = vmatpush1.msra.mxu0 %v826
      %842 = vmatprep.subr.mxu0 0.0
      %843 = vmatpush1.msra.mxu0 %v827
      %844 = vmatprep.subr.mxu0 0.0
      %845 = vmatpush1.msra.mxu0 0.0
      %846 = vmatprep.subr.mxu0 0.0
      %847 = vmatpush1.msra.mxu0 0.0
      %848 = vmatprep.subr.mxu0 0.0
      %849 = vmatpush1.msra.mxu0 0.0
      %850 = vmatprep.subr.mxu0 0.0
      %851 = vmatpush1.msra.mxu0 0.0
      %852 = vmatprep.subr.mxu0 0.0
      %853 = vmatpush1.msra.mxu0 0.0
      %854 = vmatprep.subr.mxu0 0.0
      %855 = vmatpush1.msra.mxu0 0.0
      %856 = vmatprep.subr.mxu0 0.0
      %857 = vmatpush1.msra.mxu0 0.0
      %858 = vmatprep.subr.mxu0 0.0
      %859 = vmatpush1.msra.mxu0 0.0
      %860 = vmatprep.subr.mxu0 0.0
      %861 = vmatpush1.msra.mxu0 0.0
      %862 = vmatprep.subr.mxu0 0.0
      %863 = vmatpush1.msra.mxu0 0.0
      %864 = vmatprep.subr.mxu0 0.0
      %865 = vmatpush1.msra.mxu0 0.0
      %866 = vmatprep.subr.mxu0 0.0
      %867 = vmatpush1.msra.mxu0 0.0
      %868 = vmatprep.subr.mxu0 0.0
      %869 = vmatpush1.msra.mxu0 0.0
      %870 = vmatprep.subr.mxu0 0.0
      %871 = vmatpush1.msra.mxu0 0.0
      %872 = vmatprep.subr.mxu0 0.0
      %873 = vmatpush1.msra.mxu0 0.0
      %874 = vmatprep.subr.mxu0 0.0
      %875 = vmatpush1.msra.mxu0 0.0
      %876 = vmatprep.subr.mxu0 0.0
      %877 = vmatpush1.msra.mxu0 0.0
      %878 = vmatprep.subr.mxu0 0.0
      %879 = vmatpush1.msra.mxu0 0.0
      %880 = vmatprep.subr.mxu0 0.0
      %881 = vmatpush1.msra.mxu0 0.0
      %882 = vmatprep.subr.mxu0 0.0
      %883 = vmatpush1.msra.mxu0 0.0
      %884 = vmatprep.subr.mxu0 0.0
      %885 = vmatpush1.msra.mxu0 0.0
      %886 = vmatprep.subr.mxu0 0.0
      %887 = vmatpush1.msra.mxu0 0.0
      %888 = vmatprep.subr.mxu0 0.0
      %889 = vmatpush1.msra.mxu0 0.0
      %890 = vmatprep.subr.mxu0 0.0
      %891 = vmatpush1.msra.mxu0 0.0
      %892 = vmatprep.subr.mxu0 0.0
      %893 = vmatpush1.msra.mxu0 0.0
      %894 = vmatprep.subr.mxu0 0.0
      %895 = vmatpush1.msra.mxu0 0.0
      %896 = vmatprep.subr.mxu0 0.0
      %897 = vmatpush1.msra.mxu0 0.0
      %898 = vmatprep.subr.mxu0 0.0
      %899 = vmatpush1.msra.mxu0 0.0
      %900 = vmatprep.mubr.f32.mxu0 0.0
      %901 = vmatmul.mubr.f32.gmra.mrb[0].mxu0 %v342
      %v902 = vpop.f32.mrb[0].mxu0
      %v903 = vadd.f32 %v834, %v902
      %v904 = vpop.f32.mrb[0].mxu0
      %905 = vdwg.mxu0
      %s906 = scalar_lea.vmem %s5, 32
      %v907 = vld [vmem:[%s906] sm:$0xff]
      %v908 = vld [vmem:[%s906 + $0x8] sm:$0xff]
      %v909 = vld [vmem:[%s906 + $0x10] sm:$0xff]
      %v910 = vld [vmem:[%s906 + $0x18] sm:$0xff]
      %s911 = scalar_lea.vmem %s6, 1
      %v912 = vld [vmem:[%s911] sm:$0x1]
      %v914 = vlaneseq
      %v915 = vshrl.u32 %v914, 7
      %v916 = vsub.s32 0, %v915
      %v917 = vrot.slane %v912, %v916
      %919 = vmatprep.subr.mxu0 0.0
      %920 = vmatpush1.msra.mxu0 %v907
      %921 = vmatprep.subr.mxu0 0.0
      %922 = vmatpush1.msra.mxu0 %v908
      %923 = vmatprep.subr.mxu0 0.0
      %924 = vmatpush1.msra.mxu0 %v909
      %925 = vmatprep.subr.mxu0 0.0
      %926 = vmatpush1.msra.mxu0 %v910
      %927 = vmatprep.subr.mxu0 0.0
      %928 = vmatpush1.msra.mxu0 0.0
      %929 = vmatprep.subr.mxu0 0.0
      %930 = vmatpush1.msra.mxu0 0.0
      %931 = vmatprep.subr.mxu0 0.0
      %932 = vmatpush1.msra.mxu0 0.0
      %933 = vmatprep.subr.mxu0 0.0
      %934 = vmatpush1.msra.mxu0 0.0
      %935 = vmatprep.subr.mxu0 0.0
      %936 = vmatpush1.msra.mxu0 0.0
      %937 = vmatprep.subr.mxu0 0.0
      %938 = vmatpush1.msra.mxu0 0.0
      %939 = vmatprep.subr.mxu0 0.0
      %940 = vmatpush1.msra.mxu0 0.0
      %941 = vmatprep.subr.mxu0 0.0
      %942 = vmatpush1.msra.mxu0 0.0
      %943 = vmatprep.subr.mxu0 0.0
      %944 = vmatpush1.msra.mxu0 0.0
      %945 = vmatprep.subr.mxu0 0.0
      %946 = vmatpush1.msra.mxu0 0.0
      %947 = vmatprep.subr.mxu0 0.0
      %948 = vmatpush1.msra.mxu0 0.0
      %949 = vmatprep.subr.mxu0 0.0
      %950 = vmatpush1.msra.mxu0 0.0
      %951 = vmatprep.subr.mxu0 0.0
      %952 = vmatpush1.msra.mxu0 0.0
      %953 = vmatprep.subr.mxu0 0.0
      %954 = vmatpush1.msra.mxu0 0.0
      %955 = vmatprep.subr.mxu0 0.0
      %956 = vmatpush1.msra.mxu0 0.0
      %957 = vmatprep.subr.mxu0 0.0
      %958 = vmatpush1.msra.mxu0 0.0
      %959 = vmatprep.subr.mxu0 0.0
      %960 = vmatpush1.msra.mxu0 0.0
      %961 = vmatprep.subr.mxu0 0.0
      %962 = vmatpush1.msra.mxu0 0.0
      %963 = vmatprep.subr.mxu0 0.0
      %964 = vmatpush1.msra.mxu0 0.0
      %965 = vmatprep.subr.mxu0 0.0
      %966 = vmatpush1.msra.mxu0 0.0
      %967 = vmatprep.subr.mxu0 0.0
      %968 = vmatpush1.msra.mxu0 0.0
      %969 = vmatprep.subr.mxu0 0.0
      %970 = vmatpush1.msra.mxu0 0.0
      %971 = vmatprep.subr.mxu0 0.0
      %972 = vmatpush1.msra.mxu0 0.0
      %973 = vmatprep.subr.mxu0 0.0
      %974 = vmatpush1.msra.mxu0 0.0
      %975 = vmatprep.subr.mxu0 0.0
      %976 = vmatpush1.msra.mxu0 0.0
      %977 = vmatprep.subr.mxu0 0.0
      %978 = vmatpush1.msra.mxu0 0.0
      %979 = vmatprep.subr.mxu0 0.0
      %980 = vmatpush1.msra.mxu0 0.0
      %981 = vmatprep.subr.mxu0 0.0
      %982 = vmatpush1.msra.mxu0 0.0
      %983 = vmatprep.mubr.f32.mxu0 0.0
      %984 = vmatmul.mubr.f32.gmra.mrb[0].mxu0 %v342
      %v985 = vpop.f32.mrb[0].mxu0
      %v986 = vadd.f32 %v917, %v985
      %v987 = vpop.f32.mrb[0].mxu0
      %988 = vdwg.mxu0
      %v990 = vsel %vm577, %v822, 0
      %v993 = vsel %vm577, %v903, 0
      %995 = vmatprep.subr.mxu0 0.0
      %996 = vmatpush1.xpose.msra.mxu0 %v993
      %997 = vmatprep.subr.mxu0 0.0
      %998 = vmatpush1.xpose.msra.mxu0 0.0
      %999 = vmatprep.subr.mxu0 0.0
      %1000 = vmatpush1.xpose.msra.mxu0 0.0
      %1001 = vmatprep.subr.mxu0 0.0
      %1002 = vmatpush1.xpose.msra.mxu0 0.0
      %1003 = vmatprep.subr.mxu0 0.0
      %1004 = vmatpush1.xpose.msra.mxu0 0.0
      %1005 = vmatprep.subr.mxu0 0.0
      %1006 = vmatpush1.xpose.msra.mxu0 0.0
      %1007 = vmatprep.subr.mxu0 0.0
      %1008 = vmatpush1.xpose.msra.mxu0 0.0
      %1009 = vmatprep.subr.mxu0 0.0
      %1010 = vmatpush1.xpose.msra.mxu0 0.0
      %1011 = vmatprep.subr.mxu0 0.0
      %1012 = vmatpush1.xpose.msra.mxu0 0.0
      %1013 = vmatprep.subr.mxu0 0.0
      %1014 = vmatpush1.xpose.msra.mxu0 0.0
      %1015 = vmatprep.subr.mxu0 0.0
      %1016 = vmatpush1.xpose.msra.mxu0 0.0
      %1017 = vmatprep.subr.mxu0 0.0
      %1018 = vmatpush1.xpose.msra.mxu0 0.0
      %1019 = vmatprep.subr.mxu0 0.0
      %1020 = vmatpush1.xpose.msra.mxu0 0.0
      %1021 = vmatprep.subr.mxu0 0.0
      %1022 = vmatpush1.xpose.msra.mxu0 0.0
      %1023 = vmatprep.subr.mxu0 0.0
      %1024 = vmatpush1.xpose.msra.mxu0 0.0
      %1025 = vmatprep.subr.mxu0 0.0
      %1026 = vmatpush1.xpose.msra.mxu0 0.0
      %1027 = vmatprep.subr.mxu0 0.0
      %1028 = vmatpush1.xpose.msra.mxu0 0.0
      %1029 = vmatprep.subr.mxu0 0.0
      %1030 = vmatpush1.xpose.msra.mxu0 0.0
      %1031 = vmatprep.subr.mxu0 0.0
      %1032 = vmatpush1.xpose.msra.mxu0 0.0
      %1033 = vmatprep.subr.mxu0 0.0
      %1034 = vmatpush1.xpose.msra.mxu0 0.0
      %1035 = vmatprep.subr.mxu0 0.0
      %1036 = vmatpush1.xpose.msra.mxu0 0.0
      %1037 = vmatprep.subr.mxu0 0.0
      %1038 = vmatpush1.xpose.msra.mxu0 0.0
      %1039 = vmatprep.subr.mxu0 0.0
      %1040 = vmatpush1.xpose.msra.mxu0 0.0
      %1041 = vmatprep.subr.mxu0 0.0
      %1042 = vmatpush1.xpose.msra.mxu0 0.0
      %1043 = vmatprep.subr.mxu0 0.0
      %1044 = vmatpush1.xpose.msra.mxu0 0.0
      %1045 = vmatprep.subr.mxu0 0.0
      %1046 = vmatpush1.xpose.msra.mxu0 0.0
      %1047 = vmatprep.subr.mxu0 0.0
      %1048 = vmatpush1.xpose.msra.mxu0 0.0
      %1049 = vmatprep.subr.mxu0 0.0
      %1050 = vmatpush1.xpose.msra.mxu0 0.0
      %1051 = vmatprep.subr.mxu0 0.0
      %1052 = vmatpush1.xpose.msra.mxu0 0.0
      %1053 = vmatprep.subr.mxu0 0.0
      %1054 = vmatpush1.xpose.msra.mxu0 0.0
      %1055 = vmatprep.subr.mxu0 0.0
      %1056 = vmatpush1.xpose.msra.mxu0 0.0
      %1057 = vmatprep.subr.mxu0 0.0
      %1058 = vmatpush1.xpose.msra.mxu0 0.0
      %1059 = vmatprep.mubr.f32.mxu0 0.0
      %1060 = vmatmul.mubr.f32.gmra.mrb[0].mxu0 %v990
      %v1061 = vpop.f32.mrb[0].mxu0
      %v1062 = vadd.f32 0.0, %v1061
      %v1063 = vpop.f32.mrb[0].mxu0
      %1064 = vdwg.mxu0
      %v1065 = vsel %vm577, %v1062, -inf
      %1066 = vmax.xlane.f32.xlu0 %v1065
      %v1067 = vpop.xlane.xlu0 %1066
      %v1068 = vsub.f32 %v1062, %v1067
      %v1069 = vmul.f32 %v1068, 1.442695
      %v1070 = vpow.pop %v1069
      %v1071 = vsel %vm577, %v1070, 0.0
      %1072 = vadd.xlane.f32.xlu0 %v1071
      %v1073 = vpop.xlane.xlu0 %1072
      %v1074 = vrcp.pop %v1073
      %v1075 = vmul.f32 %v1070, %v1074
      %v1077 = vsel %vm577, %v1075, 0
      %1079 = vmatprep.subr.mxu0 0.0
      %1080 = vmatpush1.msra.mxu0 %v986
      %1081 = vmatprep.subr.mxu0 0.0
      %1082 = vmatpush1.msra.mxu0 0.0
      %1083 = vmatprep.subr.mxu0 0.0
      %1084 = vmatpush1.msra.mxu0 0.0
      %1085 = vmatprep.subr.mxu0 0.0
      %1086 = vmatpush1.msra.mxu0 0.0
      %1087 = vmatprep.subr.mxu0 0.0
      %1088 = vmatpush1.msra.mxu0 0.0
      %1089 = vmatprep.subr.mxu0 0.0
      %1090 = vmatpush1.msra.mxu0 0.0
      %1091 = vmatprep.subr.mxu0 0.0
      %1092 = vmatpush1.msra.mxu0 0.0
      %1093 = vmatprep.subr.mxu0 0.0
      %1094 = vmatpush1.msra.mxu0 0.0
      %1095 = vmatprep.subr.mxu0 0.0
      %1096 = vmatpush1.msra.mxu0 0.0
      %1097 = vmatprep.subr.mxu0 0.0
      %1098 = vmatpush1.msra.mxu0 0.0
      %1099 = vmatprep.subr.mxu0 0.0
      %1100 = vmatpush1.msra.mxu0 0.0
      %1101 = vmatprep.subr.mxu0 0.0
      %1102 = vmatpush1.msra.mxu0 0.0
      %1103 = vmatprep.subr.mxu0 0.0
      %1104 = vmatpush1.msra.mxu0 0.0
      %1105 = vmatprep.subr.mxu0 0.0
      %1106 = vmatpush1.msra.mxu0 0.0
      %1107 = vmatprep.subr.mxu0 0.0
      %1108 = vmatpush1.msra.mxu0 0.0
      %1109 = vmatprep.subr.mxu0 0.0
      %1110 = vmatpush1.msra.mxu0 0.0
      %1111 = vmatprep.subr.mxu0 0.0
      %1112 = vmatpush1.msra.mxu0 0.0
      %1113 = vmatprep.subr.mxu0 0.0
      %1114 = vmatpush1.msra.mxu0 0.0
      %1115 = vmatprep.subr.mxu0 0.0
      %1116 = vmatpush1.msra.mxu0 0.0
      %1117 = vmatprep.subr.mxu0 0.0
      %1118 = vmatpush1.msra.mxu0 0.0
      %1119 = vmatprep.subr.mxu0 0.0
      %1120 = vmatpush1.msra.mxu0 0.0
      %1121 = vmatprep.subr.mxu0 0.0
      %1122 = vmatpush1.msra.mxu0 0.0
      %1123 = vmatprep.subr.mxu0 0.0
      %1124 = vmatpush1.msra.mxu0 0.0
      %1125 = vmatprep.subr.mxu0 0.0
      %1126 = vmatpush1.msra.mxu0 0.0
      %1127 = vmatprep.subr.mxu0 0.0
      %1128 = vmatpush1.msra.mxu0 0.0
      %1129 = vmatprep.subr.mxu0 0.0
      %1130 = vmatpush1.msra.mxu0 0.0
      %1131 = vmatprep.subr.mxu0 0.0
      %1132 = vmatpush1.msra.mxu0 0.0
      %1133 = vmatprep.subr.mxu0 0.0
      %1134 = vmatpush1.msra.mxu0 0.0
      %1135 = vmatprep.subr.mxu0 0.0
      %1136 = vmatpush1.msra.mxu0 0.0
      %1137 = vmatprep.subr.mxu0 0.0
      %1138 = vmatpush1.msra.mxu0 0.0
      %1139 = vmatprep.subr.mxu0 0.0
      %1140 = vmatpush1.msra.mxu0 0.0
      %1141 = vmatprep.subr.mxu0 0.0
      %1142 = vmatpush1.msra.mxu0 0.0
      %1143 = vmatprep.mubr.f32.mxu0 0.0
      %1144 = vmatmul.mubr.f32.gmra.mrb[0].mxu0 %v1077
      %v1145 = vpop.f32.mrb[0].mxu0
      %v1146 = vadd.f32 0.0, %v1145
      %v1147 = vpop.f32.mrb[0].mxu0
      %1148 = vdwg.mxu0
      %s1149 = scalar_lea.vmem %s7, 8
      %v1150 = vld [vmem:[%s1149] sm:$0xff]
      %v1152 = vsel %vm577, %v1146, 0
      %1154 = vmatprep.subr.mxu0 0.0
      %1155 = vmatpush1.msra.mxu0 %v1150
      %1156 = vmatprep.subr.mxu0 0.0
      %1157 = vmatpush1.msra.mxu0 0.0
      %1158 = vmatprep.subr.mxu0 0.0
      %1159 = vmatpush1.msra.mxu0 0.0
      %1160 = vmatprep.subr.mxu0 0.0
      %1161 = vmatpush1.msra.mxu0 0.0
      %1162 = vmatprep.subr.mxu0 0.0
      %1163 = vmatpush1.msra.mxu0 0.0
      %1164 = vmatprep.subr.mxu0 0.0
      %1165 = vmatpush1.msra.mxu0 0.0
      %1166 = vmatprep.subr.mxu0 0.0
      %1167 = vmatpush1.msra.mxu0 0.0
      %1168 = vmatprep.subr.mxu0 0.0
      %1169 = vmatpush1.msra.mxu0 0.0
      %1170 = vmatprep.subr.mxu0 0.0
      %1171 = vmatpush1.msra.mxu0 0.0
      %1172 = vmatprep.subr.mxu0 0.0
      %1173 = vmatpush1.msra.mxu0 0.0
      %1174 = vmatprep.subr.mxu0 0.0
      %1175 = vmatpush1.msra.mxu0 0.0
      %1176 = vmatprep.subr.mxu0 0.0
      %1177 = vmatpush1.msra.mxu0 0.0
      %1178 = vmatprep.subr.mxu0 0.0
      %1179 = vmatpush1.msra.mxu0 0.0
      %1180 = vmatprep.subr.mxu0 0.0
      %1181 = vmatpush1.msra.mxu0 0.0
      %1182 = vmatprep.subr.mxu0 0.0
      %1183 = vmatpush1.msra.mxu0 0.0
      %1184 = vmatprep.subr.mxu0 0.0
      %1185 = vmatpush1.msra.mxu0 0.0
      %1186 = vmatprep.subr.mxu0 0.0
      %1187 = vmatpush1.msra.mxu0 0.0
      %1188 = vmatprep.subr.mxu0 0.0
      %1189 = vmatpush1.msra.mxu0 0.0
      %1190 = vmatprep.subr.mxu0 0.0
      %1191 = vmatpush1.msra.mxu0 0.0
      %1192 = vmatprep.subr.mxu0 0.0
      %1193 = vmatpush1.msra.mxu0 0.0
      %1194 = vmatprep.subr.mxu0 0.0
      %1195 = vmatpush1.msra.mxu0 0.0
      %1196 = vmatprep.subr.mxu0 0.0
      %1197 = vmatpush1.msra.mxu0 0.0
      %1198 = vmatprep.subr.mxu0 0.0
      %1199 = vmatpush1.msra.mxu0 0.0
      %1200 = vmatprep.subr.mxu0 0.0
      %1201 = vmatpush1.msra.mxu0 0.0
      %1202 = vmatprep.subr.mxu0 0.0
      %1203 = vmatpush1.msra.mxu0 0.0
      %1204 = vmatprep.subr.mxu0 0.0
      %1205 = vmatpush1.msra.mxu0 0.0
      %1206 = vmatprep.subr.mxu0 0.0
      %1207 = vmatpush1.msra.mxu0 0.0
      %1208 = vmatprep.subr.mxu0 0.0
      %1209 = vmatpush1.msra.mxu0 0.0
      %1210 = vmatprep.subr.mxu0 0.0
      %1211 = vmatpush1.msra.mxu0 0.0
      %1212 = vmatprep.subr.mxu0 0.0
      %1213 = vmatpush1.msra.mxu0 0.0
      %1214 = vmatprep.subr.mxu0 0.0
      %1215 = vmatpush1.msra.mxu0 0.0
      %1216 = vmatprep.subr.mxu0 0.0
      %1217 = vmatpush1.msra.mxu0 0.0
      %1218 = vmatprep.mubr.f32.mxu0 0.0
      %1219 = vmatmul.mubr.f32.gmra.mrb[0].mxu0 %v1152
      %v1220 = vpop.f32.mrb[0].mxu0
      %v1221 = vadd.f32 0.0, %v1220
      %v1222 = vpop.f32.mrb[0].mxu0
      %1223 = vdwg.mxu0
      %v1225 = vsel %vm577, %v735, 0
      %1227 = vmatprep.subr.mxu0 0.0
      %1228 = vmatpush1.msra.mxu0 %v738
      %1229 = vmatprep.subr.mxu0 0.0
      %1230 = vmatpush1.msra.mxu0 0.0
      %1231 = vmatprep.subr.mxu0 0.0
      %1232 = vmatpush1.msra.mxu0 0.0
      %1233 = vmatprep.subr.mxu0 0.0
      %1234 = vmatpush1.msra.mxu0 0.0
      %1235 = vmatprep.subr.mxu0 0.0
      %1236 = vmatpush1.msra.mxu0 0.0
      %1237 = vmatprep.subr.mxu0 0.0
      %1238 = vmatpush1.msra.mxu0 0.0
      %1239 = vmatprep.subr.mxu0 0.0
      %1240 = vmatpush1.msra.mxu0 0.0
      %1241 = vmatprep.subr.mxu0 0.0
      %1242 = vmatpush1.msra.mxu0 0.0
      %1243 = vmatprep.subr.mxu0 0.0
      %1244 = vmatpush1.msra.mxu0 0.0
      %1245 = vmatprep.subr.mxu0 0.0
      %1246 = vmatpush1.msra.mxu0 0.0
      %1247 = vmatprep.subr.mxu0 0.0
      %1248 = vmatpush1.msra.mxu0 0.0
      %1249 = vmatprep.subr.mxu0 0.0
      %1250 = vmatpush1.msra.mxu0 0.0
      %1251 = vmatprep.subr.mxu0 0.0
      %1252 = vmatpush1.msra.mxu0 0.0
      %1253 = vmatprep.subr.mxu0 0.0
      %1254 = vmatpush1.msra.mxu0 0.0
      %1255 = vmatprep.subr.mxu0 0.0
      %1256 = vmatpush1.msra.mxu0 0.0
      %1257 = vmatprep.subr.mxu0 0.0
      %1258 = vmatpush1.msra.mxu0 0.0
      %1259 = vmatprep.subr.mxu0 0.0
      %1260 = vmatpush1.msra.mxu0 0.0
      %1261 = vmatprep.subr.mxu0 0.0
      %1262 = vmatpush1.msra.mxu0 0.0
      %1263 = vmatprep.subr.mxu0 0.0
      %1264 = vmatpush1.msra.mxu0 0.0
      %1265 = vmatprep.subr.mxu0 0.0
      %1266 = vmatpush1.msra.mxu0 0.0
      %1267 = vmatprep.subr.mxu0 0.0
      %1268 = vmatpush1.msra.mxu0 0.0
      %1269 = vmatprep.subr.mxu0 0.0
      %1270 = vmatpush1.msra.mxu0 0.0
      %1271 = vmatprep.subr.mxu0 0.0
      %1272 = vmatpush1.msra.mxu0 0.0
      %1273 = vmatprep.subr.mxu0 0.0
      %1274 = vmatpush1.msra.mxu0 0.0
      %1275 = vmatprep.subr.mxu0 0.0
      %1276 = vmatpush1.msra.mxu0 0.0
      %1277 = vmatprep.subr.mxu0 0.0
      %1278 = vmatpush1.msra.mxu0 0.0
      %1279 = vmatprep.subr.mxu0 0.0
      %1280 = vmatpush1.msra.mxu0 0.0
      %1281 = vmatprep.subr.mxu0 0.0
      %1282 = vmatpush1.msra.mxu0 0.0
      %1283 = vmatprep.subr.mxu0 0.0
      %1284 = vmatpush1.msra.mxu0 0.0
      %1285 = vmatprep.subr.mxu0 0.0
      %1286 = vmatpush1.msra.mxu0 0.0
      %1287 = vmatprep.subr.mxu0 0.0
      %1288 = vmatpush1.msra.mxu0 0.0
      %1289 = vmatprep.subr.mxu0 0.0
      %1290 = vmatpush1.msra.mxu0 0.0
      %1291 = vmatprep.mubr.f32.mxu0 0.0
      %1292 = vmatmul.mubr.f32.gmra.mrb[0].mxu0 %v1225
      %v1293 = vpop.f32.mrb[0].mxu0
      %v1294 = vadd.f32 %v1221, %v1293
      %v1295 = vpop.f32.mrb[0].mxu0
      %1296 = vdwg.mxu0
      %s1297 = scalar_lea.vmem %s1, 64
      %v1298 = vld [vmem:[%s1297] sm:$0xff]
      %v1299 = vld [vmem:[%s1297 + $0x8] sm:$0xff]
      %v1300 = vld [vmem:[%s1297 + $0x10] sm:$0xff]
      %v1301 = vld [vmem:[%s1297 + $0x18] sm:$0xff]
      %s1302 = scalar_lea.vmem %s2, 2
      %v1303 = vld [vmem:[%s1302] sm:$0x1]
      %v1305 = vlaneseq
      %v1306 = vshrl.u32 %v1305, 7
      %v1307 = vsub.s32 0, %v1306
      %v1308 = vrot.slane %v1303, %v1307
      %1310 = vmatprep.subr.mxu0 0.0
      %1311 = vmatpush1.msra.mxu0 %v1298
      %1312 = vmatprep.subr.mxu0 0.0
      %1313 = vmatpush1.msra.mxu0 %v1299
      %1314 = vmatprep.subr.mxu0 0.0
      %1315 = vmatpush1.msra.mxu0 %v1300
      %1316 = vmatprep.subr.mxu0 0.0
      %1317 = vmatpush1.msra.mxu0 %v1301
      %1318 = vmatprep.subr.mxu0 0.0
      %1319 = vmatpush1.msra.mxu0 0.0
      %1320 = vmatprep.subr.mxu0 0.0
      %1321 = vmatpush1.msra.mxu0 0.0
      %1322 = vmatprep.subr.mxu0 0.0
      %1323 = vmatpush1.msra.mxu0 0.0
      %1324 = vmatprep.subr.mxu0 0.0
      %1325 = vmatpush1.msra.mxu0 0.0
      %1326 = vmatprep.subr.mxu0 0.0
      %1327 = vmatpush1.msra.mxu0 0.0
      %1328 = vmatprep.subr.mxu0 0.0
      %1329 = vmatpush1.msra.mxu0 0.0
      %1330 = vmatprep.subr.mxu0 0.0
      %1331 = vmatpush1.msra.mxu0 0.0
      %1332 = vmatprep.subr.mxu0 0.0
      %1333 = vmatpush1.msra.mxu0 0.0
      %1334 = vmatprep.subr.mxu0 0.0
      %1335 = vmatpush1.msra.mxu0 0.0
      %1336 = vmatprep.subr.mxu0 0.0
      %1337 = vmatpush1.msra.mxu0 0.0
      %1338 = vmatprep.subr.mxu0 0.0
      %1339 = vmatpush1.msra.mxu0 0.0
      %1340 = vmatprep.subr.mxu0 0.0
      %1341 = vmatpush1.msra.mxu0 0.0
      %1342 = vmatprep.subr.mxu0 0.0
      %1343 = vmatpush1.msra.mxu0 0.0
      %1344 = vmatprep.subr.mxu0 0.0
      %1345 = vmatpush1.msra.mxu0 0.0
      %1346 = vmatprep.subr.mxu0 0.0
      %1347 = vmatpush1.msra.mxu0 0.0
      %1348 = vmatprep.subr.mxu0 0.0
      %1349 = vmatpush1.msra.mxu0 0.0
      %1350 = vmatprep.subr.mxu0 0.0
      %1351 = vmatpush1.msra.mxu0 0.0
      %1352 = vmatprep.subr.mxu0 0.0
      %1353 = vmatpush1.msra.mxu0 0.0
      %1354 = vmatprep.subr.mxu0 0.0
      %1355 = vmatpush1.msra.mxu0 0.0
      %1356 = vmatprep.subr.mxu0 0.0
      %1357 = vmatpush1.msra.mxu0 0.0
      %1358 = vmatprep.subr.mxu0 0.0
      %1359 = vmatpush1.msra.mxu0 0.0
      %1360 = vmatprep.subr.mxu0 0.0
      %1361 = vmatpush1.msra.mxu0 0.0
      %1362 = vmatprep.subr.mxu0 0.0
      %1363 = vmatpush1.msra.mxu0 0.0
      %1364 = vmatprep.subr.mxu0 0.0
      %1365 = vmatpush1.msra.mxu0 0.0
      %1366 = vmatprep.subr.mxu0 0.0
      %1367 = vmatpush1.msra.mxu0 0.0
      %1368 = vmatprep.subr.mxu0 0.0
      %1369 = vmatpush1.msra.mxu0 0.0
      %1370 = vmatprep.subr.mxu0 0.0
      %1371 = vmatpush1.msra.mxu0 0.0
      %1372 = vmatprep.subr.mxu0 0.0
      %1373 = vmatpush1.msra.mxu0 0.0
      %1374 = vmatprep.mubr.f32.mxu0 0.0
      %1375 = vmatmul.mubr.f32.gmra.mrb[0].mxu0 %v342
      %v1376 = vpop.f32.mrb[0].mxu0
      %v1377 = vadd.f32 %v1308, %v1376
      %v1378 = vpop.f32.mrb[0].mxu0
      %1379 = vdwg.mxu0
      %v1380 = vmul.f32 %v1377, 0.35355338
      %s1381 = scalar_lea.vmem %s3, 64
      %v1382 = vld [vmem:[%s1381] sm:$0xff]
      %v1383 = vld [vmem:[%s1381 + $0x8] sm:$0xff]
      %v1384 = vld [vmem:[%s1381 + $0x10] sm:$0xff]
      %v1385 = vld [vmem:[%s1381 + $0x18] sm:$0xff]
      %s1386 = scalar_lea.vmem %s4, 2
      %v1387 = vld [vmem:[%s1386] sm:$0x1]
      %v1389 = vlaneseq
      %v1390 = vshrl.u32 %v1389, 7
      %v1391 = vsub.s32 0, %v1390
      %v1392 = vrot.slane %v1387, %v1391
      %1394 = vmatprep.subr.mxu0 0.0
      %1395 = vmatpush1.msra.mxu0 %v1382
      %1396 = vmatprep.subr.mxu0 0.0
      %1397 = vmatpush1.msra.mxu0 %v1383
      %1398 = vmatprep.subr.mxu0 0.0
      %1399 = vmatpush1.msra.mxu0 %v1384
      %1400 = vmatprep.subr.mxu0 0.0
      %1401 = vmatpush1.msra.mxu0 %v1385
      %1402 = vmatprep.subr.mxu0 0.0
      %1403 = vmatpush1.msra.mxu0 0.0
      %1404 = vmatprep.subr.mxu0 0.0
      %1405 = vmatpush1.msra.mxu0 0.0
      %1406 = vmatprep.subr.mxu0 0.0
      %1407 = vmatpush1.msra.mxu0 0.0
      %1408 = vmatprep.subr.mxu0 0.0
      %1409 = vmatpush1.msra.mxu0 0.0
      %1410 = vmatprep.subr.mxu0 0.0
      %1411 = vmatpush1.msra.mxu0 0.0
      %1412 = vmatprep.subr.mxu0 0.0
      %1413 = vmatpush1.msra.mxu0 0.0
      %1414 = vmatprep.subr.mxu0 0.0
      %1415 = vmatpush1.msra.mxu0 0.0
      %1416 = vmatprep.subr.mxu0 0.0
      %1417 = vmatpush1.msra.mxu0 0.0
      %1418 = vmatprep.subr.mxu0 0.0
      %1419 = vmatpush1.msra.mxu0 0.0
      %1420 = vmatprep.subr.mxu0 0.0
      %1421 = vmatpush1.msra.mxu0 0.0
      %1422 = vmatprep.subr.mxu0 0.0
      %1423 = vmatpush1.msra.mxu0 0.0
      %1424 = vmatprep.subr.mxu0 0.0
      %1425 = vmatpush1.msra.mxu0 0.0
      %1426 = vmatprep.subr.mxu0 0.0
      %1427 = vmatpush1.msra.mxu0 0.0
      %1428 = vmatprep.subr.mxu0 0.0
      %1429 = vmatpush1.msra.mxu0 0.0
      %1430 = vmatprep.subr.mxu0 0.0
      %1431 = vmatpush1.msra.mxu0 0.0
      %1432 = vmatprep.subr.mxu0 0.0
      %1433 = vmatpush1.msra.mxu0 0.0
      %1434 = vmatprep.subr.mxu0 0.0
      %1435 = vmatpush1.msra.mxu0 0.0
      %1436 = vmatprep.subr.mxu0 0.0
      %1437 = vmatpush1.msra.mxu0 0.0
      %1438 = vmatprep.subr.mxu0 0.0
      %1439 = vmatpush1.msra.mxu0 0.0
      %1440 = vmatprep.subr.mxu0 0.0
      %1441 = vmatpush1.msra.mxu0 0.0
      %1442 = vmatprep.subr.mxu0 0.0
      %1443 = vmatpush1.msra.mxu0 0.0
      %1444 = vmatprep.subr.mxu0 0.0
      %1445 = vmatpush1.msra.mxu0 0.0
      %1446 = vmatprep.subr.mxu0 0.0
      %1447 = vmatpush1.msra.mxu0 0.0
      %1448 = vmatprep.subr.mxu0 0.0
      %1449 = vmatpush1.msra.mxu0 0.0
      %1450 = vmatprep.subr.mxu0 0.0
      %1451 = vmatpush1.msra.mxu0 0.0
      %1452 = vmatprep.subr.mxu0 0.0
      %1453 = vmatpush1.msra.mxu0 0.0
      %1454 = vmatprep.subr.mxu0 0.0
      %1455 = vmatpush1.msra.mxu0 0.0
      %1456 = vmatprep.subr.mxu0 0.0
      %1457 = vmatpush1.msra.mxu0 0.0
      %1458 = vmatprep.mubr.f32.mxu0 0.0
      %1459 = vmatmul.mubr.f32.gmra.mrb[0].mxu0 %v342
      %v1460 = vpop.f32.mrb[0].mxu0
      %v1461 = vadd.f32 %v1392, %v1460
      %v1462 = vpop.f32.mrb[0].mxu0
      %1463 = vdwg.mxu0
      %s1464 = scalar_lea.vmem %s5, 64
      %v1465 = vld [vmem:[%s1464] sm:$0xff]
      %v1466 = vld [vmem:[%s1464 + $0x8] sm:$0xff]
      %v1467 = vld [vmem:[%s1464 + $0x10] sm:$0xff]
      %v1468 = vld [vmem:[%s1464 + $0x18] sm:$0xff]
      %s1469 = scalar_lea.vmem %s6, 2
      %v1470 = vld [vmem:[%s1469] sm:$0x1]
      %v1472 = vlaneseq
      %v1473 = vshrl.u32 %v1472, 7
      %v1474 = vsub.s32 0, %v1473
      %v1475 = vrot.slane %v1470, %v1474
      %1477 = vmatprep.subr.mxu0 0.0
      %1478 = vmatpush1.msra.mxu0 %v1465
      %1479 = vmatprep.subr.mxu0 0.0
      %1480 = vmatpush1.msra.mxu0 %v1466
      %1481 = vmatprep.subr.mxu0 0.0
      %1482 = vmatpush1.msra.mxu0 %v1467
      %1483 = vmatprep.subr.mxu0 0.0
      %1484 = vmatpush1.msra.mxu0 %v1468
      %1485 = vmatprep.subr.mxu0 0.0
      %1486 = vmatpush1.msra.mxu0 0.0
      %1487 = vmatprep.subr.mxu0 0.0
      %1488 = vmatpush1.msra.mxu0 0.0
      %1489 = vmatprep.subr.mxu0 0.0
      %1490 = vmatpush1.msra.mxu0 0.0
      %1491 = vmatprep.subr.mxu0 0.0
      %1492 = vmatpush1.msra.mxu0 0.0
      %1493 = vmatprep.subr.mxu0 0.0
      %1494 = vmatpush1.msra.mxu0 0.0
      %1495 = vmatprep.subr.mxu0 0.0
      %1496 = vmatpush1.msra.mxu0 0.0
      %1497 = vmatprep.subr.mxu0 0.0
      %1498 = vmatpush1.msra.mxu0 0.0
      %1499 = vmatprep.subr.mxu0 0.0
      %1500 = vmatpush1.msra.mxu0 0.0
      %1501 = vmatprep.subr.mxu0 0.0
      %1502 = vmatpush1.msra.mxu0 0.0
      %1503 = vmatprep.subr.mxu0 0.0
      %1504 = vmatpush1.msra.mxu0 0.0
      %1505 = vmatprep.subr.mxu0 0.0
      %1506 = vmatpush1.msra.mxu0 0.0
      %1507 = vmatprep.subr.mxu0 0.0
      %1508 = vmatpush1.msra.mxu0 0.0
      %1509 = vmatprep.subr.mxu0 0.0
      %1510 = vmatpush1.msra.mxu0 0.0
      %1511 = vmatprep.subr.mxu0 0.0
      %1512 = vmatpush1.msra.mxu0 0.0
      %1513 = vmatprep.subr.mxu0 0.0
      %1514 = vmatpush1.msra.mxu0 0.0
      %1515 = vmatprep.subr.mxu0 0.0
      %1516 = vmatpush1.msra.mxu0 0.0
      %1517 = vmatprep.subr.mxu0 0.0
      %1518 = vmatpush1.msra.mxu0 0.0
      %1519 = vmatprep.subr.mxu0 0.0
      %1520 = vmatpush1.msra.mxu0 0.0
      %1521 = vmatprep.subr.mxu0 0.0
      %1522 = vmatpush1.msra.mxu0 0.0
      %1523 = vmatprep.subr.mxu0 0.0
      %1524 = vmatpush1.msra.mxu0 0.0
      %1525 = vmatprep.subr.mxu0 0.0
      %1526 = vmatpush1.msra.mxu0 0.0
      %1527 = vmatprep.subr.mxu0 0.0
      %1528 = vmatpush1.msra.mxu0 0.0
      %1529 = vmatprep.subr.mxu0 0.0
      %1530 = vmatpush1.msra.mxu0 0.0
      %1531 = vmatprep.subr.mxu0 0.0
      %1532 = vmatpush1.msra.mxu0 0.0
      %1533 = vmatprep.subr.mxu0 0.0
      %1534 = vmatpush1.msra.mxu0 0.0
      %1535 = vmatprep.subr.mxu0 0.0
      %1536 = vmatpush1.msra.mxu0 0.0
      %1537 = vmatprep.subr.mxu0 0.0
      %1538 = vmatpush1.msra.mxu0 0.0
      %1539 = vmatprep.subr.mxu0 0.0
      %1540 = vmatpush1.msra.mxu0 0.0
      %1541 = vmatprep.mubr.f32.mxu0 0.0
      %1542 = vmatmul.mubr.f32.gmra.mrb[0].mxu0 %v342
      %v1543 = vpop.f32.mrb[0].mxu0
      %v1544 = vadd.f32 %v1475, %v1543
      %v1545 = vpop.f32.mrb[0].mxu0
      %1546 = vdwg.mxu0
      %v1548 = vsel %vm577, %v1380, 0
      %v1551 = vsel %vm577, %v1461, 0
      %1553 = vmatprep.subr.mxu0 0.0
      %1554 = vmatpush1.xpose.msra.mxu0 %v1551
      %1555 = vmatprep.subr.mxu0 0.0
      %1556 = vmatpush1.xpose.msra.mxu0 0.0
      %1557 = vmatprep.subr.mxu0 0.0
      %1558 = vmatpush1.xpose.msra.mxu0 0.0
      %1559 = vmatprep.subr.mxu0 0.0
      %1560 = vmatpush1.xpose.msra.mxu0 0.0
      %1561 = vmatprep.subr.mxu0 0.0
      %1562 = vmatpush1.xpose.msra.mxu0 0.0
      %1563 = vmatprep.subr.mxu0 0.0
      %1564 = vmatpush1.xpose.msra.mxu0 0.0
      %1565 = vmatprep.subr.mxu0 0.0
      %1566 = vmatpush1.xpose.msra.mxu0 0.0
      %1567 = vmatprep.subr.mxu0 0.0
      %1568 = vmatpush1.xpose.msra.mxu0 0.0
      %1569 = vmatprep.subr.mxu0 0.0
      %1570 = vmatpush1.xpose.msra.mxu0 0.0
      %1571 = vmatprep.subr.mxu0 0.0
      %1572 = vmatpush1.xpose.msra.mxu0 0.0
      %1573 = vmatprep.subr.mxu0 0.0
      %1574 = vmatpush1.xpose.msra.mxu0 0.0
      %1575 = vmatprep.subr.mxu0 0.0
      %1576 = vmatpush1.xpose.msra.mxu0 0.0
      %1577 = vmatprep.subr.mxu0 0.0
      %1578 = vmatpush1.xpose.msra.mxu0 0.0
      %1579 = vmatprep.subr.mxu0 0.0
      %1580 = vmatpush1.xpose.msra.mxu0 0.0
      %1581 = vmatprep.subr.mxu0 0.0
      %1582 = vmatpush1.xpose.msra.mxu0 0.0
      %1583 = vmatprep.subr.mxu0 0.0
      %1584 = vmatpush1.xpose.msra.mxu0 0.0
      %1585 = vmatprep.subr.mxu0 0.0
      %1586 = vmatpush1.xpose.msra.mxu0 0.0
      %1587 = vmatprep.subr.mxu0 0.0
      %1588 = vmatpush1.xpose.msra.mxu0 0.0
      %1589 = vmatprep.subr.mxu0 0.0
      %1590 = vmatpush1.xpose.msra.mxu0 0.0
      %1591 = vmatprep.subr.mxu0 0.0
      %1592 = vmatpush1.xpose.msra.mxu0 0.0
      %1593 = vmatprep.subr.mxu0 0.0
      %1594 = vmatpush1.xpose.msra.mxu0 0.0
      %1595 = vmatprep.subr.mxu0 0.0
      %1596 = vmatpush1.xpose.msra.mxu0 0.0
      %1597 = vmatprep.subr.mxu0 0.0
      %1598 = vmatpush1.xpose.msra.mxu0 0.0
      %1599 = vmatprep.subr.mxu0 0.0
      %1600 = vmatpush1.xpose.msra.mxu0 0.0
      %1601 = vmatprep.subr.mxu0 0.0
      %1602 = vmatpush1.xpose.msra.mxu0 0.0
      %1603 = vmatprep.subr.mxu0 0.0
      %1604 = vmatpush1.xpose.msra.mxu0 0.0
      %1605 = vmatprep.subr.mxu0 0.0
      %1606 = vmatpush1.xpose.msra.mxu0 0.0
      %1607 = vmatprep.subr.mxu0 0.0
      %1608 = vmatpush1.xpose.msra.mxu0 0.0
      %1609 = vmatprep.subr.mxu0 0.0
      %1610 = vmatpush1.xpose.msra.mxu0 0.0
      %1611 = vmatprep.subr.mxu0 0.0
      %1612 = vmatpush1.xpose.msra.mxu0 0.0
      %1613 = vmatprep.subr.mxu0 0.0
      %1614 = vmatpush1.xpose.msra.mxu0 0.0
      %1615 = vmatprep.subr.mxu0 0.0
      %1616 = vmatpush1.xpose.msra.mxu0 0.0
      %1617 = vmatprep.mubr.f32.mxu0 0.0
      %1618 = vmatmul.mubr.f32.gmra.mrb[0].mxu0 %v1548
      %v1619 = vpop.f32.mrb[0].mxu0
      %v1620 = vadd.f32 0.0, %v1619
      %v1621 = vpop.f32.mrb[0].mxu0
      %1622 = vdwg.mxu0
      %v1623 = vsel %vm577, %v1620, -inf
      %1624 = vmax.xlane.f32.xlu0 %v1623
      %v1625 = vpop.xlane.xlu0 %1624
      %v1626 = vsub.f32 %v1620, %v1625
      %v1627 = vmul.f32 %v1626, 1.442695
      %v1628 = vpow.pop %v1627
      %v1629 = vsel %vm577, %v1628, 0.0
      %1630 = vadd.xlane.f32.xlu0 %v1629
      %v1631 = vpop.xlane.xlu0 %1630
      %v1632 = vrcp.pop %v1631
      %v1633 = vmul.f32 %v1628, %v1632
      %v1635 = vsel %vm577, %v1633, 0
      %1637 = vmatprep.subr.mxu0 0.0
      %1638 = vmatpush1.msra.mxu0 %v1544
      %1639 = vmatprep.subr.mxu0 0.0
      %1640 = vmatpush1.msra.mxu0 0.0
      %1641 = vmatprep.subr.mxu0 0.0
      %1642 = vmatpush1.msra.mxu0 0.0
      %1643 = vmatprep.subr.mxu0 0.0
      %1644 = vmatpush1.msra.mxu0 0.0
      %1645 = vmatprep.subr.mxu0 0.0
      %1646 = vmatpush1.msra.mxu0 0.0
      %1647 = vmatprep.subr.mxu0 0.0
      %1648 = vmatpush1.msra.mxu0 0.0
      %1649 = vmatprep.subr.mxu0 0.0
      %1650 = vmatpush1.msra.mxu0 0.0
      %1651 = vmatprep.subr.mxu0 0.0
      %1652 = vmatpush1.msra.mxu0 0.0
      %1653 = vmatprep.subr.mxu0 0.0
      %1654 = vmatpush1.msra.mxu0 0.0
      %1655 = vmatprep.subr.mxu0 0.0
      %1656 = vmatpush1.msra.mxu0 0.0
      %1657 = vmatprep.subr.mxu0 0.0
      %1658 = vmatpush1.msra.mxu0 0.0
      %1659 = vmatprep.subr.mxu0 0.0
      %1660 = vmatpush1.msra.mxu0 0.0
      %1661 = vmatprep.subr.mxu0 0.0
      %1662 = vmatpush1.msra.mxu0 0.0
      %1663 = vmatprep.subr.mxu0 0.0
      %1664 = vmatpush1.msra.mxu0 0.0
      %1665 = vmatprep.subr.mxu0 0.0
      %1666 = vmatpush1.msra.mxu0 0.0
      %1667 = vmatprep.subr.mxu0 0.0
      %1668 = vmatpush1.msra.mxu0 0.0
      %1669 = vmatprep.subr.mxu0 0.0
      %1670 = vmatpush1.msra.mxu0 0.0
      %1671 = vmatprep.subr.mxu0 0.0
      %1672 = vmatpush1.msra.mxu0 0.0
      %1673 = vmatprep.subr.mxu0 0.0
      %1674 = vmatpush1.msra.mxu0 0.0
      %1675 = vmatprep.subr.mxu0 0.0
      %1676 = vmatpush1.msra.mxu0 0.0
      %1677 = vmatprep.subr.mxu0 0.0
      %1678 = vmatpush1.msra.mxu0 0.0
      %1679 = vmatprep.subr.mxu0 0.0
      %1680 = vmatpush1.msra.mxu0 0.0
      %1681 = vmatprep.subr.mxu0 0.0
      %1682 = vmatpush1.msra.mxu0 0.0
      %1683 = vmatprep.subr.mxu0 0.0
      %1684 = vmatpush1.msra.mxu0 0.0
      %1685 = vmatprep.subr.mxu0 0.0
      %1686 = vmatpush1.msra.mxu0 0.0
      %1687 = vmatprep.subr.mxu0 0.0
      %1688 = vmatpush1.msra.mxu0 0.0
      %1689 = vmatprep.subr.mxu0 0.0
      %1690 = vmatpush1.msra.mxu0 0.0
      %1691 = vmatprep.subr.mxu0 0.0
      %1692 = vmatpush1.msra.mxu0 0.0
      %1693 = vmatprep.subr.mxu0 0.0
      %1694 = vmatpush1.msra.mxu0 0.0
      %1695 = vmatprep.subr.mxu0 0.0
      %1696 = vmatpush1.msra.mxu0 0.0
      %1697 = vmatprep.subr.mxu0 0.0
      %1698 = vmatpush1.msra.mxu0 0.0
      %1699 = vmatprep.subr.mxu0 0.0
      %1700 = vmatpush1.msra.mxu0 0.0
      %1701 = vmatprep.mubr.f32.mxu0 0.0
      %1702 = vmatmul.mubr.f32.gmra.mrb[0].mxu0 %v1635
      %v1703 = vpop.f32.mrb[0].mxu0
      %v1704 = vadd.f32 0.0, %v1703
      %v1705 = vpop.f32.mrb[0].mxu0
      %1706 = vdwg.mxu0
      %s1707 = scalar_lea.vmem %s7, 16
      %v1708 = vld [vmem:[%s1707] sm:$0xff]
      %v1710 = vsel %vm577, %v1704, 0
      %1712 = vmatprep.subr.mxu0 0.0
      %1713 = vmatpush1.msra.mxu0 %v1708
      %1714 = vmatprep.subr.mxu0 0.0
      %1715 = vmatpush1.msra.mxu0 0.0
      %1716 = vmatprep.subr.mxu0 0.0
      %1717 = vmatpush1.msra.mxu0 0.0
      %1718 = vmatprep.subr.mxu0 0.0
      %1719 = vmatpush1.msra.mxu0 0.0
      %1720 = vmatprep.subr.mxu0 0.0
      %1721 = vmatpush1.msra.mxu0 0.0
      %1722 = vmatprep.subr.mxu0 0.0
      %1723 = vmatpush1.msra.mxu0 0.0
      %1724 = vmatprep.subr.mxu0 0.0
      %1725 = vmatpush1.msra.mxu0 0.0
      %1726 = vmatprep.subr.mxu0 0.0
      %1727 = vmatpush1.msra.mxu0 0.0
      %1728 = vmatprep.subr.mxu0 0.0
      %1729 = vmatpush1.msra.mxu0 0.0
      %1730 = vmatprep.subr.mxu0 0.0
      %1731 = vmatpush1.msra.mxu0 0.0
      %1732 = vmatprep.subr.mxu0 0.0
      %1733 = vmatpush1.msra.mxu0 0.0
      %1734 = vmatprep.subr.mxu0 0.0
      %1735 = vmatpush1.msra.mxu0 0.0
      %1736 = vmatprep.subr.mxu0 0.0
      %1737 = vmatpush1.msra.mxu0 0.0
      %1738 = vmatprep.subr.mxu0 0.0
      %1739 = vmatpush1.msra.mxu0 0.0
      %1740 = vmatprep.subr.mxu0 0.0
      %1741 = vmatpush1.msra.mxu0 0.0
      %1742 = vmatprep.subr.mxu0 0.0
      %1743 = vmatpush1.msra.mxu0 0.0
      %1744 = vmatprep.subr.mxu0 0.0
      %1745 = vmatpush1.msra.mxu0 0.0
      %1746 = vmatprep.subr.mxu0 0.0
      %1747 = vmatpush1.msra.mxu0 0.0
      %1748 = vmatprep.subr.mxu0 0.0
      %1749 = vmatpush1.msra.mxu0 0.0
      %1750 = vmatprep.subr.mxu0 0.0
      %1751 = vmatpush1.msra.mxu0 0.0
      %1752 = vmatprep.subr.mxu0 0.0
      %1753 = vmatpush1.msra.mxu0 0.0
      %1754 = vmatprep.subr.mxu0 0.0
      %1755 = vmatpush1.msra.mxu0 0.0
      %1756 = vmatprep.subr.mxu0 0.0
      %1757 = vmatpush1.msra.mxu0 0.0
      %1758 = vmatprep.subr.mxu0 0.0
      %1759 = vmatpush1.msra.mxu0 0.0
      %1760 = vmatprep.subr.mxu0 0.0
      %1761 = vmatpush1.msra.mxu0 0.0
      %1762 = vmatprep.subr.mxu0 0.0
      %1763 = vmatpush1.msra.mxu0 0.0
      %1764 = vmatprep.subr.mxu0 0.0
      %1765 = vmatpush1.msra.mxu0 0.0
      %1766 = vmatprep.subr.mxu0 0.0
      %1767 = vmatpush1.msra.mxu0 0.0
      %1768 = vmatprep.subr.mxu0 0.0
      %1769 = vmatpush1.msra.mxu0 0.0
      %1770 = vmatprep.subr.mxu0 0.0
      %1771 = vmatpush1.msra.mxu0 0.0
      %1772 = vmatprep.subr.mxu0 0.0
      %1773 = vmatpush1.msra.mxu0 0.0
      %1774 = vmatprep.subr.mxu0 0.0
      %1775 = vmatpush1.msra.mxu0 0.0
      %1776 = vmatprep.mubr.f32.mxu0 0.0
      %1777 = vmatmul.mubr.f32.gmra.mrb[0].mxu0 %v1710
      %v1778 = vpop.f32.mrb[0].mxu0
      %v1779 = vadd.f32 0.0, %v1778
      %v1780 = vpop.f32.mrb[0].mxu0
      %1781 = vdwg.mxu0
      %v1782 = vadd.f32 %v1294, %v1779
      %s1783 = scalar_lea.vmem %s1, 96
      %v1784 = vld [vmem:[%s1783] sm:$0xff]
      %v1785 = vld [vmem:[%s1783 + $0x8] sm:$0xff]
      %v1786 = vld [vmem:[%s1783 + $0x10] sm:$0xff]
      %v1787 = vld [vmem:[%s1783 + $0x18] sm:$0xff]
      %s1788 = scalar_lea.vmem %s2, 3
      %v1789 = vld [vmem:[%s1788] sm:$0x1]
      %v1791 = vlaneseq
      %v1792 = vshrl.u32 %v1791, 7
      %v1793 = vsub.s32 0, %v1792
      %v1794 = vrot.slane %v1789, %v1793
      %1796 = vmatprep.subr.mxu0 0.0
      %1797 = vmatpush1.msra.mxu0 %v1784
      %1798 = vmatprep.subr.mxu0 0.0
      %1799 = vmatpush1.msra.mxu0 %v1785
      %1800 = vmatprep.subr.mxu0 0.0
      %1801 = vmatpush1.msra.mxu0 %v1786
      %1802 = vmatprep.subr.mxu0 0.0
      %1803 = vmatpush1.msra.mxu0 %v1787
      %1804 = vmatprep.subr.mxu0 0.0
      %1805 = vmatpush1.msra.mxu0 0.0
      %1806 = vmatprep.subr.mxu0 0.0
      %1807 = vmatpush1.msra.mxu0 0.0
      %1808 = vmatprep.subr.mxu0 0.0
      %1809 = vmatpush1.msra.mxu0 0.0
      %1810 = vmatprep.subr.mxu0 0.0
      %1811 = vmatpush1.msra.mxu0 0.0
      %1812 = vmatprep.subr.mxu0 0.0
      %1813 = vmatpush1.msra.mxu0 0.0
      %1814 = vmatprep.subr.mxu0 0.0
      %1815 = vmatpush1.msra.mxu0 0.0
      %1816 = vmatprep.subr.mxu0 0.0
      %1817 = vmatpush1.msra.mxu0 0.0
      %1818 = vmatprep.subr.mxu0 0.0
      %1819 = vmatpush1.msra.mxu0 0.0
      %1820 = vmatprep.subr.mxu0 0.0
      %1821 = vmatpush1.msra.mxu0 0.0
      %1822 = vmatprep.subr.mxu0 0.0
      %1823 = vmatpush1.msra.mxu0 0.0
      %1824 = vmatprep.subr.mxu0 0.0
      %1825 = vmatpush1.msra.mxu0 0.0
      %1826 = vmatprep.subr.mxu0 0.0
      %1827 = vmatpush1.msra.mxu0 0.0
      %1828 = vmatprep.subr.mxu0 0.0
      %1829 = vmatpush1.msra.mxu0 0.0
      %1830 = vmatprep.subr.mxu0 0.0
      %1831 = vmatpush1.msra.mxu0 0.0
      %1832 = vmatprep.subr.mxu0 0.0
      %1833 = vmatpush1.msra.mxu0 0.0
      %1834 = vmatprep.subr.mxu0 0.0
      %1835 = vmatpush1.msra.mxu0 0.0
      %1836 = vmatprep.subr.mxu0 0.0
      %1837 = vmatpush1.msra.mxu0 0.0
      %1838 = vmatprep.subr.mxu0 0.0
      %1839 = vmatpush1.msra.mxu0 0.0
      %1840 = vmatprep.subr.mxu0 0.0
      %1841 = vmatpush1.msra.mxu0 0.0
      %1842 = vmatprep.subr.mxu0 0.0
      %1843 = vmatpush1.msra.mxu0 0.0
      %1844 = vmatprep.subr.mxu0 0.0
      %1845 = vmatpush1.msra.mxu0 0.0
      %1846 = vmatprep.subr.mxu0 0.0
      %1847 = vmatpush1.msra.mxu0 0.0
      %1848 = vmatprep.subr.mxu0 0.0
      %1849 = vmatpush1.msra.mxu0 0.0
      %1850 = vmatprep.subr.mxu0 0.0
      %1851 = vmatpush1.msra.mxu0 0.0
      %1852 = vmatprep.subr.mxu0 0.0
      %1853 = vmatpush1.msra.mxu0 0.0
      %1854 = vmatprep.subr.mxu0 0.0
      %1855 = vmatpush1.msra.mxu0 0.0
      %1856 = vmatprep.subr.mxu0 0.0
      %1857 = vmatpush1.msra.mxu0 0.0
      %1858 = vmatprep.subr.mxu0 0.0
      %1859 = vmatpush1.msra.mxu0 0.0
      %1860 = vmatprep.mubr.f32.mxu0 0.0
      %1861 = vmatmul.mubr.f32.gmra.mrb[0].mxu0 %v342
      %v1862 = vpop.f32.mrb[0].mxu0
      %v1863 = vadd.f32 %v1794, %v1862
      %v1864 = vpop.f32.mrb[0].mxu0
      %1865 = vdwg.mxu0
      %v1866 = vmul.f32 %v1863, 0.35355338
      %s1867 = scalar_lea.vmem %s3, 96
      %v1868 = vld [vmem:[%s1867] sm:$0xff]
      %v1869 = vld [vmem:[%s1867 + $0x8] sm:$0xff]
      %v1870 = vld [vmem:[%s1867 + $0x10] sm:$0xff]
      %v1871 = vld [vmem:[%s1867 + $0x18] sm:$0xff]
      %s1872 = scalar_lea.vmem %s4, 3
      %v1873 = vld [vmem:[%s1872] sm:$0x1]
      %v1875 = vlaneseq
      %v1876 = vshrl.u32 %v1875, 7
      %v1877 = vsub.s32 0, %v1876
      %v1878 = vrot.slane %v1873, %v1877
      %1880 = vmatprep.subr.mxu0 0.0
      %1881 = vmatpush1.msra.mxu0 %v1868
      %1882 = vmatprep.subr.mxu0 0.0
      %1883 = vmatpush1.msra.mxu0 %v1869
      %1884 = vmatprep.subr.mxu0 0.0
      %1885 = vmatpush1.msra.mxu0 %v1870
      %1886 = vmatprep.subr.mxu0 0.0
      %1887 = vmatpush1.msra.mxu0 %v1871
      %1888 = vmatprep.subr.mxu0 0.0
      %1889 = vmatpush1.msra.mxu0 0.0
      %1890 = vmatprep.subr.mxu0 0.0
      %1891 = vmatpush1.msra.mxu0 0.0
      %1892 = vmatprep.subr.mxu0 0.0
      %1893 = vmatpush1.msra.mxu0 0.0
      %1894 = vmatprep.subr.mxu0 0.0
      %1895 = vmatpush1.msra.mxu0 0.0
      %1896 = vmatprep.subr.mxu0 0.0
      %1897 = vmatpush1.msra.mxu0 0.0
      %1898 = vmatprep.subr.mxu0 0.0
      %1899 = vmatpush1.msra.mxu0 0.0
      %1900 = vmatprep.subr.mxu0 0.0
      %1901 = vmatpush1.msra.mxu0 0.0
      %1902 = vmatprep.subr.mxu0 0.0
      %1903 = vmatpush1.msra.mxu0 0.0
      %1904 = vmatprep.subr.mxu0 0.0
      %1905 = vmatpush1.msra.mxu0 0.0
      %1906 = vmatprep.subr.mxu0 0.0
      %1907 = vmatpush1.msra.mxu0 0.0
      %1908 = vmatprep.subr.mxu0 0.0
      %1909 = vmatpush1.msra.mxu0 0.0
      %1910 = vmatprep.subr.mxu0 0.0
      %1911 = vmatpush1.msra.mxu0 0.0
      %1912 = vmatprep.subr.mxu0 0.0
      %1913 = vmatpush1.msra.mxu0 0.0
      %1914 = vmatprep.subr.mxu0 0.0
      %1915 = vmatpush1.msra.mxu0 0.0
      %1916 = vmatprep.subr.mxu0 0.0
      %1917 = vmatpush1.msra.mxu0 0.0
      %1918 = vmatprep.subr.mxu0 0.0
      %1919 = vmatpush1.msra.mxu0 0.0
      %1920 = vmatprep.subr.mxu0 0.0
      %1921 = vmatpush1.msra.mxu0 0.0
      %1922 = vmatprep.subr.mxu0 0.0
      %1923 = vmatpush1.msra.mxu0 0.0
      %1924 = vmatprep.subr.mxu0 0.0
      %1925 = vmatpush1.msra.mxu0 0.0
      %1926 = vmatprep.subr.mxu0 0.0
      %1927 = vmatpush1.msra.mxu0 0.0
      %1928 = vmatprep.subr.mxu0 0.0
      %1929 = vmatpush1.msra.mxu0 0.0
      %1930 = vmatprep.subr.mxu0 0.0
      %1931 = vmatpush1.msra.mxu0 0.0
      %1932 = vmatprep.subr.mxu0 0.0
      %1933 = vmatpush1.msra.mxu0 0.0
      %1934 = vmatprep.subr.mxu0 0.0
      %1935 = vmatpush1.msra.mxu0 0.0
      %1936 = vmatprep.subr.mxu0 0.0
      %1937 = vmatpush1.msra.mxu0 0.0
      %1938 = vmatprep.subr.mxu0 0.0
      %1939 = vmatpush1.msra.mxu0 0.0
      %1940 = vmatprep.subr.mxu0 0.0
      %1941 = vmatpush1.msra.mxu0 0.0
      %1942 = vmatprep.subr.mxu0 0.0
      %1943 = vmatpush1.msra.mxu0 0.0
      %1944 = vmatprep.mubr.f32.mxu0 0.0
      %1945 = vmatmul.mubr.f32.gmra.mrb[0].mxu0 %v342
      %v1946 = vpop.f32.mrb[0].mxu0
      %v1947 = vadd.f32 %v1878, %v1946
      %v1948 = vpop.f32.mrb[0].mxu0
      %1949 = vdwg.mxu0
      %s1950 = scalar_lea.vmem %s5, 96
      %v1951 = vld [vmem:[%s1950] sm:$0xff]
      %v1952 = vld [vmem:[%s1950 + $0x8] sm:$0xff]
      %v1953 = vld [vmem:[%s1950 + $0x10] sm:$0xff]
      %v1954 = vld [vmem:[%s1950 + $0x18] sm:$0xff]
      %s1955 = scalar_lea.vmem %s6, 3
      %v1956 = vld [vmem:[%s1955] sm:$0x1]
      %v1958 = vlaneseq
      %v1959 = vshrl.u32 %v1958, 7
      %v1960 = vsub.s32 0, %v1959
      %v1961 = vrot.slane %v1956, %v1960
      %1963 = vmatprep.subr.mxu0 0.0
      %1964 = vmatpush1.msra.mxu0 %v1951
      %1965 = vmatprep.subr.mxu0 0.0
      %1966 = vmatpush1.msra.mxu0 %v1952
      %1967 = vmatprep.subr.mxu0 0.0
      %1968 = vmatpush1.msra.mxu0 %v1953
      %1969 = vmatprep.subr.mxu0 0.0
      %1970 = vmatpush1.msra.mxu0 %v1954
      %1971 = vmatprep.subr.mxu0 0.0
      %1972 = vmatpush1.msra.mxu0 0.0
      %1973 = vmatprep.subr.mxu0 0.0
      %1974 = vmatpush1.msra.mxu0 0.0
      %1975 = vmatprep.subr.mxu0 0.0
      %1976 = vmatpush1.msra.mxu0 0.0
      %1977 = vmatprep.subr.mxu0 0.0
      %1978 = vmatpush1.msra.mxu0 0.0
      %1979 = vmatprep.subr.mxu0 0.0
      %1980 = vmatpush1.msra.mxu0 0.0
      %1981 = vmatprep.subr.mxu0 0.0
      %1982 = vmatpush1.msra.mxu0 0.0
      %1983 = vmatprep.subr.mxu0 0.0
      %1984 = vmatpush1.msra.mxu0 0.0
      %1985 = vmatprep.subr.mxu0 0.0
      %1986 = vmatpush1.msra.mxu0 0.0
      %1987 = vmatprep.subr.mxu0 0.0
      %1988 = vmatpush1.msra.mxu0 0.0
      %1989 = vmatprep.subr.mxu0 0.0
      %1990 = vmatpush1.msra.mxu0 0.0
      %1991 = vmatprep.subr.mxu0 0.0
      %1992 = vmatpush1.msra.mxu0 0.0
      %1993 = vmatprep.subr.mxu0 0.0
      %1994 = vmatpush1.msra.mxu0 0.0
      %1995 = vmatprep.subr.mxu0 0.0
      %1996 = vmatpush1.msra.mxu0 0.0
      %1997 = vmatprep.subr.mxu0 0.0
      %1998 = vmatpush1.msra.mxu0 0.0
      %1999 = vmatprep.subr.mxu0 0.0
      %2000 = vmatpush1.msra.mxu0 0.0
      %2001 = vmatprep.subr.mxu0 0.0
      %2002 = vmatpush1.msra.mxu0 0.0
      %2003 = vmatprep.subr.mxu0 0.0
      %2004 = vmatpush1.msra.mxu0 0.0
      %2005 = vmatprep.subr.mxu0 0.0
      %2006 = vmatpush1.msra.mxu0 0.0
      %2007 = vmatprep.subr.mxu0 0.0
      %2008 = vmatpush1.msra.mxu0 0.0
      %2009 = vmatprep.subr.mxu0 0.0
      %2010 = vmatpush1.msra.mxu0 0.0
      %2011 = vmatprep.subr.mxu0 0.0
      %2012 = vmatpush1.msra.mxu0 0.0
      %2013 = vmatprep.subr.mxu0 0.0
      %2014 = vmatpush1.msra.mxu0 0.0
      %2015 = vmatprep.subr.mxu0 0.0
      %2016 = vmatpush1.msra.mxu0 0.0
      %2017 = vmatprep.subr.mxu0 0.0
      %2018 = vmatpush1.msra.mxu0 0.0
      %2019 = vmatprep.subr.mxu0 0.0
      %2020 = vmatpush1.msra.mxu0 0.0
      %2021 = vmatprep.subr.mxu0 0.0
      %2022 = vmatpush1.msra.mxu0 0.0
      %2023 = vmatprep.subr.mxu0 0.0
      %2024 = vmatpush1.msra.mxu0 0.0
      %2025 = vmatprep.subr.mxu0 0.0
      %2026 = vmatpush1.msra.mxu0 0.0
      %2027 = vmatprep.mubr.f32.mxu0 0.0
      %2028 = vmatmul.mubr.f32.gmra.mrb[0].mxu0 %v342
      %v2029 = vpop.f32.mrb[0].mxu0
      %v2030 = vadd.f32 %v1961, %v2029
      %v2031 = vpop.f32.mrb[0].mxu0
      %2032 = vdwg.mxu0
      %v2034 = vsel %vm577, %v1866, 0
      %v2037 = vsel %vm577, %v1947, 0
      %2039 = vmatprep.subr.mxu0 0.0
      %2040 = vmatpush1.xpose.msra.mxu0 %v2037
      %2041 = vmatprep.subr.mxu0 0.0
      %2042 = vmatpush1.xpose.msra.mxu0 0.0
      %2043 = vmatprep.subr.mxu0 0.0
      %2044 = vmatpush1.xpose.msra.mxu0 0.0
      %2045 = vmatprep.subr.mxu0 0.0
      %2046 = vmatpush1.xpose.msra.mxu0 0.0
      %2047 = vmatprep.subr.mxu0 0.0
      %2048 = vmatpush1.xpose.msra.mxu0 0.0
      %2049 = vmatprep.subr.mxu0 0.0
      %2050 = vmatpush1.xpose.msra.mxu0 0.0
      %2051 = vmatprep.subr.mxu0 0.0
      %2052 = vmatpush1.xpose.msra.mxu0 0.0
      %2053 = vmatprep.subr.mxu0 0.0
      %2054 = vmatpush1.xpose.msra.mxu0 0.0
      %2055 = vmatprep.subr.mxu0 0.0
      %2056 = vmatpush1.xpose.msra.mxu0 0.0
      %2057 = vmatprep.subr.mxu0 0.0
      %2058 = vmatpush1.xpose.msra.mxu0 0.0
      %2059 = vmatprep.subr.mxu0 0.0
      %2060 = vmatpush1.xpose.msra.mxu0 0.0
      %2061 = vmatprep.subr.mxu0 0.0
      %2062 = vmatpush1.xpose.msra.mxu0 0.0
      %2063 = vmatprep.subr.mxu0 0.0
      %2064 = vmatpush1.xpose.msra.mxu0 0.0
      %2065 = vmatprep.subr.mxu0 0.0
      %2066 = vmatpush1.xpose.msra.mxu0 0.0
      %2067 = vmatprep.subr.mxu0 0.0
      %2068 = vmatpush1.xpose.msra.mxu0 0.0
      %2069 = vmatprep.subr.mxu0 0.0
      %2070 = vmatpush1.xpose.msra.mxu0 0.0
      %2071 = vmatprep.subr.mxu0 0.0
      %2072 = vmatpush1.xpose.msra.mxu0 0.0
      %2073 = vmatprep.subr.mxu0 0.0
      %2074 = vmatpush1.xpose.msra.mxu0 0.0
      %2075 = vmatprep.subr.mxu0 0.0
      %2076 = vmatpush1.xpose.msra.mxu0 0.0
      %2077 = vmatprep.subr.mxu0 0.0
      %2078 = vmatpush1.xpose.msra.mxu0 0.0
      %2079 = vmatprep.subr.mxu0 0.0
      %2080 = vmatpush1.xpose.msra.mxu0 0.0
      %2081 = vmatprep.subr.mxu0 0.0
      %2082 = vmatpush1.xpose.msra.mxu0 0.0
      %2083 = vmatprep.subr.mxu0 0.0
      %2084 = vmatpush1.xpose.msra.mxu0 0.0
      %2085 = vmatprep.subr.mxu0 0.0
      %2086 = vmatpush1.xpose.msra.mxu0 0.0
      %2087 = vmatprep.subr.mxu0 0.0
      %2088 = vmatpush1.xpose.msra.mxu0 0.0
      %2089 = vmatprep.subr.mxu0 0.0
      %2090 = vmatpush1.xpose.msra.mxu0 0.0
      %2091 = vmatprep.subr.mxu0 0.0
      %2092 = vmatpush1.xpose.msra.mxu0 0.0
      %2093 = vmatprep.subr.mxu0 0.0
      %2094 = vmatpush1.xpose.msra.mxu0 0.0
      %2095 = vmatprep.subr.mxu0 0.0
      %2096 = vmatpush1.xpose.msra.mxu0 0.0
      %2097 = vmatprep.subr.mxu0 0.0
      %2098 = vmatpush1.xpose.msra.mxu0 0.0
      %2099 = vmatprep.subr.mxu0 0.0
      %2100 = vmatpush1.xpose.msra.mxu0 0.0
      %2101 = vmatprep.subr.mxu0 0.0
      %2102 = vmatpush1.xpose.msra.mxu0 0.0
      %2103 = vmatprep.mubr.f32.mxu0 0.0
      %2104 = vmatmul.mubr.f32.gmra.mrb[0].mxu0 %v2034
      %v2105 = vpop.f32.mrb[0].mxu0
      %v2106 = vadd.f32 0.0, %v2105
      %v2107 = vpop.f32.mrb[0].mxu0
      %2108 = vdwg.mxu0
      %v2109 = vsel %vm577, %v2106, -inf
      %2110 = vmax.xlane.f32.xlu0 %v2109
      %v2111 = vpop.xlane.xlu0 %2110
      %v2112 = vsub.f32 %v2106, %v2111
      %v2113 = vmul.f32 %v2112, 1.442695
      %v2114 = vpow.pop %v2113
      %v2115 = vsel %vm577, %v2114, 0.0
      %2116 = vadd.xlane.f32.xlu0 %v2115
      %v2117 = vpop.xlane.xlu0 %2116
      %v2118 = vrcp.pop %v2117
      %v2119 = vmul.f32 %v2114, %v2118
      %v2121 = vsel %vm577, %v2119, 0
      %2123 = vmatprep.subr.mxu0 0.0
      %2124 = vmatpush1.msra.mxu0 %v2030
      %2125 = vmatprep.subr.mxu0 0.0
      %2126 = vmatpush1.msra.mxu0 0.0
      %2127 = vmatprep.subr.mxu0 0.0
      %2128 = vmatpush1.msra.mxu0 0.0
      %2129 = vmatprep.subr.mxu0 0.0
      %2130 = vmatpush1.msra.mxu0 0.0
      %2131 = vmatprep.subr.mxu0 0.0
      %2132 = vmatpush1.msra.mxu0 0.0
      %2133 = vmatprep.subr.mxu0 0.0
      %2134 = vmatpush1.msra.mxu0 0.0
      %2135 = vmatprep.subr.mxu0 0.0
      %2136 = vmatpush1.msra.mxu0 0.0
      %2137 = vmatprep.subr.mxu0 0.0
      %2138 = vmatpush1.msra.mxu0 0.0
      %2139 = vmatprep.subr.mxu0 0.0
      %2140 = vmatpush1.msra.mxu0 0.0
      %2141 = vmatprep.subr.mxu0 0.0
      %2142 = vmatpush1.msra.mxu0 0.0
      %2143 = vmatprep.subr.mxu0 0.0
      %2144 = vmatpush1.msra.mxu0 0.0
      %2145 = vmatprep.subr.mxu0 0.0
      %2146 = vmatpush1.msra.mxu0 0.0
      %2147 = vmatprep.subr.mxu0 0.0
      %2148 = vmatpush1.msra.mxu0 0.0
      %2149 = vmatprep.subr.mxu0 0.0
      %2150 = vmatpush1.msra.mxu0 0.0
      %2151 = vmatprep.subr.mxu0 0.0
      %2152 = vmatpush1.msra.mxu0 0.0
      %2153 = vmatprep.subr.mxu0 0.0
      %2154 = vmatpush1.msra.mxu0 0.0
      %2155 = vmatprep.subr.mxu0 0.0
      %2156 = vmatpush1.msra.mxu0 0.0
      %2157 = vmatprep.subr.mxu0 0.0
      %2158 = vmatpush1.msra.mxu0 0.0
      %2159 = vmatprep.subr.mxu0 0.0
      %2160 = vmatpush1.msra.mxu0 0.0
      %2161 = vmatprep.subr.mxu0 0.0
      %2162 = vmatpush1.msra.mxu0 0.0
      %2163 = vmatprep.subr.mxu0 0.0
      %2164 = vmatpush1.msra.mxu0 0.0
      %2165 = vmatprep.subr.mxu0 0.0
      %2166 = vmatpush1.msra.mxu0 0.0
      %2167 = vmatprep.subr.mxu0 0.0
      %2168 = vmatpush1.msra.mxu0 0.0
      %2169 = vmatprep.subr.mxu0 0.0
      %2170 = vmatpush1.msra.mxu0 0.0
      %2171 = vmatprep.subr.mxu0 0.0
      %2172 = vmatpush1.msra.mxu0 0.0
      %2173 = vmatprep.subr.mxu0 0.0
      %2174 = vmatpush1.msra.mxu0 0.0
      %2175 = vmatprep.subr.mxu0 0.0
      %2176 = vmatpush1.msra.mxu0 0.0
      %2177 = vmatprep.subr.mxu0 0.0
      %2178 = vmatpush1.msra.mxu0 0.0
      %2179 = vmatprep.subr.mxu0 0.0
      %2180 = vmatpush1.msra.mxu0 0.0
      %2181 = vmatprep.subr.mxu0 0.0
      %2182 = vmatpush1.msra.mxu0 0.0
      %2183 = vmatprep.subr.mxu0 0.0
      %2184 = vmatpush1.msra.mxu0 0.0
      %2185 = vmatprep.subr.mxu0 0.0
      %2186 = vmatpush1.msra.mxu0 0.0
      %2187 = vmatprep.mubr.f32.mxu0 0.0
      %2188 = vmatmul.mubr.f32.gmra.mrb[0].mxu0 %v2121
      %v2189 = vpop.f32.mrb[0].mxu0
      %v2190 = vadd.f32 0.0, %v2189
      %v2191 = vpop.f32.mrb[0].mxu0
      %2192 = vdwg.mxu0
      %s2193 = scalar_lea.vmem %s7, 24
      %v2194 = vld [vmem:[%s2193] sm:$0xff]
      %v2196 = vsel %vm577, %v2190, 0
      %2198 = vmatprep.subr.mxu0 0.0
      %2199 = vmatpush1.msra.mxu0 %v2194
      %2200 = vmatprep.subr.mxu0 0.0
      %2201 = vmatpush1.msra.mxu0 0.0
      %2202 = vmatprep.subr.mxu0 0.0
      %2203 = vmatpush1.msra.mxu0 0.0
      %2204 = vmatprep.subr.mxu0 0.0
      %2205 = vmatpush1.msra.mxu0 0.0
      %2206 = vmatprep.subr.mxu0 0.0
      %2207 = vmatpush1.msra.mxu0 0.0
      %2208 = vmatprep.subr.mxu0 0.0
      %2209 = vmatpush1.msra.mxu0 0.0
      %2210 = vmatprep.subr.mxu0 0.0
      %2211 = vmatpush1.msra.mxu0 0.0
      %2212 = vmatprep.subr.mxu0 0.0
      %2213 = vmatpush1.msra.mxu0 0.0
      %2214 = vmatprep.subr.mxu0 0.0
      %2215 = vmatpush1.msra.mxu0 0.0
      %2216 = vmatprep.subr.mxu0 0.0
      %2217 = vmatpush1.msra.mxu0 0.0
      %2218 = vmatprep.subr.mxu0 0.0
      %2219 = vmatpush1.msra.mxu0 0.0
      %2220 = vmatprep.subr.mxu0 0.0
      %2221 = vmatpush1.msra.mxu0 0.0
      %2222 = vmatprep.subr.mxu0 0.0
      %2223 = vmatpush1.msra.mxu0 0.0
      %2224 = vmatprep.subr.mxu0 0.0
      %2225 = vmatpush1.msra.mxu0 0.0
      %2226 = vmatprep.subr.mxu0 0.0
      %2227 = vmatpush1.msra.mxu0 0.0
      %2228 = vmatprep.subr.mxu0 0.0
      %2229 = vmatpush1.msra.mxu0 0.0
      %2230 = vmatprep.subr.mxu0 0.0
      %2231 = vmatpush1.msra.mxu0 0.0
      %2232 = vmatprep.subr.mxu0 0.0
      %2233 = vmatpush1.msra.mxu0 0.0
      %2234 = vmatprep.subr.mxu0 0.0
      %2235 = vmatpush1.msra.mxu0 0.0
      %2236 = vmatprep.subr.mxu0 0.0
      %2237 = vmatpush1.msra.mxu0 0.0
      %2238 = vmatprep.subr.mxu0 0.0
      %2239 = vmatpush1.msra.mxu0 0.0
      %2240 = vmatprep.subr.mxu0 0.0
      %2241 = vmatpush1.msra.mxu0 0.0
      %2242 = vmatprep.subr.mxu0 0.0
      %2243 = vmatpush1.msra.mxu0 0.0
      %2244 = vmatprep.subr.mxu0 0.0
      %2245 = vmatpush1.msra.mxu0 0.0
      %2246 = vmatprep.subr.mxu0 0.0
      %2247 = vmatpush1.msra.mxu0 0.0
      %2248 = vmatprep.subr.mxu0 0.0
      %2249 = vmatpush1.msra.mxu0 0.0
      %2250 = vmatprep.subr.mxu0 0.0
      %2251 = vmatpush1.msra.mxu0 0.0
      %2252 = vmatprep.subr.mxu0 0.0
      %2253 = vmatpush1.msra.mxu0 0.0
      %2254 = vmatprep.subr.mxu0 0.0
      %2255 = vmatpush1.msra.mxu0 0.0
      %2256 = vmatprep.subr.mxu0 0.0
      %2257 = vmatpush1.msra.mxu0 0.0
      %2258 = vmatprep.subr.mxu0 0.0
      %2259 = vmatpush1.msra.mxu0 0.0
      %2260 = vmatprep.subr.mxu0 0.0
      %2261 = vmatpush1.msra.mxu0 0.0
      %2262 = vmatprep.mubr.f32.mxu0 0.0
      %2263 = vmatmul.mubr.f32.gmra.mrb[0].mxu0 %v2196
      %v2264 = vpop.f32.mrb[0].mxu0
      %v2265 = vadd.f32 0.0, %v2264
      %v2266 = vpop.f32.mrb[0].mxu0
      %2267 = vdwg.mxu0
      %v2268 = vadd.f32 %v1782, %v2265
      %v2269 = vld [vmem:[%s8] sm:$0x1]
      %v2271 = vlaneseq
      %v2272 = vshrl.u32 %v2271, 7
      %v2273 = vsub.s32 0, %v2272
      %v2274 = vrot.slane %v2269, %v2273
      %v2276 = vadd.f32 %v2268, %v2274
      %2277 = vst.msk [vmem:[%s327] sm:$0xff] %vm340, %v2276
      %p2278 = scmp.lt.s32.totalorder %s20, 1
      %s2279 = scalar_select %p2278, %s20, 1
      %s2280 = smul.addr %s2279, 8
      %s2281 = scalar_lea.vmem %s9, %s2280
      // Predicated region
      $region57: #{transformer_encoder_layer.4} parent=55 // pred_check
        %p2282 = pneg %p232
      $region58: #{transformer_encoder_layer.4} parent=55 // pred_check_branch
        %2284 = sbr.rel (%p2282) target = $region60
      $region59: #{transformer_encoder_layer.4} parent=55 // pred_region
        _
      $region60: #{transformer_encoder_layer.4} parent=55 // pred_fallthru
        _
    $region56: #{transformer_encoder_layer.4} parent=5 // pred_fallthru
      _
    %p2285 = scmp.le.s32.totalorder 2, %s15
    // Predicated region
    $region61: #{transformer_encoder_layer.4} parent=5 // pred_check
      %p2286 = pneg %p2285
    $region62: #{transformer_encoder_layer.4} parent=5 // pred_check_branch
      %2288 = sbr.rel (%p2286) target = $region64
    $region63: #{transformer_encoder_layer.4} parent=5 // pred_region
      %s2289 = ssub.s32 %s15, 2
      // Predicated region
      $region65: #{transformer_encoder_layer.4} parent=63 // pred_check
        %p2290 = pneg %p238
      $region66: #{transformer_encoder_layer.4} parent=63 // pred_check_branch
        %2292 = sbr.rel (%p2290) target = $region68
      $region67: #{transformer_encoder_layer.4} parent=63 // pred_region
        %p2293 = scmp.lt.s32.totalorder %s21, 1
        %s2294 = scalar_select %p2293, %s21, 1
        %s2295 = smul.addr %s2294, 8
        %s2296 = scalar_lea.vmem %s9, %s2295
      $region68: #{transformer_encoder_layer.4} parent=63 // pred_fallthru
        _
    $region64: #{transformer_encoder_layer.4} parent=5 // pred_fallthru
      _
  $region6: #{transformer_encoder_layer.4} parent=0 // loop_footer
    %s19 = sadd.s32 1, %s15
  $region7: #{transformer_encoder_layer.4} parent=0 // loop_footer_branch
    %14 = sbr.rel target = $region3
  $region8: #{transformer_encoder_layer.4} parent=0 // loop_exit
    _

</llo_original>
